<compile_context>
chip_gen: v5e
topology: v5e:2x2
jax: 0.10.0
libtpu: 0.0.40
codegen_flags: <defaults>
</compile_context>

<pallas_src>
import math
import functools

import jax
import jax.numpy as jnp
from jax.experimental import pallas as pl
from jax.experimental.pallas import tpu as pltpu

# ------------------------- configuration -------------------------
D_MODEL = 32
N_HEADS = 4
N_GQA_GROUPS = 1
D_QUERIES = 8          # d_keys == d_queries
D_VALUES = 8
D_INNER = 64
N_ENCODER_LAYERS = 2
VOCAB_SIZE = 64
MAXLEN = 16
NORM_EPS = 1e-6
# dropout -> identity (eval semantics)


# ------------------------- fused encoder kernel -------------------------
def _encoder_kernel(tok_ref, pad_ref, emb_ref, pos_ref,
                    ng_ref, nb_ref, wqkv_ref, bqkv_ref, wo_ref, bo_ref,
                    fg_ref, fb_ref, w1_ref, b1_ref, w2_ref, b2_ref,
                    outg_ref, outb_ref, o_ref,
                    *, batch, seq_len, n_layers, n_heads, d_qk, d_v,
                    vocab_size, d_model, eps, scale):
    t = seq_len
    bt = batch * t

    # --- embedding via one-hot matmul (gather-free) + sinusoidal pos. enc. ---
    tok = tok_ref[...]                                            # (B*t, 1) int32
    lane_ids = jax.lax.broadcasted_iota(jnp.int32, (bt, vocab_size), 1)
    onehot = (lane_ids == tok).astype(jnp.float32)                # (B*t, V)
    x = jnp.dot(onehot, emb_ref[...], preferred_element_type=jnp.float32)
    x = x * jnp.float32(math.sqrt(d_model)) + pos_ref[...]        # (B*t, D)

    # additive key-padding bias, built in-kernel (large finite negative ->
    # exp underflows to exactly 0; avoids NaN unless a row were fully masked).
    pad_bias = pad_ref[...] * jnp.float32(-1e30)                  # (B, t)

    def layer_norm(v, g, b):
        # single-pass: E[x] and E[x^2] reduce independently (no serialization)
        mu = jnp.mean(v, axis=-1, keepdims=True)
        ms = jnp.mean(v * v, axis=-1, keepdims=True)
        var = ms - mu * mu                                        # biased var
        return (v - mu) * jax.lax.rsqrt(var + eps) * g + b

    hq = n_heads * d_qk
    q_prescale = jnp.float32(scale / 30.0)   # fold 1/sqrt(dq) and /30 into q

    for l in range(n_layers):
        # ---- self-attention block (LN computed once since q = k = v) ----
        xn = layer_norm(x, ng_ref[l], nb_ref[l])                  # (B*t, D)
        qkv = jnp.dot(xn, wqkv_ref[l],
                      preferred_element_type=jnp.float32) + bqkv_ref[l]  # (B*t, 96)
        q = qkv[:, 0:hq] * q_prescale
        k = qkv[:, hq:2 * hq]
        v = qkv[:, 2 * hq:]
        wo_l = wo_ref[l]                                          # (H*dv, D)

        attn_rows = []
        for b in range(batch):                                    # per-sequence attention
            qb = q[b * t:(b + 1) * t, :]
            kb = k[b * t:(b + 1) * t, :]
            vb = v[b * t:(b + 1) * t, :]
            bias_b = pad_bias[b:b + 1, :]                         # (1, t)
            ctx_heads = []
            for h in range(n_heads):
                qh = qb[:, h * d_qk:(h + 1) * d_qk]               # (t, dq)
                kh = kb[:, h * d_qk:(h + 1) * d_qk]               # (t, dq)
                vh = vb[:, h * d_v:(h + 1) * d_v]                 # (t, dv)
                s = jax.lax.dot_general(qh, kh, (((1,), (1,)), ((), ())),
                                        preferred_element_type=jnp.float32)  # (t, t)
                s = 30.0 * jnp.tanh(s) + bias_b   # soft-cap (scale pre-folded) + mask
                # logits bounded by the tanh cap -> exp cannot overflow; no max-sub
                p = jnp.exp(s)
                p = p * pl.reciprocal(jnp.sum(p, axis=-1, keepdims=True),
                                      approx=True)
                ctx_heads.append(jnp.dot(p, vh,
                                         preferred_element_type=jnp.float32))
            ctx = jnp.concatenate(ctx_heads, axis=-1)             # (t, H*dv), lane concat
            attn_rows.append(jnp.dot(ctx, wo_l,                   # single output proj
                                     preferred_element_type=jnp.float32))
        attn = jnp.concatenate(attn_rows, axis=0)                 # (B*t, D)
        x = x + attn + bo_ref[l]                                  # fused residual

        # ---- position-wise FFN (LN -> expand+ReLU -> condense -> residual) ----
        xn2 = layer_norm(x, fg_ref[l], fb_ref[l])
        h1 = jnp.dot(xn2, w1_ref[l], preferred_element_type=jnp.float32) + b1_ref[l]
        h1 = jnp.maximum(h1, 0.0)                                 # relu activation
        h2 = jnp.dot(h1, w2_ref[l], preferred_element_type=jnp.float32) + b2_ref[l]
        x = x + h2                                                # fused residual

    # ---- final encoder LayerNorm ----
    x = layer_norm(x, outg_ref[...], outb_ref[...])
    o_ref[...] = x.astype(o_ref.dtype)
    # TODO(synk): gating_variances (SparseMoE branch) unused since use_moe=False;
    # attention_weights_for_visualization not returned.


def encoder_forward(params, token_ids, key_padding_mask):
    """Fused Encoder forward. Returns (encoded_sequences, gating_variances=[])."""
    B, t = token_ids.shape
    L = params["wqkv"].shape[0]
    hqkv = params["wqkv"].shape[2]

    tok2 = token_ids.astype(jnp.int32).reshape(B * t, 1)
    pad2 = key_padding_mask.astype(jnp.float32)                    # (B, t), 1.0 = padded
    pos_full = jnp.tile(params["pos"][:t, :], (B, 1))              # (B*t, D)

    kernel = functools.partial(
        _encoder_kernel, batch=B, seq_len=t,
        n_layers=L, n_heads=N_HEADS, d_qk=D_QUERIES, d_v=D_VALUES,
        vocab_size=VOCAB_SIZE, d_model=D_MODEL, eps=NORM_EPS,
        scale=1.0 / math.sqrt(D_QUERIES))

    def full(shape):
        n = len(shape)
        return pl.BlockSpec(shape, lambda i, _n=n: (0,) * _n)

    in_specs = [
        full((B * t, 1)),                                           # tokens
        full((B, t)),                                               # pad mask
        full((VOCAB_SIZE, D_MODEL)),                                # embedding
        full((B * t, D_MODEL)),                                     # pos enc (tiled)
        full((L, 1, D_MODEL)), full((L, 1, D_MODEL)),               # attn LN
        full((L, D_MODEL, hqkv)), full((L, 1, hqkv)),               # fused QKV
        full((L, N_HEADS * D_VALUES, D_MODEL)), full((L, 1, D_MODEL)),  # out proj
        full((L, 1, D_MODEL)), full((L, 1, D_MODEL)),               # fcn LN
        full((L, D_MODEL, D_INNER)), full((L, 1, D_INNER)),         # expand
        full((L, D_INNER, D_MODEL)), full((L, 1, D_MODEL)),         # condense
        full((1, D_MODEL)), full((1, D_MODEL)),                     # final LN
    ]

    out = pl.pallas_call(
        kernel,
        out_shape=jax.ShapeDtypeStruct((B * t, D_MODEL), jnp.float32),
        grid=(1,),                                                  # single step: whole batch
        in_specs=in_specs,
        out_specs=pl.BlockSpec((B * t, D_MODEL), lambda i: (0, 0)),
        compiler_params=pltpu.CompilerParams(
            dimension_semantics=("arbitrary",)),
    )(tok2, pad2, params["emb"], pos_full,
      params["attn_ln_g"], params["attn_ln_b"],
      params["wqkv"], params["bqkv"], params["wo"], params["bo"],
      params["fcn_ln_g"], params["fcn_ln_b"],
      params["w1"], params["b1"], params["w2"], params["b2"],
      params["out_ln_g"], params["out_ln_b"])
    return out.reshape(B, t, D_MODEL), []   # gating_variances empty (use_moe=False)


# ------------------------- pure-JAX reference (for checking) -------------------------
def encoder_reference(params, token_ids, key_padding_mask):
    B, t = token_ids.shape
    L = params["wqkv"].shape[0]
    hq = N_HEADS * D_QUERIES

    x = jnp.take(params["emb"], token_ids, axis=0) * math.sqrt(D_MODEL)
    x = x + params["pos"][None, :t, :]

    def ln(v, g, b):
        mu = v.mean(-1, keepdims=True)
        var = ((v - mu) ** 2).mean(-1, keepdims=True)
        return (v - mu) / jnp.sqrt(var + NORM_EPS) * g.reshape(-1) + b.reshape(-1)

    mask_bias = jnp.where(key_padding_mask[:, None, None, :], -jnp.inf, 0.0)
    for l in range(L):
        xn = ln(x, params["attn_ln_g"][l], params["attn_ln_b"][l])
        qkv = xn @ params["wqkv"][l] + params["bqkv"][l][0]
        q = qkv[..., :hq].reshape(B, t, N_HEADS, D_QUERIES)
        k = qkv[..., hq:2 * hq].reshape(B, t, N_HEADS, D_QUERIES)
        v = qkv[..., 2 * hq:].reshape(B, t, N_HEADS, D_VALUES)
        s = jnp.einsum('bthd,bshd->bhts', q, k) / math.sqrt(D_QUERIES)
        s = 30.0 * jnp.tanh(s / 30.0) + mask_bias
        p = jax.nn.softmax(s, axis=-1)
        ctx = jnp.einsum('bhts,bshd->bthd', p, v).reshape(B, t, N_HEADS * D_VALUES)
        x = x + ctx @ params["wo"][l] + params["bo"][l][0]
        xn2 = ln(x, params["fcn_ln_g"][l], params["fcn_ln_b"][l])
        h = jnp.maximum(xn2 @ params["w1"][l] + params["b1"][l][0], 0.0)
        x = x + (h @ params["w2"][l] + params["b2"][l][0])
    return ln(x, params["out_ln_g"], params["out_ln_b"])


# ------------------------- parameter init -------------------------
def init_params(key):
    ks = jax.random.split(key, 8)
    L = N_ENCODER_LAYERS
    hqkv = (N_GQA_GROUPS * N_HEADS * D_QUERIES) + N_HEADS * D_QUERIES + N_HEADS * D_VALUES

    def nrm(k, shape, s=0.02):
        return jax.random.normal(k, shape, jnp.float32) * s

    # sinusoidal positional encoding (maxlen, d_model)
    pos = jnp.arange(MAXLEN, dtype=jnp.float32)[:, None]
    div = jnp.exp(jnp.arange(0, D_MODEL, 2, dtype=jnp.float32)
                  * (-math.log(10000.0) / D_MODEL))
    pe = jnp.zeros((MAXLEN, D_MODEL), jnp.float32)
    pe = pe.at[:, 0::2].set(jnp.sin(pos * div))
    pe = pe.at[:, 1::2].set(jnp.cos(pos * div))

    return dict(
        emb=nrm(ks[0], (VOCAB_SIZE, D_MODEL)),
        pos=pe,
        attn_ln_g=jnp.ones((L, 1, D_MODEL), jnp.float32),
        attn_ln_b=jnp.zeros((L, 1, D_MODEL), jnp.float32),
        # columns [0:32]=Wq, [32:64]=Wk, [64:96]=Wv (head h -> cols h*8:(h+1)*8)
        wqkv=nrm(ks[1], (L, D_MODEL, hqkv)),
        bqkv=jnp.zeros((L, 1, hqkv), jnp.float32),
        wo=nrm(ks[2], (L, N_HEADS * D_VALUES, D_MODEL)),
        bo=jnp.zeros((L, 1, D_MODEL), jnp.float32),
        fcn_ln_g=jnp.ones((L, 1, D_MODEL), jnp.float32),
        fcn_ln_b=jnp.zeros((L, 1, D_MODEL), jnp.float32),
        w1=nrm(ks[3], (L, D_MODEL, D_INNER)),
        b1=jnp.zeros((L, 1, D_INNER), jnp.float32),
        w2=nrm(ks[4], (L, D_INNER, D_MODEL)),
        b2=jnp.zeros((L, 1, D_MODEL), jnp.float32),
        out_ln_g=jnp.ones((1, D_MODEL), jnp.float32),
        out_ln_b=jnp.zeros((1, D_MODEL), jnp.float32),
    )


# ------------------------- main -------------------------
if __name__ == "__main__":
    root = jax.random.PRNGKey(0)
    kp, kt = jax.random.split(root, 2)
    params = init_params(kp)

    B, t = 2, 8
    token_ids = jax.random.randint(kt, (B, t), 0, VOCAB_SIZE, dtype=jnp.int32)
    # key padding mask: True = padded position (last 2 positions of batch 1)
    key_padding_mask = jnp.zeros((B, t), bool).at[1, -2:].set(True)

    out, gating_variances = encoder_forward(params, token_ids, key_padding_mask)
    jax.block_until_ready(out)

    assert out.shape == (B, t, D_MODEL)
    assert bool(jnp.all(jnp.isfinite(out)))

    ref = encoder_reference(params, token_ids, key_padding_mask)
    assert bool(jnp.allclose(out, ref, rtol=5e-2, atol=5e-2)), "mismatch vs reference"

    print("KERNEL_OK")
</pallas_src>

<mosaic_0001>
module attributes {stable_mosaic.version = 11 : i64} {
  func.func @_encoder_kernel(%arg0: i32, %arg1: memref<16x1xi32, #tpu.memory_space<vmem>>, %arg2: memref<2x8xf32, #tpu.memory_space<vmem>>, %arg3: memref<64x32xf32, #tpu.memory_space<vmem>>, %arg4: memref<16x32xf32, #tpu.memory_space<vmem>>, %arg5: memref<2x1x32xf32, #tpu.memory_space<vmem>>, %arg6: memref<2x1x32xf32, #tpu.memory_space<vmem>>, %arg7: memref<2x32x96xf32, #tpu.memory_space<vmem>>, %arg8: memref<2x1x96xf32, #tpu.memory_space<vmem>>, %arg9: memref<2x32x32xf32, #tpu.memory_space<vmem>>, %arg10: memref<2x1x32xf32, #tpu.memory_space<vmem>>, %arg11: memref<2x1x32xf32, #tpu.memory_space<vmem>>, %arg12: memref<2x1x32xf32, #tpu.memory_space<vmem>>, %arg13: memref<2x32x64xf32, #tpu.memory_space<vmem>>, %arg14: memref<2x1x64xf32, #tpu.memory_space<vmem>>, %arg15: memref<2x64x32xf32, #tpu.memory_space<vmem>>, %arg16: memref<2x1x32xf32, #tpu.memory_space<vmem>>, %arg17: memref<1x32xf32, #tpu.memory_space<vmem>>, %arg18: memref<1x32xf32, #tpu.memory_space<vmem>>, %arg19: memref<16x32xf32, #tpu.memory_space<vmem>>) attributes {dimension_semantics = [#tpu.dimension_semantics<arbitrary>], iteration_bounds = array<i64: 1>, scalar_prefetch = 0 : i64, scratch_operands = 0 : i64, tpu.core_type = #tpu.core_type<tc>, window_params = [{pipeline_mode = #tpu.pipeline_mode<synchronous>, transform_indices = @transform_0, window_bounds = array<i64: 16, 1>}, {pipeline_mode = #tpu.pipeline_mode<synchronous>, transform_indices = @transform_1, window_bounds = array<i64: 2, 8>}, {pipeline_mode = #tpu.pipeline_mode<synchronous>, transform_indices = @transform_2, window_bounds = array<i64: 64, 32>}, {pipeline_mode = #tpu.pipeline_mode<synchronous>, transform_indices = @transform_3, window_bounds = array<i64: 16, 32>}, {pipeline_mode = #tpu.pipeline_mode<synchronous>, transform_indices = @transform_4, window_bounds = array<i64: 2, 1, 32>}, {pipeline_mode = #tpu.pipeline_mode<synchronous>, transform_indices = @transform_5, window_bounds = array<i64: 2, 1, 32>}, {pipeline_mode = #tpu.pipeline_mode<synchronous>, transform_indices = @transform_6, window_bounds = array<i64: 2, 32, 96>}, {pipeline_mode = #tpu.pipeline_mode<synchronous>, transform_indices = @transform_7, window_bounds = array<i64: 2, 1, 96>}, {pipeline_mode = #tpu.pipeline_mode<synchronous>, transform_indices = @transform_8, window_bounds = array<i64: 2, 32, 32>}, {pipeline_mode = #tpu.pipeline_mode<synchronous>, transform_indices = @transform_9, window_bounds = array<i64: 2, 1, 32>}, {pipeline_mode = #tpu.pipeline_mode<synchronous>, transform_indices = @transform_10, window_bounds = array<i64: 2, 1, 32>}, {pipeline_mode = #tpu.pipeline_mode<synchronous>, transform_indices = @transform_11, window_bounds = array<i64: 2, 1, 32>}, {pipeline_mode = #tpu.pipeline_mode<synchronous>, transform_indices = @transform_12, window_bounds = array<i64: 2, 32, 64>}, {pipeline_mode = #tpu.pipeline_mode<synchronous>, transform_indices = @transform_13, window_bounds = array<i64: 2, 1, 64>}, {pipeline_mode = #tpu.pipeline_mode<synchronous>, transform_indices = @transform_14, window_bounds = array<i64: 2, 64, 32>}, {pipeline_mode = #tpu.pipeline_mode<synchronous>, transform_indices = @transform_15, window_bounds = array<i64: 2, 1, 32>}, {pipeline_mode = #tpu.pipeline_mode<synchronous>, transform_indices = @transform_16, window_bounds = array<i64: 1, 32>}, {pipeline_mode = #tpu.pipeline_mode<synchronous>, transform_indices = @transform_17, window_bounds = array<i64: 1, 32>}, {pipeline_mode = #tpu.pipeline_mode<synchronous>, transform_indices = @transform_18, window_bounds = array<i64: 16, 32>}]} {
    %c0 = arith.constant 0 : index
    %c0_0 = arith.constant 0 : index
    %0 = vector.load %arg1[%c0, %c0_0] : memref<16x1xi32, #tpu.memory_space<vmem>>, vector<16x1xi32>
    %1 = tpu.iota {dimensions = array<i32: 1>} : vector<16x64xi32>
    %2 = vector.broadcast %0 : vector<16x1xi32> to vector<16x64xi32>
    %3 = arith.cmpi eq, %1, %2 : vector<16x64xi32>
    %4 = arith.extui %3 : vector<16x64xi1> to vector<16x64xi32>
    %5 = arith.sitofp %4 : vector<16x64xi32> to vector<16x64xf32>
    %c0_1 = arith.constant 0 : index
    %c0_2 = arith.constant 0 : index
    %6 = vector.load %arg3[%c0_1, %c0_2] : memref<64x32xf32, #tpu.memory_space<vmem>>, vector<64x32xf32>
    %cst = arith.constant dense<0.000000e+00> : vector<16x32xf32>
    %7 = tpu.matmul %5, %6, %cst {dimension_numbers = #tpu.dot_dimension_numbers<[1], [0], [0], [1], [0, 0, 1, 1], [], []>} : vector<16x64xf32>, vector<64x32xf32>, vector<16x32xf32> -> vector<16x32xf32>
    %cst_3 = arith.constant 5.65685415 : f32
    %8 = vector.broadcast %cst_3 : f32 to vector<16x32xf32>
    %9 = arith.mulf %7, %8 : vector<16x32xf32>
    %c0_4 = arith.constant 0 : index
    %c0_5 = arith.constant 0 : index
    %10 = vector.load %arg4[%c0_4, %c0_5] : memref<16x32xf32, #tpu.memory_space<vmem>>, vector<16x32xf32>
    %11 = arith.addf %9, %10 : vector<16x32xf32>
    %c0_6 = arith.constant 0 : index
    %c0_7 = arith.constant 0 : index
    %12 = vector.load %arg2[%c0_6, %c0_7] : memref<2x8xf32, #tpu.memory_space<vmem>>, vector<2x8xf32>
    %cst_8 = arith.constant -1.000000e+30 : f32
    %13 = vector.broadcast %cst_8 : f32 to vector<2x8xf32>
    %14 = arith.mulf %12, %13 : vector<2x8xf32>
    %c0_9 = arith.constant 0 : index
    %c0_10 = arith.constant 0 : index
    %c0_11 = arith.constant 0 : index
    %15 = vector.load %arg5[%c0_9, %c0_10, %c0_11] : memref<2x1x32xf32, #tpu.memory_space<vmem>>, vector<1x1x32xf32>
    %16 = vector.shape_cast %15 : vector<1x1x32xf32> to vector<1x32xf32>
    %c0_12 = arith.constant 0 : index
    %c0_13 = arith.constant 0 : index
    %c0_14 = arith.constant 0 : index
    %17 = vector.load %arg6[%c0_12, %c0_13, %c0_14] : memref<2x1x32xf32, #tpu.memory_space<vmem>>, vector<1x1x32xf32>
    %18 = vector.shape_cast %17 : vector<1x1x32xf32> to vector<1x32xf32>
    %cst_15 = arith.constant dense<0.000000e+00> : vector<16xf32>
    %19 = vector.multi_reduction <add>, %11, %cst_15 [1] : vector<16x32xf32> to vector<16xf32>
    %20 = vector.shape_cast %19 : vector<16xf32> to vector<16x1xf32>
    %cst_16 = arith.constant 3.200000e+01 : f32
    %21 = vector.broadcast %cst_16 : f32 to vector<16x1xf32>
    %22 = arith.divf %20, %21 : vector<16x1xf32>
    %23 = arith.mulf %11, %11 : vector<16x32xf32>
    %cst_17 = arith.constant dense<0.000000e+00> : vector<16xf32>
    %24 = vector.multi_reduction <add>, %23, %cst_17 [1] : vector<16x32xf32> to vector<16xf32>
    %25 = vector.shape_cast %24 : vector<16xf32> to vector<16x1xf32>
    %cst_18 = arith.constant 3.200000e+01 : f32
    %26 = vector.broadcast %cst_18 : f32 to vector<16x1xf32>
    %27 = arith.divf %25, %26 : vector<16x1xf32>
    %28 = arith.mulf %22, %22 : vector<16x1xf32>
    %29 = arith.subf %27, %28 : vector<16x1xf32>
    %30 = vector.broadcast %22 : vector<16x1xf32> to vector<16x32xf32>
    %31 = arith.subf %11, %30 : vector<16x32xf32>
    %cst_19 = arith.constant 9.99999997E-7 : f32
    %32 = vector.broadcast %cst_19 : f32 to vector<16x1xf32>
    %33 = arith.addf %29, %32 : vector<16x1xf32>
    %34 = math.rsqrt %33 : vector<16x1xf32>
    %35 = vector.broadcast %34 : vector<16x1xf32> to vector<16x32xf32>
    %36 = arith.mulf %31, %35 : vector<16x32xf32>
    %37 = vector.broadcast %16 : vector<1x32xf32> to vector<16x32xf32>
    %38 = arith.mulf %36, %37 : vector<16x32xf32>
    %39 = vector.broadcast %18 : vector<1x32xf32> to vector<16x32xf32>
    %40 = arith.addf %38, %39 : vector<16x32xf32>
    %c0_20 = arith.constant 0 : index
    %c0_21 = arith.constant 0 : index
    %c0_22 = arith.constant 0 : index
    %41 = vector.load %arg7[%c0_20, %c0_21, %c0_22] : memref<2x32x96xf32, #tpu.memory_space<vmem>>, vector<1x32x96xf32>
    %42 = vector.shape_cast %41 : vector<1x32x96xf32> to vector<32x96xf32>
    %cst_23 = arith.constant dense<0.000000e+00> : vector<16x96xf32>
    %43 = tpu.matmul %40, %42, %cst_23 {dimension_numbers = #tpu.dot_dimension_numbers<[1], [0], [0], [1], [0, 0, 1, 1], [], []>} : vector<16x32xf32>, vector<32x96xf32>, vector<16x96xf32> -> vector<16x96xf32>
    %c0_24 = arith.constant 0 : index
    %c0_25 = arith.constant 0 : index
    %c0_26 = arith.constant 0 : index
    %44 = vector.load %arg8[%c0_24, %c0_25, %c0_26] : memref<2x1x96xf32, #tpu.memory_space<vmem>>, vector<1x1x96xf32>
    %45 = vector.shape_cast %44 : vector<1x1x96xf32> to vector<1x96xf32>
    %46 = vector.broadcast %45 : vector<1x96xf32> to vector<16x96xf32>
    %47 = arith.addf %43, %46 : vector<16x96xf32>
    %48 = vector.extract_strided_slice %47 {offsets = [0, 0], sizes = [16, 32], strides = [1, 1]} : vector<16x96xf32> to vector<16x32xf32>
    %cst_27 = arith.constant 0.0117851133 : f32
    %49 = vector.broadcast %cst_27 : f32 to vector<16x32xf32>
    %50 = arith.mulf %48, %49 : vector<16x32xf32>
    %51 = vector.extract_strided_slice %47 {offsets = [0, 32], sizes = [16, 32], strides = [1, 1]} : vector<16x96xf32> to vector<16x32xf32>
    %52 = vector.extract_strided_slice %47 {offsets = [0, 64], sizes = [16, 32], strides = [1, 1]} : vector<16x96xf32> to vector<16x32xf32>
    %c0_28 = arith.constant 0 : index
    %c0_29 = arith.constant 0 : index
    %c0_30 = arith.constant 0 : index
    %53 = vector.load %arg9[%c0_28, %c0_29, %c0_30] : memref<2x32x32xf32, #tpu.memory_space<vmem>>, vector<1x32x32xf32>
    %54 = vector.shape_cast %53 : vector<1x32x32xf32> to vector<32x32xf32>
    %55 = vector.extract_strided_slice %50 {offsets = [0, 0], sizes = [8, 32], strides = [1, 1]} : vector<16x32xf32> to vector<8x32xf32>
    %56 = vector.extract_strided_slice %51 {offsets = [0, 0], sizes = [8, 32], strides = [1, 1]} : vector<16x32xf32> to vector<8x32xf32>
    %57 = vector.extract_strided_slice %52 {offsets = [0, 0], sizes = [8, 32], strides = [1, 1]} : vector<16x32xf32> to vector<8x32xf32>
    %58 = vector.extract_strided_slice %14 {offsets = [0, 0], sizes = [1, 8], strides = [1, 1]} : vector<2x8xf32> to vector<1x8xf32>
    %59 = vector.extract_strided_slice %55 {offsets = [0, 0], sizes = [8, 8], strides = [1, 1]} : vector<8x32xf32> to vector<8x8xf32>
    %60 = vector.extract_strided_slice %56 {offsets = [0, 0], sizes = [8, 8], strides = [1, 1]} : vector<8x32xf32> to vector<8x8xf32>
    %61 = vector.extract_strided_slice %57 {offsets = [0, 0], sizes = [8, 8], strides = [1, 1]} : vector<8x32xf32> to vector<8x8xf32>
    %cst_31 = arith.constant dense<0.000000e+00> : vector<8x8xf32>
    %62 = tpu.matmul %59, %60, %cst_31 {dimension_numbers = #tpu.dot_dimension_numbers<[1], [1], [0], [0], [0, 0, 1, 0], [], []>} : vector<8x8xf32>, vector<8x8xf32>, vector<8x8xf32> -> vector<8x8xf32>
    %63 = math.tanh %62 : vector<8x8xf32>
    %cst_32 = arith.constant 3.000000e+01 : f32
    %64 = vector.broadcast %cst_32 : f32 to vector<8x8xf32>
    %65 = arith.mulf %64, %63 : vector<8x8xf32>
    %66 = vector.broadcast %58 : vector<1x8xf32> to vector<8x8xf32>
    %67 = arith.addf %65, %66 : vector<8x8xf32>
    %68 = math.exp %67 : vector<8x8xf32>
    %cst_33 = arith.constant dense<0.000000e+00> : vector<8xf32>
    %69 = vector.multi_reduction <add>, %68, %cst_33 [1] : vector<8x8xf32> to vector<8xf32>
    %70 = vector.shape_cast %69 : vector<8xf32> to vector<8x1xf32>
    %71 = tpu.reciprocal %70 {approx = true} : vector<8x1xf32> -> vector<8x1xf32>
    %72 = vector.broadcast %71 : vector<8x1xf32> to vector<8x8xf32>
    %73 = arith.mulf %68, %72 : vector<8x8xf32>
    %cst_34 = arith.constant dense<0.000000e+00> : vector<8x8xf32>
    %74 = tpu.matmul %73, %61, %cst_34 {dimension_numbers = #tpu.dot_dimension_numbers<[1], [0], [0], [1], [0, 0, 1, 1], [], []>} : vector<8x8xf32>, vector<8x8xf32>, vector<8x8xf32> -> vector<8x8xf32>
    %75 = vector.extract_strided_slice %55 {offsets = [0, 8], sizes = [8, 8], strides = [1, 1]} : vector<8x32xf32> to vector<8x8xf32>
    %76 = vector.extract_strided_slice %56 {offsets = [0, 8], sizes = [8, 8], strides = [1, 1]} : vector<8x32xf32> to vector<8x8xf32>
    %77 = vector.extract_strided_slice %57 {offsets = [0, 8], sizes = [8, 8], strides = [1, 1]} : vector<8x32xf32> to vector<8x8xf32>
    %cst_35 = arith.constant dense<0.000000e+00> : vector<8x8xf32>
    %78 = tpu.matmul %75, %76, %cst_35 {dimension_numbers = #tpu.dot_dimension_numbers<[1], [1], [0], [0], [0, 0, 1, 0], [], []>} : vector<8x8xf32>, vector<8x8xf32>, vector<8x8xf32> -> vector<8x8xf32>
    %79 = math.tanh %78 : vector<8x8xf32>
    %cst_36 = arith.constant 3.000000e+01 : f32
    %80 = vector.broadcast %cst_36 : f32 to vector<8x8xf32>
    %81 = arith.mulf %80, %79 : vector<8x8xf32>
    %82 = vector.broadcast %58 : vector<1x8xf32> to vector<8x8xf32>
    %83 = arith.addf %81, %82 : vector<8x8xf32>
    %84 = math.exp %83 : vector<8x8xf32>
    %cst_37 = arith.constant dense<0.000000e+00> : vector<8xf32>
    %85 = vector.multi_reduction <add>, %84, %cst_37 [1] : vector<8x8xf32> to vector<8xf32>
    %86 = vector.shape_cast %85 : vector<8xf32> to vector<8x1xf32>
    %87 = tpu.reciprocal %86 {approx = true} : vector<8x1xf32> -> vector<8x1xf32>
    %88 = vector.broadcast %87 : vector<8x1xf32> to vector<8x8xf32>
    %89 = arith.mulf %84, %88 : vector<8x8xf32>
    %cst_38 = arith.constant dense<0.000000e+00> : vector<8x8xf32>
    %90 = tpu.matmul %89, %77, %cst_38 {dimension_numbers = #tpu.dot_dimension_numbers<[1], [0], [0], [1], [0, 0, 1, 1], [], []>} : vector<8x8xf32>, vector<8x8xf32>, vector<8x8xf32> -> vector<8x8xf32>
    %91 = vector.extract_strided_slice %55 {offsets = [0, 16], sizes = [8, 8], strides = [1, 1]} : vector<8x32xf32> to vector<8x8xf32>
    %92 = vector.extract_strided_slice %56 {offsets = [0, 16], sizes = [8, 8], strides = [1, 1]} : vector<8x32xf32> to vector<8x8xf32>
    %93 = vector.extract_strided_slice %57 {offsets = [0, 16], sizes = [8, 8], strides = [1, 1]} : vector<8x32xf32> to vector<8x8xf32>
    %cst_39 = arith.constant dense<0.000000e+00> : vector<8x8xf32>
    %94 = tpu.matmul %91, %92, %cst_39 {dimension_numbers = #tpu.dot_dimension_numbers<[1], [1], [0], [0], [0, 0, 1, 0], [], []>} : vector<8x8xf32>, vector<8x8xf32>, vector<8x8xf32> -> vector<8x8xf32>
    %95 = math.tanh %94 : vector<8x8xf32>
    %cst_40 = arith.constant 3.000000e+01 : f32
    %96 = vector.broadcast %cst_40 : f32 to vector<8x8xf32>
    %97 = arith.mulf %96, %95 : vector<8x8xf32>
    %98 = vector.broadcast %58 : vector<1x8xf32> to vector<8x8xf32>
    %99 = arith.addf %97, %98 : vector<8x8xf32>
    %100 = math.exp %99 : vector<8x8xf32>
    %cst_41 = arith.constant dense<0.000000e+00> : vector<8xf32>
    %101 = vector.multi_reduction <add>, %100, %cst_41 [1] : vector<8x8xf32> to vector<8xf32>
    %102 = vector.shape_cast %101 : vector<8xf32> to vector<8x1xf32>
    %103 = tpu.reciprocal %102 {approx = true} : vector<8x1xf32> -> vector<8x1xf32>
    %104 = vector.broadcast %103 : vector<8x1xf32> to vector<8x8xf32>
    %105 = arith.mulf %100, %104 : vector<8x8xf32>
    %cst_42 = arith.constant dense<0.000000e+00> : vector<8x8xf32>
    %106 = tpu.matmul %105, %93, %cst_42 {dimension_numbers = #tpu.dot_dimension_numbers<[1], [0], [0], [1], [0, 0, 1, 1], [], []>} : vector<8x8xf32>, vector<8x8xf32>, vector<8x8xf32> -> vector<8x8xf32>
    %107 = vector.extract_strided_slice %55 {offsets = [0, 24], sizes = [8, 8], strides = [1, 1]} : vector<8x32xf32> to vector<8x8xf32>
    %108 = vector.extract_strided_slice %56 {offsets = [0, 24], sizes = [8, 8], strides = [1, 1]} : vector<8x32xf32> to vector<8x8xf32>
    %109 = vector.extract_strided_slice %57 {offsets = [0, 24], sizes = [8, 8], strides = [1, 1]} : vector<8x32xf32> to vector<8x8xf32>
    %cst_43 = arith.constant dense<0.000000e+00> : vector<8x8xf32>
    %110 = tpu.matmul %107, %108, %cst_43 {dimension_numbers = #tpu.dot_dimension_numbers<[1], [1], [0], [0], [0, 0, 1, 0], [], []>} : vector<8x8xf32>, vector<8x8xf32>, vector<8x8xf32> -> vector<8x8xf32>
    %111 = math.tanh %110 : vector<8x8xf32>
    %cst_44 = arith.constant 3.000000e+01 : f32
    %112 = vector.broadcast %cst_44 : f32 to vector<8x8xf32>
    %113 = arith.mulf %112, %111 : vector<8x8xf32>
    %114 = vector.broadcast %58 : vector<1x8xf32> to vector<8x8xf32>
    %115 = arith.addf %113, %114 : vector<8x8xf32>
    %116 = math.exp %115 : vector<8x8xf32>
    %cst_45 = arith.constant dense<0.000000e+00> : vector<8xf32>
    %117 = vector.multi_reduction <add>, %116, %cst_45 [1] : vector<8x8xf32> to vector<8xf32>
    %118 = vector.shape_cast %117 : vector<8xf32> to vector<8x1xf32>
    %119 = tpu.reciprocal %118 {approx = true} : vector<8x1xf32> -> vector<8x1xf32>
    %120 = vector.broadcast %119 : vector<8x1xf32> to vector<8x8xf32>
    %121 = arith.mulf %116, %120 : vector<8x8xf32>
    %cst_46 = arith.constant dense<0.000000e+00> : vector<8x8xf32>
    %122 = tpu.matmul %121, %109, %cst_46 {dimension_numbers = #tpu.dot_dimension_numbers<[1], [0], [0], [1], [0, 0, 1, 1], [], []>} : vector<8x8xf32>, vector<8x8xf32>, vector<8x8xf32> -> vector<8x8xf32>
    %123 = tpu.concatenate %74, %90, %106, %122 in 1 : vector<8x8xf32>, vector<8x8xf32>, vector<8x8xf32>, vector<8x8xf32> -> vector<8x32xf32>
    %cst_47 = arith.constant dense<0.000000e+00> : vector<8x32xf32>
    %124 = tpu.matmul %123, %54, %cst_47 {dimension_numbers = #tpu.dot_dimension_numbers<[1], [0], [0], [1], [0, 0, 1, 1], [], []>} : vector<8x32xf32>, vector<32x32xf32>, vector<8x32xf32> -> vector<8x32xf32>
    %125 = vector.extract_strided_slice %50 {offsets = [8, 0], sizes = [8, 32], strides = [1, 1]} : vector<16x32xf32> to vector<8x32xf32>
    %126 = vector.extract_strided_slice %51 {offsets = [8, 0], sizes = [8, 32], strides = [1, 1]} : vector<16x32xf32> to vector<8x32xf32>
    %127 = vector.extract_strided_slice %52 {offsets = [8, 0], sizes = [8, 32], strides = [1, 1]} : vector<16x32xf32> to vector<8x32xf32>
    %128 = vector.extract_strided_slice %14 {offsets = [1, 0], sizes = [1, 8], strides = [1, 1]} : vector<2x8xf32> to vector<1x8xf32>
    %129 = vector.extract_strided_slice %125 {offsets = [0, 0], sizes = [8, 8], strides = [1, 1]} : vector<8x32xf32> to vector<8x8xf32>
    %130 = vector.extract_strided_slice %126 {offsets = [0, 0], sizes = [8, 8], strides = [1, 1]} : vector<8x32xf32> to vector<8x8xf32>
    %131 = vector.extract_strided_slice %127 {offsets = [0, 0], sizes = [8, 8], strides = [1, 1]} : vector<8x32xf32> to vector<8x8xf32>
    %cst_48 = arith.constant dense<0.000000e+00> : vector<8x8xf32>
    %132 = tpu.matmul %129, %130, %cst_48 {dimension_numbers = #tpu.dot_dimension_numbers<[1], [1], [0], [0], [0, 0, 1, 0], [], []>} : vector<8x8xf32>, vector<8x8xf32>, vector<8x8xf32> -> vector<8x8xf32>
    %133 = math.tanh %132 : vector<8x8xf32>
    %cst_49 = arith.constant 3.000000e+01 : f32
    %134 = vector.broadcast %cst_49 : f32 to vector<8x8xf32>
    %135 = arith.mulf %134, %133 : vector<8x8xf32>
    %136 = vector.broadcast %128 : vector<1x8xf32> to vector<8x8xf32>
    %137 = arith.addf %135, %136 : vector<8x8xf32>
    %138 = math.exp %137 : vector<8x8xf32>
    %cst_50 = arith.constant dense<0.000000e+00> : vector<8xf32>
    %139 = vector.multi_reduction <add>, %138, %cst_50 [1] : vector<8x8xf32> to vector<8xf32>
    %140 = vector.shape_cast %139 : vector<8xf32> to vector<8x1xf32>
    %141 = tpu.reciprocal %140 {approx = true} : vector<8x1xf32> -> vector<8x1xf32>
    %142 = vector.broadcast %141 : vector<8x1xf32> to vector<8x8xf32>
    %143 = arith.mulf %138, %142 : vector<8x8xf32>
    %cst_51 = arith.constant dense<0.000000e+00> : vector<8x8xf32>
    %144 = tpu.matmul %143, %131, %cst_51 {dimension_numbers = #tpu.dot_dimension_numbers<[1], [0], [0], [1], [0, 0, 1, 1], [], []>} : vector<8x8xf32>, vector<8x8xf32>, vector<8x8xf32> -> vector<8x8xf32>
    %145 = vector.extract_strided_slice %125 {offsets = [0, 8], sizes = [8, 8], strides = [1, 1]} : vector<8x32xf32> to vector<8x8xf32>
    %146 = vector.extract_strided_slice %126 {offsets = [0, 8], sizes = [8, 8], strides = [1, 1]} : vector<8x32xf32> to vector<8x8xf32>
    %147 = vector.extract_strided_slice %127 {offsets = [0, 8], sizes = [8, 8], strides = [1, 1]} : vector<8x32xf32> to vector<8x8xf32>
    %cst_52 = arith.constant dense<0.000000e+00> : vector<8x8xf32>
    %148 = tpu.matmul %145, %146, %cst_52 {dimension_numbers = #tpu.dot_dimension_numbers<[1], [1], [0], [0], [0, 0, 1, 0], [], []>} : vector<8x8xf32>, vector<8x8xf32>, vector<8x8xf32> -> vector<8x8xf32>
    %149 = math.tanh %148 : vector<8x8xf32>
    %cst_53 = arith.constant 3.000000e+01 : f32
    %150 = vector.broadcast %cst_53 : f32 to vector<8x8xf32>
    %151 = arith.mulf %150, %149 : vector<8x8xf32>
    %152 = vector.broadcast %128 : vector<1x8xf32> to vector<8x8xf32>
    %153 = arith.addf %151, %152 : vector<8x8xf32>
    %154 = math.exp %153 : vector<8x8xf32>
    %cst_54 = arith.constant dense<0.000000e+00> : vector<8xf32>
    %155 = vector.multi_reduction <add>, %154, %cst_54 [1] : vector<8x8xf32> to vector<8xf32>
    %156 = vector.shape_cast %155 : vector<8xf32> to vector<8x1xf32>
    %157 = tpu.reciprocal %156 {approx = true} : vector<8x1xf32> -> vector<8x1xf32>
    %158 = vector.broadcast %157 : vector<8x1xf32> to vector<8x8xf32>
    %159 = arith.mulf %154, %158 : vector<8x8xf32>
    %cst_55 = arith.constant dense<0.000000e+00> : vector<8x8xf32>
    %160 = tpu.matmul %159, %147, %cst_55 {dimension_numbers = #tpu.dot_dimension_numbers<[1], [0], [0], [1], [0, 0, 1, 1], [], []>} : vector<8x8xf32>, vector<8x8xf32>, vector<8x8xf32> -> vector<8x8xf32>
    %161 = vector.extract_strided_slice %125 {offsets = [0, 16], sizes = [8, 8], strides = [1, 1]} : vector<8x32xf32> to vector<8x8xf32>
    %162 = vector.extract_strided_slice %126 {offsets = [0, 16], sizes = [8, 8], strides = [1, 1]} : vector<8x32xf32> to vector<8x8xf32>
    %163 = vector.extract_strided_slice %127 {offsets = [0, 16], sizes = [8, 8], strides = [1, 1]} : vector<8x32xf32> to vector<8x8xf32>
    %cst_56 = arith.constant dense<0.000000e+00> : vector<8x8xf32>
    %164 = tpu.matmul %161, %162, %cst_56 {dimension_numbers = #tpu.dot_dimension_numbers<[1], [1], [0], [0], [0, 0, 1, 0], [], []>} : vector<8x8xf32>, vector<8x8xf32>, vector<8x8xf32> -> vector<8x8xf32>
    %165 = math.tanh %164 : vector<8x8xf32>
    %cst_57 = arith.constant 3.000000e+01 : f32
    %166 = vector.broadcast %cst_57 : f32 to vector<8x8xf32>
    %167 = arith.mulf %166, %165 : vector<8x8xf32>
    %168 = vector.broadcast %128 : vector<1x8xf32> to vector<8x8xf32>
    %169 = arith.addf %167, %168 : vector<8x8xf32>
    %170 = math.exp %169 : vector<8x8xf32>
    %cst_58 = arith.constant dense<0.000000e+00> : vector<8xf32>
    %171 = vector.multi_reduction <add>, %170, %cst_58 [1] : vector<8x8xf32> to vector<8xf32>
    %172 = vector.shape_cast %171 : vector<8xf32> to vector<8x1xf32>
    %173 = tpu.reciprocal %172 {approx = true} : vector<8x1xf32> -> vector<8x1xf32>
    %174 = vector.broadcast %173 : vector<8x1xf32> to vector<8x8xf32>
    %175 = arith.mulf %170, %174 : vector<8x8xf32>
    %cst_59 = arith.constant dense<0.000000e+00> : vector<8x8xf32>
    %176 = tpu.matmul %175, %163, %cst_59 {dimension_numbers = #tpu.dot_dimension_numbers<[1], [0], [0], [1], [0, 0, 1, 1], [], []>} : vector<8x8xf32>, vector<8x8xf32>, vector<8x8xf32> -> vector<8x8xf32>
    %177 = vector.extract_strided_slice %125 {offsets = [0, 24], sizes = [8, 8], strides = [1, 1]} : vector<8x32xf32> to vector<8x8xf32>
    %178 = vector.extract_strided_slice %126 {offsets = [0, 24], sizes = [8, 8], strides = [1, 1]} : vector<8x32xf32> to vector<8x8xf32>
    %179 = vector.extract_strided_slice %127 {offsets = [0, 24], sizes = [8, 8], strides = [1, 1]} : vector<8x32xf32> to vector<8x8xf32>
    %cst_60 = arith.constant dense<0.000000e+00> : vector<8x8xf32>
    %180 = tpu.matmul %177, %178, %cst_60 {dimension_numbers = #tpu.dot_dimension_numbers<[1], [1], [0], [0], [0, 0, 1, 0], [], []>} : vector<8x8xf32>, vector<8x8xf32>, vector<8x8xf32> -> vector<8x8xf32>
    %181 = math.tanh %180 : vector<8x8xf32>
    %cst_61 = arith.constant 3.000000e+01 : f32
    %182 = vector.broadcast %cst_61 : f32 to vector<8x8xf32>
    %183 = arith.mulf %182, %181 : vector<8x8xf32>
    %184 = vector.broadcast %128 : vector<1x8xf32> to vector<8x8xf32>
    %185 = arith.addf %183, %184 : vector<8x8xf32>
    %186 = math.exp %185 : vector<8x8xf32>
    %cst_62 = arith.constant dense<0.000000e+00> : vector<8xf32>
    %187 = vector.multi_reduction <add>, %186, %cst_62 [1] : vector<8x8xf32> to vector<8xf32>
    %188 = vector.shape_cast %187 : vector<8xf32> to vector<8x1xf32>
    %189 = tpu.reciprocal %188 {approx = true} : vector<8x1xf32> -> vector<8x1xf32>
    %190 = vector.broadcast %189 : vector<8x1xf32> to vector<8x8xf32>
    %191 = arith.mulf %186, %190 : vector<8x8xf32>
    %cst_63 = arith.constant dense<0.000000e+00> : vector<8x8xf32>
    %192 = tpu.matmul %191, %179, %cst_63 {dimension_numbers = #tpu.dot_dimension_numbers<[1], [0], [0], [1], [0, 0, 1, 1], [], []>} : vector<8x8xf32>, vector<8x8xf32>, vector<8x8xf32> -> vector<8x8xf32>
    %193 = tpu.concatenate %144, %160, %176, %192 in 1 : vector<8x8xf32>, vector<8x8xf32>, vector<8x8xf32>, vector<8x8xf32> -> vector<8x32xf32>
    %cst_64 = arith.constant dense<0.000000e+00> : vector<8x32xf32>
    %194 = tpu.matmul %193, %54, %cst_64 {dimension_numbers = #tpu.dot_dimension_numbers<[1], [0], [0], [1], [0, 0, 1, 1], [], []>} : vector<8x32xf32>, vector<32x32xf32>, vector<8x32xf32> -> vector<8x32xf32>
    %195 = tpu.concatenate %124, %194 in 0 : vector<8x32xf32>, vector<8x32xf32> -> vector<16x32xf32>
    %196 = arith.addf %11, %195 : vector<16x32xf32>
    %c0_65 = arith.constant 0 : index
    %c0_66 = arith.constant 0 : index
    %c0_67 = arith.constant 0 : index
    %197 = vector.load %arg10[%c0_65, %c0_66, %c0_67] : memref<2x1x32xf32, #tpu.memory_space<vmem>>, vector<1x1x32xf32>
    %198 = vector.shape_cast %197 : vector<1x1x32xf32> to vector<1x32xf32>
    %199 = vector.broadcast %198 : vector<1x32xf32> to vector<16x32xf32>
    %200 = arith.addf %196, %199 : vector<16x32xf32>
    %c0_68 = arith.constant 0 : index
    %c0_69 = arith.constant 0 : index
    %c0_70 = arith.constant 0 : index
    %201 = vector.load %arg11[%c0_68, %c0_69, %c0_70] : memref<2x1x32xf32, #tpu.memory_space<vmem>>, vector<1x1x32xf32>
    %202 = vector.shape_cast %201 : vector<1x1x32xf32> to vector<1x32xf32>
    %c0_71 = arith.constant 0 : index
    %c0_72 = arith.constant 0 : index
    %c0_73 = arith.constant 0 : index
    %203 = vector.load %arg12[%c0_71, %c0_72, %c0_73] : memref<2x1x32xf32, #tpu.memory_space<vmem>>, vector<1x1x32xf32>
    %204 = vector.shape_cast %203 : vector<1x1x32xf32> to vector<1x32xf32>
    %cst_74 = arith.constant dense<0.000000e+00> : vector<16xf32>
    %205 = vector.multi_reduction <add>, %200, %cst_74 [1] : vector<16x32xf32> to vector<16xf32>
    %206 = vector.shape_cast %205 : vector<16xf32> to vector<16x1xf32>
    %cst_75 = arith.constant 3.200000e+01 : f32
    %207 = vector.broadcast %cst_75 : f32 to vector<16x1xf32>
    %208 = arith.divf %206, %207 : vector<16x1xf32>
    %209 = arith.mulf %200, %200 : vector<16x32xf32>
    %cst_76 = arith.constant dense<0.000000e+00> : vector<16xf32>
    %210 = vector.multi_reduction <add>, %209, %cst_76 [1] : vector<16x32xf32> to vector<16xf32>
    %211 = vector.shape_cast %210 : vector<16xf32> to vector<16x1xf32>
    %cst_77 = arith.constant 3.200000e+01 : f32
    %212 = vector.broadcast %cst_77 : f32 to vector<16x1xf32>
    %213 = arith.divf %211, %212 : vector<16x1xf32>
    %214 = arith.mulf %208, %208 : vector<16x1xf32>
    %215 = arith.subf %213, %214 : vector<16x1xf32>
    %216 = vector.broadcast %208 : vector<16x1xf32> to vector<16x32xf32>
    %217 = arith.subf %200, %216 : vector<16x32xf32>
    %cst_78 = arith.constant 9.99999997E-7 : f32
    %218 = vector.broadcast %cst_78 : f32 to vector<16x1xf32>
    %219 = arith.addf %215, %218 : vector<16x1xf32>
    %220 = math.rsqrt %219 : vector<16x1xf32>
    %221 = vector.broadcast %220 : vector<16x1xf32> to vector<16x32xf32>
    %222 = arith.mulf %217, %221 : vector<16x32xf32>
    %223 = vector.broadcast %202 : vector<1x32xf32> to vector<16x32xf32>
    %224 = arith.mulf %222, %223 : vector<16x32xf32>
    %225 = vector.broadcast %204 : vector<1x32xf32> to vector<16x32xf32>
    %226 = arith.addf %224, %225 : vector<16x32xf32>
    %c0_79 = arith.constant 0 : index
    %c0_80 = arith.constant 0 : index
    %c0_81 = arith.constant 0 : index
    %227 = vector.load %arg13[%c0_79, %c0_80, %c0_81] : memref<2x32x64xf32, #tpu.memory_space<vmem>>, vector<1x32x64xf32>
    %228 = vector.shape_cast %227 : vector<1x32x64xf32> to vector<32x64xf32>
    %cst_82 = arith.constant dense<0.000000e+00> : vector<16x64xf32>
    %229 = tpu.matmul %226, %228, %cst_82 {dimension_numbers = #tpu.dot_dimension_numbers<[1], [0], [0], [1], [0, 0, 1, 1], [], []>} : vector<16x32xf32>, vector<32x64xf32>, vector<16x64xf32> -> vector<16x64xf32>
    %c0_83 = arith.constant 0 : index
    %c0_84 = arith.constant 0 : index
    %c0_85 = arith.constant 0 : index
    %230 = vector.load %arg14[%c0_83, %c0_84, %c0_85] : memref<2x1x64xf32, #tpu.memory_space<vmem>>, vector<1x1x64xf32>
    %231 = vector.shape_cast %230 : vector<1x1x64xf32> to vector<1x64xf32>
    %232 = vector.broadcast %231 : vector<1x64xf32> to vector<16x64xf32>
    %233 = arith.addf %229, %232 : vector<16x64xf32>
    %cst_86 = arith.constant 0.000000e+00 : f32
    %234 = vector.broadcast %cst_86 : f32 to vector<16x64xf32>
    %235 = arith.maximumf %233, %234 : vector<16x64xf32>
    %c0_87 = arith.constant 0 : index
    %c0_88 = arith.constant 0 : index
    %c0_89 = arith.constant 0 : index
    %236 = vector.load %arg15[%c0_87, %c0_88, %c0_89] : memref<2x64x32xf32, #tpu.memory_space<vmem>>, vector<1x64x32xf32>
    %237 = vector.shape_cast %236 : vector<1x64x32xf32> to vector<64x32xf32>
    %cst_90 = arith.constant dense<0.000000e+00> : vector<16x32xf32>
    %238 = tpu.matmul %235, %237, %cst_90 {dimension_numbers = #tpu.dot_dimension_numbers<[1], [0], [0], [1], [0, 0, 1, 1], [], []>} : vector<16x64xf32>, vector<64x32xf32>, vector<16x32xf32> -> vector<16x32xf32>
    %c0_91 = arith.constant 0 : index
    %c0_92 = arith.constant 0 : index
    %c0_93 = arith.constant 0 : index
    %239 = vector.load %arg16[%c0_91, %c0_92, %c0_93] : memref<2x1x32xf32, #tpu.memory_space<vmem>>, vector<1x1x32xf32>
    %240 = vector.shape_cast %239 : vector<1x1x32xf32> to vector<1x32xf32>
    %241 = vector.broadcast %240 : vector<1x32xf32> to vector<16x32xf32>
    %242 = arith.addf %238, %241 : vector<16x32xf32>
    %243 = arith.addf %200, %242 : vector<16x32xf32>
    %c1 = arith.constant 1 : index
    %c0_94 = arith.constant 0 : index
    %c0_95 = arith.constant 0 : index
    %244 = vector.load %arg5[%c1, %c0_94, %c0_95] : memref<2x1x32xf32, #tpu.memory_space<vmem>>, vector<1x1x32xf32>
    %245 = vector.shape_cast %244 : vector<1x1x32xf32> to vector<1x32xf32>
    %c1_96 = arith.constant 1 : index
    %c0_97 = arith.constant 0 : index
    %c0_98 = arith.constant 0 : index
    %246 = vector.load %arg6[%c1_96, %c0_97, %c0_98] : memref<2x1x32xf32, #tpu.memory_space<vmem>>, vector<1x1x32xf32>
    %247 = vector.shape_cast %246 : vector<1x1x32xf32> to vector<1x32xf32>
    %cst_99 = arith.constant dense<0.000000e+00> : vector<16xf32>
    %248 = vector.multi_reduction <add>, %243, %cst_99 [1] : vector<16x32xf32> to vector<16xf32>
    %249 = vector.shape_cast %248 : vector<16xf32> to vector<16x1xf32>
    %cst_100 = arith.constant 3.200000e+01 : f32
    %250 = vector.broadcast %cst_100 : f32 to vector<16x1xf32>
    %251 = arith.divf %249, %250 : vector<16x1xf32>
    %252 = arith.mulf %243, %243 : vector<16x32xf32>
    %cst_101 = arith.constant dense<0.000000e+00> : vector<16xf32>
    %253 = vector.multi_reduction <add>, %252, %cst_101 [1] : vector<16x32xf32> to vector<16xf32>
    %254 = vector.shape_cast %253 : vector<16xf32> to vector<16x1xf32>
    %cst_102 = arith.constant 3.200000e+01 : f32
    %255 = vector.broadcast %cst_102 : f32 to vector<16x1xf32>
    %256 = arith.divf %254, %255 : vector<16x1xf32>
    %257 = arith.mulf %251, %251 : vector<16x1xf32>
    %258 = arith.subf %256, %257 : vector<16x1xf32>
    %259 = vector.broadcast %251 : vector<16x1xf32> to vector<16x32xf32>
    %260 = arith.subf %243, %259 : vector<16x32xf32>
    %cst_103 = arith.constant 9.99999997E-7 : f32
    %261 = vector.broadcast %cst_103 : f32 to vector<16x1xf32>
    %262 = arith.addf %258, %261 : vector<16x1xf32>
    %263 = math.rsqrt %262 : vector<16x1xf32>
    %264 = vector.broadcast %263 : vector<16x1xf32> to vector<16x32xf32>
    %265 = arith.mulf %260, %264 : vector<16x32xf32>
    %266 = vector.broadcast %245 : vector<1x32xf32> to vector<16x32xf32>
    %267 = arith.mulf %265, %266 : vector<16x32xf32>
    %268 = vector.broadcast %247 : vector<1x32xf32> to vector<16x32xf32>
    %269 = arith.addf %267, %268 : vector<16x32xf32>
    %c1_104 = arith.constant 1 : index
    %c0_105 = arith.constant 0 : index
    %c0_106 = arith.constant 0 : index
    %270 = vector.load %arg7[%c1_104, %c0_105, %c0_106] : memref<2x32x96xf32, #tpu.memory_space<vmem>>, vector<1x32x96xf32>
    %271 = vector.shape_cast %270 : vector<1x32x96xf32> to vector<32x96xf32>
    %cst_107 = arith.constant dense<0.000000e+00> : vector<16x96xf32>
    %272 = tpu.matmul %269, %271, %cst_107 {dimension_numbers = #tpu.dot_dimension_numbers<[1], [0], [0], [1], [0, 0, 1, 1], [], []>} : vector<16x32xf32>, vector<32x96xf32>, vector<16x96xf32> -> vector<16x96xf32>
    %c1_108 = arith.constant 1 : index
    %c0_109 = arith.constant 0 : index
    %c0_110 = arith.constant 0 : index
    %273 = vector.load %arg8[%c1_108, %c0_109, %c0_110] : memref<2x1x96xf32, #tpu.memory_space<vmem>>, vector<1x1x96xf32>
    %274 = vector.shape_cast %273 : vector<1x1x96xf32> to vector<1x96xf32>
    %275 = vector.broadcast %274 : vector<1x96xf32> to vector<16x96xf32>
    %276 = arith.addf %272, %275 : vector<16x96xf32>
    %277 = vector.extract_strided_slice %276 {offsets = [0, 0], sizes = [16, 32], strides = [1, 1]} : vector<16x96xf32> to vector<16x32xf32>
    %cst_111 = arith.constant 0.0117851133 : f32
    %278 = vector.broadcast %cst_111 : f32 to vector<16x32xf32>
    %279 = arith.mulf %277, %278 : vector<16x32xf32>
    %280 = vector.extract_strided_slice %276 {offsets = [0, 32], sizes = [16, 32], strides = [1, 1]} : vector<16x96xf32> to vector<16x32xf32>
    %281 = vector.extract_strided_slice %276 {offsets = [0, 64], sizes = [16, 32], strides = [1, 1]} : vector<16x96xf32> to vector<16x32xf32>
    %c1_112 = arith.constant 1 : index
    %c0_113 = arith.constant 0 : index
    %c0_114 = arith.constant 0 : index
    %282 = vector.load %arg9[%c1_112, %c0_113, %c0_114] : memref<2x32x32xf32, #tpu.memory_space<vmem>>, vector<1x32x32xf32>
    %283 = vector.shape_cast %282 : vector<1x32x32xf32> to vector<32x32xf32>
    %284 = vector.extract_strided_slice %279 {offsets = [0, 0], sizes = [8, 32], strides = [1, 1]} : vector<16x32xf32> to vector<8x32xf32>
    %285 = vector.extract_strided_slice %280 {offsets = [0, 0], sizes = [8, 32], strides = [1, 1]} : vector<16x32xf32> to vector<8x32xf32>
    %286 = vector.extract_strided_slice %281 {offsets = [0, 0], sizes = [8, 32], strides = [1, 1]} : vector<16x32xf32> to vector<8x32xf32>
    %287 = vector.extract_strided_slice %14 {offsets = [0, 0], sizes = [1, 8], strides = [1, 1]} : vector<2x8xf32> to vector<1x8xf32>
    %288 = vector.extract_strided_slice %284 {offsets = [0, 0], sizes = [8, 8], strides = [1, 1]} : vector<8x32xf32> to vector<8x8xf32>
    %289 = vector.extract_strided_slice %285 {offsets = [0, 0], sizes = [8, 8], strides = [1, 1]} : vector<8x32xf32> to vector<8x8xf32>
    %290 = vector.extract_strided_slice %286 {offsets = [0, 0], sizes = [8, 8], strides = [1, 1]} : vector<8x32xf32> to vector<8x8xf32>
    %cst_115 = arith.constant dense<0.000000e+00> : vector<8x8xf32>
    %291 = tpu.matmul %288, %289, %cst_115 {dimension_numbers = #tpu.dot_dimension_numbers<[1], [1], [0], [0], [0, 0, 1, 0], [], []>} : vector<8x8xf32>, vector<8x8xf32>, vector<8x8xf32> -> vector<8x8xf32>
    %292 = math.tanh %291 : vector<8x8xf32>
    %cst_116 = arith.constant 3.000000e+01 : f32
    %293 = vector.broadcast %cst_116 : f32 to vector<8x8xf32>
    %294 = arith.mulf %293, %292 : vector<8x8xf32>
    %295 = vector.broadcast %287 : vector<1x8xf32> to vector<8x8xf32>
    %296 = arith.addf %294, %295 : vector<8x8xf32>
    %297 = math.exp %296 : vector<8x8xf32>
    %cst_117 = arith.constant dense<0.000000e+00> : vector<8xf32>
    %298 = vector.multi_reduction <add>, %297, %cst_117 [1] : vector<8x8xf32> to vector<8xf32>
    %299 = vector.shape_cast %298 : vector<8xf32> to vector<8x1xf32>
    %300 = tpu.reciprocal %299 {approx = true} : vector<8x1xf32> -> vector<8x1xf32>
    %301 = vector.broadcast %300 : vector<8x1xf32> to vector<8x8xf32>
    %302 = arith.mulf %297, %301 : vector<8x8xf32>
    %cst_118 = arith.constant dense<0.000000e+00> : vector<8x8xf32>
    %303 = tpu.matmul %302, %290, %cst_118 {dimension_numbers = #tpu.dot_dimension_numbers<[1], [0], [0], [1], [0, 0, 1, 1], [], []>} : vector<8x8xf32>, vector<8x8xf32>, vector<8x8xf32> -> vector<8x8xf32>
    %304 = vector.extract_strided_slice %284 {offsets = [0, 8], sizes = [8, 8], strides = [1, 1]} : vector<8x32xf32> to vector<8x8xf32>
    %305 = vector.extract_strided_slice %285 {offsets = [0, 8], sizes = [8, 8], strides = [1, 1]} : vector<8x32xf32> to vector<8x8xf32>
    %306 = vector.extract_strided_slice %286 {offsets = [0, 8], sizes = [8, 8], strides = [1, 1]} : vector<8x32xf32> to vector<8x8xf32>
    %cst_119 = arith.constant dense<0.000000e+00> : vector<8x8xf32>
    %307 = tpu.matmul %304, %305, %cst_119 {dimension_numbers = #tpu.dot_dimension_numbers<[1], [1], [0], [0], [0, 0, 1, 0], [], []>} : vector<8x8xf32>, vector<8x8xf32>, vector<8x8xf32> -> vector<8x8xf32>
    %308 = math.tanh %307 : vector<8x8xf32>
    %cst_120 = arith.constant 3.000000e+01 : f32
    %309 = vector.broadcast %cst_120 : f32 to vector<8x8xf32>
    %310 = arith.mulf %309, %308 : vector<8x8xf32>
    %311 = vector.broadcast %287 : vector<1x8xf32> to vector<8x8xf32>
    %312 = arith.addf %310, %311 : vector<8x8xf32>
    %313 = math.exp %312 : vector<8x8xf32>
    %cst_121 = arith.constant dense<0.000000e+00> : vector<8xf32>
    %314 = vector.multi_reduction <add>, %313, %cst_121 [1] : vector<8x8xf32> to vector<8xf32>
    %315 = vector.shape_cast %314 : vector<8xf32> to vector<8x1xf32>
    %316 = tpu.reciprocal %315 {approx = true} : vector<8x1xf32> -> vector<8x1xf32>
    %317 = vector.broadcast %316 : vector<8x1xf32> to vector<8x8xf32>
    %318 = arith.mulf %313, %317 : vector<8x8xf32>
    %cst_122 = arith.constant dense<0.000000e+00> : vector<8x8xf32>
    %319 = tpu.matmul %318, %306, %cst_122 {dimension_numbers = #tpu.dot_dimension_numbers<[1], [0], [0], [1], [0, 0, 1, 1], [], []>} : vector<8x8xf32>, vector<8x8xf32>, vector<8x8xf32> -> vector<8x8xf32>
    %320 = vector.extract_strided_slice %284 {offsets = [0, 16], sizes = [8, 8], strides = [1, 1]} : vector<8x32xf32> to vector<8x8xf32>
    %321 = vector.extract_strided_slice %285 {offsets = [0, 16], sizes = [8, 8], strides = [1, 1]} : vector<8x32xf32> to vector<8x8xf32>
    %322 = vector.extract_strided_slice %286 {offsets = [0, 16], sizes = [8, 8], strides = [1, 1]} : vector<8x32xf32> to vector<8x8xf32>
    %cst_123 = arith.constant dense<0.000000e+00> : vector<8x8xf32>
    %323 = tpu.matmul %320, %321, %cst_123 {dimension_numbers = #tpu.dot_dimension_numbers<[1], [1], [0], [0], [0, 0, 1, 0], [], []>} : vector<8x8xf32>, vector<8x8xf32>, vector<8x8xf32> -> vector<8x8xf32>
    %324 = math.tanh %323 : vector<8x8xf32>
    %cst_124 = arith.constant 3.000000e+01 : f32
    %325 = vector.broadcast %cst_124 : f32 to vector<8x8xf32>
    %326 = arith.mulf %325, %324 : vector<8x8xf32>
    %327 = vector.broadcast %287 : vector<1x8xf32> to vector<8x8xf32>
    %328 = arith.addf %326, %327 : vector<8x8xf32>
    %329 = math.exp %328 : vector<8x8xf32>
    %cst_125 = arith.constant dense<0.000000e+00> : vector<8xf32>
    %330 = vector.multi_reduction <add>, %329, %cst_125 [1] : vector<8x8xf32> to vector<8xf32>
    %331 = vector.shape_cast %330 : vector<8xf32> to vector<8x1xf32>
    %332 = tpu.reciprocal %331 {approx = true} : vector<8x1xf32> -> vector<8x1xf32>
    %333 = vector.broadcast %332 : vector<8x1xf32> to vector<8x8xf32>
    %334 = arith.mulf %329, %333 : vector<8x8xf32>
    %cst_126 = arith.constant dense<0.000000e+00> : vector<8x8xf32>
    %335 = tpu.matmul %334, %322, %cst_126 {dimension_numbers = #tpu.dot_dimension_numbers<[1], [0], [0], [1], [0, 0, 1, 1], [], []>} : vector<8x8xf32>, vector<8x8xf32>, vector<8x8xf32> -> vector<8x8xf32>
    %336 = vector.extract_strided_slice %284 {offsets = [0, 24], sizes = [8, 8], strides = [1, 1]} : vector<8x32xf32> to vector<8x8xf32>
    %337 = vector.extract_strided_slice %285 {offsets = [0, 24], sizes = [8, 8], strides = [1, 1]} : vector<8x32xf32> to vector<8x8xf32>
    %338 = vector.extract_strided_slice %286 {offsets = [0, 24], sizes = [8, 8], strides = [1, 1]} : vector<8x32xf32> to vector<8x8xf32>
    %cst_127 = arith.constant dense<0.000000e+00> : vector<8x8xf32>
    %339 = tpu.matmul %336, %337, %cst_127 {dimension_numbers = #tpu.dot_dimension_numbers<[1], [1], [0], [0], [0, 0, 1, 0], [], []>} : vector<8x8xf32>, vector<8x8xf32>, vector<8x8xf32> -> vector<8x8xf32>
    %340 = math.tanh %339 : vector<8x8xf32>
    %cst_128 = arith.constant 3.000000e+01 : f32
    %341 = vector.broadcast %cst_128 : f32 to vector<8x8xf32>
    %342 = arith.mulf %341, %340 : vector<8x8xf32>
    %343 = vector.broadcast %287 : vector<1x8xf32> to vector<8x8xf32>
    %344 = arith.addf %342, %343 : vector<8x8xf32>
    %345 = math.exp %344 : vector<8x8xf32>
    %cst_129 = arith.constant dense<0.000000e+00> : vector<8xf32>
    %346 = vector.multi_reduction <add>, %345, %cst_129 [1] : vector<8x8xf32> to vector<8xf32>
    %347 = vector.shape_cast %346 : vector<8xf32> to vector<8x1xf32>
    %348 = tpu.reciprocal %347 {approx = true} : vector<8x1xf32> -> vector<8x1xf32>
    %349 = vector.broadcast %348 : vector<8x1xf32> to vector<8x8xf32>
    %350 = arith.mulf %345, %349 : vector<8x8xf32>
    %cst_130 = arith.constant dense<0.000000e+00> : vector<8x8xf32>
    %351 = tpu.matmul %350, %338, %cst_130 {dimension_numbers = #tpu.dot_dimension_numbers<[1], [0], [0], [1], [0, 0, 1, 1], [], []>} : vector<8x8xf32>, vector<8x8xf32>, vector<8x8xf32> -> vector<8x8xf32>
    %352 = tpu.concatenate %303, %319, %335, %351 in 1 : vector<8x8xf32>, vector<8x8xf32>, vector<8x8xf32>, vector<8x8xf32> -> vector<8x32xf32>
    %cst_131 = arith.constant dense<0.000000e+00> : vector<8x32xf32>
    %353 = tpu.matmul %352, %283, %cst_131 {dimension_numbers = #tpu.dot_dimension_numbers<[1], [0], [0], [1], [0, 0, 1, 1], [], []>} : vector<8x32xf32>, vector<32x32xf32>, vector<8x32xf32> -> vector<8x32xf32>
    %354 = vector.extract_strided_slice %279 {offsets = [8, 0], sizes = [8, 32], strides = [1, 1]} : vector<16x32xf32> to vector<8x32xf32>
    %355 = vector.extract_strided_slice %280 {offsets = [8, 0], sizes = [8, 32], strides = [1, 1]} : vector<16x32xf32> to vector<8x32xf32>
    %356 = vector.extract_strided_slice %281 {offsets = [8, 0], sizes = [8, 32], strides = [1, 1]} : vector<16x32xf32> to vector<8x32xf32>
    %357 = vector.extract_strided_slice %14 {offsets = [1, 0], sizes = [1, 8], strides = [1, 1]} : vector<2x8xf32> to vector<1x8xf32>
    %358 = vector.extract_strided_slice %354 {offsets = [0, 0], sizes = [8, 8], strides = [1, 1]} : vector<8x32xf32> to vector<8x8xf32>
    %359 = vector.extract_strided_slice %355 {offsets = [0, 0], sizes = [8, 8], strides = [1, 1]} : vector<8x32xf32> to vector<8x8xf32>
    %360 = vector.extract_strided_slice %356 {offsets = [0, 0], sizes = [8, 8], strides = [1, 1]} : vector<8x32xf32> to vector<8x8xf32>
    %cst_132 = arith.constant dense<0.000000e+00> : vector<8x8xf32>
    %361 = tpu.matmul %358, %359, %cst_132 {dimension_numbers = #tpu.dot_dimension_numbers<[1], [1], [0], [0], [0, 0, 1, 0], [], []>} : vector<8x8xf32>, vector<8x8xf32>, vector<8x8xf32> -> vector<8x8xf32>
    %362 = math.tanh %361 : vector<8x8xf32>
    %cst_133 = arith.constant 3.000000e+01 : f32
    %363 = vector.broadcast %cst_133 : f32 to vector<8x8xf32>
    %364 = arith.mulf %363, %362 : vector<8x8xf32>
    %365 = vector.broadcast %357 : vector<1x8xf32> to vector<8x8xf32>
    %366 = arith.addf %364, %365 : vector<8x8xf32>
    %367 = math.exp %366 : vector<8x8xf32>
    %cst_134 = arith.constant dense<0.000000e+00> : vector<8xf32>
    %368 = vector.multi_reduction <add>, %367, %cst_134 [1] : vector<8x8xf32> to vector<8xf32>
    %369 = vector.shape_cast %368 : vector<8xf32> to vector<8x1xf32>
    %370 = tpu.reciprocal %369 {approx = true} : vector<8x1xf32> -> vector<8x1xf32>
    %371 = vector.broadcast %370 : vector<8x1xf32> to vector<8x8xf32>
    %372 = arith.mulf %367, %371 : vector<8x8xf32>
    %cst_135 = arith.constant dense<0.000000e+00> : vector<8x8xf32>
    %373 = tpu.matmul %372, %360, %cst_135 {dimension_numbers = #tpu.dot_dimension_numbers<[1], [0], [0], [1], [0, 0, 1, 1], [], []>} : vector<8x8xf32>, vector<8x8xf32>, vector<8x8xf32> -> vector<8x8xf32>
    %374 = vector.extract_strided_slice %354 {offsets = [0, 8], sizes = [8, 8], strides = [1, 1]} : vector<8x32xf32> to vector<8x8xf32>
    %375 = vector.extract_strided_slice %355 {offsets = [0, 8], sizes = [8, 8], strides = [1, 1]} : vector<8x32xf32> to vector<8x8xf32>
    %376 = vector.extract_strided_slice %356 {offsets = [0, 8], sizes = [8, 8], strides = [1, 1]} : vector<8x32xf32> to vector<8x8xf32>
    %cst_136 = arith.constant dense<0.000000e+00> : vector<8x8xf32>
    %377 = tpu.matmul %374, %375, %cst_136 {dimension_numbers = #tpu.dot_dimension_numbers<[1], [1], [0], [0], [0, 0, 1, 0], [], []>} : vector<8x8xf32>, vector<8x8xf32>, vector<8x8xf32> -> vector<8x8xf32>
    %378 = math.tanh %377 : vector<8x8xf32>
    %cst_137 = arith.constant 3.000000e+01 : f32
    %379 = vector.broadcast %cst_137 : f32 to vector<8x8xf32>
    %380 = arith.mulf %379, %378 : vector<8x8xf32>
    %381 = vector.broadcast %357 : vector<1x8xf32> to vector<8x8xf32>
    %382 = arith.addf %380, %381 : vector<8x8xf32>
    %383 = math.exp %382 : vector<8x8xf32>
    %cst_138 = arith.constant dense<0.000000e+00> : vector<8xf32>
    %384 = vector.multi_reduction <add>, %383, %cst_138 [1] : vector<8x8xf32> to vector<8xf32>
    %385 = vector.shape_cast %384 : vector<8xf32> to vector<8x1xf32>
    %386 = tpu.reciprocal %385 {approx = true} : vector<8x1xf32> -> vector<8x1xf32>
    %387 = vector.broadcast %386 : vector<8x1xf32> to vector<8x8xf32>
    %388 = arith.mulf %383, %387 : vector<8x8xf32>
    %cst_139 = arith.constant dense<0.000000e+00> : vector<8x8xf32>
    %389 = tpu.matmul %388, %376, %cst_139 {dimension_numbers = #tpu.dot_dimension_numbers<[1], [0], [0], [1], [0, 0, 1, 1], [], []>} : vector<8x8xf32>, vector<8x8xf32>, vector<8x8xf32> -> vector<8x8xf32>
    %390 = vector.extract_strided_slice %354 {offsets = [0, 16], sizes = [8, 8], strides = [1, 1]} : vector<8x32xf32> to vector<8x8xf32>
    %391 = vector.extract_strided_slice %355 {offsets = [0, 16], sizes = [8, 8], strides = [1, 1]} : vector<8x32xf32> to vector<8x8xf32>
    %392 = vector.extract_strided_slice %356 {offsets = [0, 16], sizes = [8, 8], strides = [1, 1]} : vector<8x32xf32> to vector<8x8xf32>
    %cst_140 = arith.constant dense<0.000000e+00> : vector<8x8xf32>
    %393 = tpu.matmul %390, %391, %cst_140 {dimension_numbers = #tpu.dot_dimension_numbers<[1], [1], [0], [0], [0, 0, 1, 0], [], []>} : vector<8x8xf32>, vector<8x8xf32>, vector<8x8xf32> -> vector<8x8xf32>
    %394 = math.tanh %393 : vector<8x8xf32>
    %cst_141 = arith.constant 3.000000e+01 : f32
    %395 = vector.broadcast %cst_141 : f32 to vector<8x8xf32>
    %396 = arith.mulf %395, %394 : vector<8x8xf32>
    %397 = vector.broadcast %357 : vector<1x8xf32> to vector<8x8xf32>
    %398 = arith.addf %396, %397 : vector<8x8xf32>
    %399 = math.exp %398 : vector<8x8xf32>
    %cst_142 = arith.constant dense<0.000000e+00> : vector<8xf32>
    %400 = vector.multi_reduction <add>, %399, %cst_142 [1] : vector<8x8xf32> to vector<8xf32>
    %401 = vector.shape_cast %400 : vector<8xf32> to vector<8x1xf32>
    %402 = tpu.reciprocal %401 {approx = true} : vector<8x1xf32> -> vector<8x1xf32>
    %403 = vector.broadcast %402 : vector<8x1xf32> to vector<8x8xf32>
    %404 = arith.mulf %399, %403 : vector<8x8xf32>
    %cst_143 = arith.constant dense<0.000000e+00> : vector<8x8xf32>
    %405 = tpu.matmul %404, %392, %cst_143 {dimension_numbers = #tpu.dot_dimension_numbers<[1], [0], [0], [1], [0, 0, 1, 1], [], []>} : vector<8x8xf32>, vector<8x8xf32>, vector<8x8xf32> -> vector<8x8xf32>
    %406 = vector.extract_strided_slice %354 {offsets = [0, 24], sizes = [8, 8], strides = [1, 1]} : vector<8x32xf32> to vector<8x8xf32>
    %407 = vector.extract_strided_slice %355 {offsets = [0, 24], sizes = [8, 8], strides = [1, 1]} : vector<8x32xf32> to vector<8x8xf32>
    %408 = vector.extract_strided_slice %356 {offsets = [0, 24], sizes = [8, 8], strides = [1, 1]} : vector<8x32xf32> to vector<8x8xf32>
    %cst_144 = arith.constant dense<0.000000e+00> : vector<8x8xf32>
    %409 = tpu.matmul %406, %407, %cst_144 {dimension_numbers = #tpu.dot_dimension_numbers<[1], [1], [0], [0], [0, 0, 1, 0], [], []>} : vector<8x8xf32>, vector<8x8xf32>, vector<8x8xf32> -> vector<8x8xf32>
    %410 = math.tanh %409 : vector<8x8xf32>
    %cst_145 = arith.constant 3.000000e+01 : f32
    %411 = vector.broadcast %cst_145 : f32 to vector<8x8xf32>
    %412 = arith.mulf %411, %410 : vector<8x8xf32>
    %413 = vector.broadcast %357 : vector<1x8xf32> to vector<8x8xf32>
    %414 = arith.addf %412, %413 : vector<8x8xf32>
    %415 = math.exp %414 : vector<8x8xf32>
    %cst_146 = arith.constant dense<0.000000e+00> : vector<8xf32>
    %416 = vector.multi_reduction <add>, %415, %cst_146 [1] : vector<8x8xf32> to vector<8xf32>
    %417 = vector.shape_cast %416 : vector<8xf32> to vector<8x1xf32>
    %418 = tpu.reciprocal %417 {approx = true} : vector<8x1xf32> -> vector<8x1xf32>
    %419 = vector.broadcast %418 : vector<8x1xf32> to vector<8x8xf32>
    %420 = arith.mulf %415, %419 : vector<8x8xf32>
    %cst_147 = arith.constant dense<0.000000e+00> : vector<8x8xf32>
    %421 = tpu.matmul %420, %408, %cst_147 {dimension_numbers = #tpu.dot_dimension_numbers<[1], [0], [0], [1], [0, 0, 1, 1], [], []>} : vector<8x8xf32>, vector<8x8xf32>, vector<8x8xf32> -> vector<8x8xf32>
    %422 = tpu.concatenate %373, %389, %405, %421 in 1 : vector<8x8xf32>, vector<8x8xf32>, vector<8x8xf32>, vector<8x8xf32> -> vector<8x32xf32>
    %cst_148 = arith.constant dense<0.000000e+00> : vector<8x32xf32>
    %423 = tpu.matmul %422, %283, %cst_148 {dimension_numbers = #tpu.dot_dimension_numbers<[1], [0], [0], [1], [0, 0, 1, 1], [], []>} : vector<8x32xf32>, vector<32x32xf32>, vector<8x32xf32> -> vector<8x32xf32>
    %424 = tpu.concatenate %353, %423 in 0 : vector<8x32xf32>, vector<8x32xf32> -> vector<16x32xf32>
    %425 = arith.addf %243, %424 : vector<16x32xf32>
    %c1_149 = arith.constant 1 : index
    %c0_150 = arith.constant 0 : index
    %c0_151 = arith.constant 0 : index
    %426 = vector.load %arg10[%c1_149, %c0_150, %c0_151] : memref<2x1x32xf32, #tpu.memory_space<vmem>>, vector<1x1x32xf32>
    %427 = vector.shape_cast %426 : vector<1x1x32xf32> to vector<1x32xf32>
    %428 = vector.broadcast %427 : vector<1x32xf32> to vector<16x32xf32>
    %429 = arith.addf %425, %428 : vector<16x32xf32>
    %c1_152 = arith.constant 1 : index
    %c0_153 = arith.constant 0 : index
    %c0_154 = arith.constant 0 : index
    %430 = vector.load %arg11[%c1_152, %c0_153, %c0_154] : memref<2x1x32xf32, #tpu.memory_space<vmem>>, vector<1x1x32xf32>
    %431 = vector.shape_cast %430 : vector<1x1x32xf32> to vector<1x32xf32>
    %c1_155 = arith.constant 1 : index
    %c0_156 = arith.constant 0 : index
    %c0_157 = arith.constant 0 : index
    %432 = vector.load %arg12[%c1_155, %c0_156, %c0_157] : memref<2x1x32xf32, #tpu.memory_space<vmem>>, vector<1x1x32xf32>
    %433 = vector.shape_cast %432 : vector<1x1x32xf32> to vector<1x32xf32>
    %cst_158 = arith.constant dense<0.000000e+00> : vector<16xf32>
    %434 = vector.multi_reduction <add>, %429, %cst_158 [1] : vector<16x32xf32> to vector<16xf32>
    %435 = vector.shape_cast %434 : vector<16xf32> to vector<16x1xf32>
    %cst_159 = arith.constant 3.200000e+01 : f32
    %436 = vector.broadcast %cst_159 : f32 to vector<16x1xf32>
    %437 = arith.divf %435, %436 : vector<16x1xf32>
    %438 = arith.mulf %429, %429 : vector<16x32xf32>
    %cst_160 = arith.constant dense<0.000000e+00> : vector<16xf32>
    %439 = vector.multi_reduction <add>, %438, %cst_160 [1] : vector<16x32xf32> to vector<16xf32>
    %440 = vector.shape_cast %439 : vector<16xf32> to vector<16x1xf32>
    %cst_161 = arith.constant 3.200000e+01 : f32
    %441 = vector.broadcast %cst_161 : f32 to vector<16x1xf32>
    %442 = arith.divf %440, %441 : vector<16x1xf32>
    %443 = arith.mulf %437, %437 : vector<16x1xf32>
    %444 = arith.subf %442, %443 : vector<16x1xf32>
    %445 = vector.broadcast %437 : vector<16x1xf32> to vector<16x32xf32>
    %446 = arith.subf %429, %445 : vector<16x32xf32>
    %cst_162 = arith.constant 9.99999997E-7 : f32
    %447 = vector.broadcast %cst_162 : f32 to vector<16x1xf32>
    %448 = arith.addf %444, %447 : vector<16x1xf32>
    %449 = math.rsqrt %448 : vector<16x1xf32>
    %450 = vector.broadcast %449 : vector<16x1xf32> to vector<16x32xf32>
    %451 = arith.mulf %446, %450 : vector<16x32xf32>
    %452 = vector.broadcast %431 : vector<1x32xf32> to vector<16x32xf32>
    %453 = arith.mulf %451, %452 : vector<16x32xf32>
    %454 = vector.broadcast %433 : vector<1x32xf32> to vector<16x32xf32>
    %455 = arith.addf %453, %454 : vector<16x32xf32>
    %c1_163 = arith.constant 1 : index
    %c0_164 = arith.constant 0 : index
    %c0_165 = arith.constant 0 : index
    %456 = vector.load %arg13[%c1_163, %c0_164, %c0_165] : memref<2x32x64xf32, #tpu.memory_space<vmem>>, vector<1x32x64xf32>
    %457 = vector.shape_cast %456 : vector<1x32x64xf32> to vector<32x64xf32>
    %cst_166 = arith.constant dense<0.000000e+00> : vector<16x64xf32>
    %458 = tpu.matmul %455, %457, %cst_166 {dimension_numbers = #tpu.dot_dimension_numbers<[1], [0], [0], [1], [0, 0, 1, 1], [], []>} : vector<16x32xf32>, vector<32x64xf32>, vector<16x64xf32> -> vector<16x64xf32>
    %c1_167 = arith.constant 1 : index
    %c0_168 = arith.constant 0 : index
    %c0_169 = arith.constant 0 : index
    %459 = vector.load %arg14[%c1_167, %c0_168, %c0_169] : memref<2x1x64xf32, #tpu.memory_space<vmem>>, vector<1x1x64xf32>
    %460 = vector.shape_cast %459 : vector<1x1x64xf32> to vector<1x64xf32>
    %461 = vector.broadcast %460 : vector<1x64xf32> to vector<16x64xf32>
    %462 = arith.addf %458, %461 : vector<16x64xf32>
    %cst_170 = arith.constant 0.000000e+00 : f32
    %463 = vector.broadcast %cst_170 : f32 to vector<16x64xf32>
    %464 = arith.maximumf %462, %463 : vector<16x64xf32>
    %c1_171 = arith.constant 1 : index
    %c0_172 = arith.constant 0 : index
    %c0_173 = arith.constant 0 : index
    %465 = vector.load %arg15[%c1_171, %c0_172, %c0_173] : memref<2x64x32xf32, #tpu.memory_space<vmem>>, vector<1x64x32xf32>
    %466 = vector.shape_cast %465 : vector<1x64x32xf32> to vector<64x32xf32>
    %cst_174 = arith.constant dense<0.000000e+00> : vector<16x32xf32>
    %467 = tpu.matmul %464, %466, %cst_174 {dimension_numbers = #tpu.dot_dimension_numbers<[1], [0], [0], [1], [0, 0, 1, 1], [], []>} : vector<16x64xf32>, vector<64x32xf32>, vector<16x32xf32> -> vector<16x32xf32>
    %c1_175 = arith.constant 1 : index
    %c0_176 = arith.constant 0 : index
    %c0_177 = arith.constant 0 : index
    %468 = vector.load %arg16[%c1_175, %c0_176, %c0_177] : memref<2x1x32xf32, #tpu.memory_space<vmem>>, vector<1x1x32xf32>
    %469 = vector.shape_cast %468 : vector<1x1x32xf32> to vector<1x32xf32>
    %470 = vector.broadcast %469 : vector<1x32xf32> to vector<16x32xf32>
    %471 = arith.addf %467, %470 : vector<16x32xf32>
    %472 = arith.addf %429, %471 : vector<16x32xf32>
    %c0_178 = arith.constant 0 : index
    %c0_179 = arith.constant 0 : index
    %473 = vector.load %arg17[%c0_178, %c0_179] : memref<1x32xf32, #tpu.memory_space<vmem>>, vector<1x32xf32>
    %c0_180 = arith.constant 0 : index
    %c0_181 = arith.constant 0 : index
    %474 = vector.load %arg18[%c0_180, %c0_181] : memref<1x32xf32, #tpu.memory_space<vmem>>, vector<1x32xf32>
    %cst_182 = arith.constant dense<0.000000e+00> : vector<16xf32>
    %475 = vector.multi_reduction <add>, %472, %cst_182 [1] : vector<16x32xf32> to vector<16xf32>
    %476 = vector.shape_cast %475 : vector<16xf32> to vector<16x1xf32>
    %cst_183 = arith.constant 3.200000e+01 : f32
    %477 = vector.broadcast %cst_183 : f32 to vector<16x1xf32>
    %478 = arith.divf %476, %477 : vector<16x1xf32>
    %479 = arith.mulf %472, %472 : vector<16x32xf32>
    %cst_184 = arith.constant dense<0.000000e+00> : vector<16xf32>
    %480 = vector.multi_reduction <add>, %479, %cst_184 [1] : vector<16x32xf32> to vector<16xf32>
    %481 = vector.shape_cast %480 : vector<16xf32> to vector<16x1xf32>
    %cst_185 = arith.constant 3.200000e+01 : f32
    %482 = vector.broadcast %cst_185 : f32 to vector<16x1xf32>
    %483 = arith.divf %481, %482 : vector<16x1xf32>
    %484 = arith.mulf %478, %478 : vector<16x1xf32>
    %485 = arith.subf %483, %484 : vector<16x1xf32>
    %486 = vector.broadcast %478 : vector<16x1xf32> to vector<16x32xf32>
    %487 = arith.subf %472, %486 : vector<16x32xf32>
    %cst_186 = arith.constant 9.99999997E-7 : f32
    %488 = vector.broadcast %cst_186 : f32 to vector<16x1xf32>
    %489 = arith.addf %485, %488 : vector<16x1xf32>
    %490 = math.rsqrt %489 : vector<16x1xf32>
    %491 = vector.broadcast %490 : vector<16x1xf32> to vector<16x32xf32>
    %492 = arith.mulf %487, %491 : vector<16x32xf32>
    %493 = vector.broadcast %473 : vector<1x32xf32> to vector<16x32xf32>
    %494 = arith.mulf %492, %493 : vector<16x32xf32>
    %495 = vector.broadcast %474 : vector<1x32xf32> to vector<16x32xf32>
    %496 = arith.addf %494, %495 : vector<16x32xf32>
    %c0_187 = arith.constant 0 : index
    %c0_188 = arith.constant 0 : index
    %497 = vector.load %arg19[%c0_187, %c0_188] : memref<16x32xf32, #tpu.memory_space<vmem>>, vector<16x32xf32>
    tpu.vector_store %arg19[%c0_187, %c0_188], %496 {strides = array<i32>} : memref<16x32xf32, #tpu.memory_space<vmem>>, vector<16x32xf32>,
    return
  }
  func.func @transform_0(%arg0: i32) -> (i32, i32) {
    %c0_i32 = arith.constant 0 : i32
    %c0_i32_0 = arith.constant 0 : i32
    %c0_i32_1 = arith.constant 0 : i32
    return %c0_i32, %c0_i32_0 : i32, i32
  }
  func.func @transform_1(%arg0: i32) -> (i32, i32) {
    %c0_i32 = arith.constant 0 : i32
    %c0_i32_0 = arith.constant 0 : i32
    %c0_i32_1 = arith.constant 0 : i32
    return %c0_i32, %c0_i32_0 : i32, i32
  }
  func.func @transform_2(%arg0: i32) -> (i32, i32) {
    %c0_i32 = arith.constant 0 : i32
    %c0_i32_0 = arith.constant 0 : i32
    %c0_i32_1 = arith.constant 0 : i32
    return %c0_i32, %c0_i32_0 : i32, i32
  }
  func.func @transform_3(%arg0: i32) -> (i32, i32) {
    %c0_i32 = arith.constant 0 : i32
    %c0_i32_0 = arith.constant 0 : i32
    %c0_i32_1 = arith.constant 0 : i32
    return %c0_i32, %c0_i32_0 : i32, i32
  }
  func.func @transform_4(%arg0: i32) -> (i32, i32, i32) {
    %c0_i32 = arith.constant 0 : i32
    %c0_i32_0 = arith.constant 0 : i32
    %c0_i32_1 = arith.constant 0 : i32
    %c0_i32_2 = arith.constant 0 : i32
    return %c0_i32, %c0_i32_0, %c0_i32_1 : i32, i32, i32
  }
  func.func @transform_5(%arg0: i32) -> (i32, i32, i32) {
    %c0_i32 = arith.constant 0 : i32
    %c0_i32_0 = arith.constant 0 : i32
    %c0_i32_1 = arith.constant 0 : i32
    %c0_i32_2 = arith.constant 0 : i32
    return %c0_i32, %c0_i32_0, %c0_i32_1 : i32, i32, i32
  }
  func.func @transform_6(%arg0: i32) -> (i32, i32, i32) {
    %c0_i32 = arith.constant 0 : i32
    %c0_i32_0 = arith.constant 0 : i32
    %c0_i32_1 = arith.constant 0 : i32
    %c0_i32_2 = arith.constant 0 : i32
    return %c0_i32, %c0_i32_0, %c0_i32_1 : i32, i32, i32
  }
  func.func @transform_7(%arg0: i32) -> (i32, i32, i32) {
    %c0_i32 = arith.constant 0 : i32
    %c0_i32_0 = arith.constant 0 : i32
    %c0_i32_1 = arith.constant 0 : i32
    %c0_i32_2 = arith.constant 0 : i32
    return %c0_i32, %c0_i32_0, %c0_i32_1 : i32, i32, i32
  }
  func.func @transform_8(%arg0: i32) -> (i32, i32, i32) {
    %c0_i32 = arith.constant 0 : i32
    %c0_i32_0 = arith.constant 0 : i32
    %c0_i32_1 = arith.constant 0 : i32
    %c0_i32_2 = arith.constant 0 : i32
    return %c0_i32, %c0_i32_0, %c0_i32_1 : i32, i32, i32
  }
  func.func @transform_9(%arg0: i32) -> (i32, i32, i32) {
    %c0_i32 = arith.constant 0 : i32
    %c0_i32_0 = arith.constant 0 : i32
    %c0_i32_1 = arith.constant 0 : i32
    %c0_i32_2 = arith.constant 0 : i32
    return %c0_i32, %c0_i32_0, %c0_i32_1 : i32, i32, i32
  }
  func.func @transform_10(%arg0: i32) -> (i32, i32, i32) {
    %c0_i32 = arith.constant 0 : i32
    %c0_i32_0 = arith.constant 0 : i32
    %c0_i32_1 = arith.constant 0 : i32
    %c0_i32_2 = arith.constant 0 : i32
    return %c0_i32, %c0_i32_0, %c0_i32_1 : i32, i32, i32
  }
  func.func @transform_11(%arg0: i32) -> (i32, i32, i32) {
    %c0_i32 = arith.constant 0 : i32
    %c0_i32_0 = arith.constant 0 : i32
    %c0_i32_1 = arith.constant 0 : i32
    %c0_i32_2 = arith.constant 0 : i32
    return %c0_i32, %c0_i32_0, %c0_i32_1 : i32, i32, i32
  }
  func.func @transform_12(%arg0: i32) -> (i32, i32, i32) {
    %c0_i32 = arith.constant 0 : i32
    %c0_i32_0 = arith.constant 0 : i32
    %c0_i32_1 = arith.constant 0 : i32
    %c0_i32_2 = arith.constant 0 : i32
    return %c0_i32, %c0_i32_0, %c0_i32_1 : i32, i32, i32
  }
  func.func @transform_13(%arg0: i32) -> (i32, i32, i32) {
    %c0_i32 = arith.constant 0 : i32
    %c0_i32_0 = arith.constant 0 : i32
    %c0_i32_1 = arith.constant 0 : i32
    %c0_i32_2 = arith.constant 0 : i32
    return %c0_i32, %c0_i32_0, %c0_i32_1 : i32, i32, i32
  }
  func.func @transform_14(%arg0: i32) -> (i32, i32, i32) {
    %c0_i32 = arith.constant 0 : i32
    %c0_i32_0 = arith.constant 0 : i32
    %c0_i32_1 = arith.constant 0 : i32
    %c0_i32_2 = arith.constant 0 : i32
    return %c0_i32, %c0_i32_0, %c0_i32_1 : i32, i32, i32
  }
  func.func @transform_15(%arg0: i32) -> (i32, i32, i32) {
    %c0_i32 = arith.constant 0 : i32
    %c0_i32_0 = arith.constant 0 : i32
    %c0_i32_1 = arith.constant 0 : i32
    %c0_i32_2 = arith.constant 0 : i32
    return %c0_i32, %c0_i32_0, %c0_i32_1 : i32, i32, i32
  }
  func.func @transform_16(%arg0: i32) -> (i32, i32) {
    %c0_i32 = arith.constant 0 : i32
    %c0_i32_0 = arith.constant 0 : i32
    %c0_i32_1 = arith.constant 0 : i32
    return %c0_i32, %c0_i32_0 : i32, i32
  }
  func.func @transform_17(%arg0: i32) -> (i32, i32) {
    %c0_i32 = arith.constant 0 : i32
    %c0_i32_0 = arith.constant 0 : i32
    %c0_i32_1 = arith.constant 0 : i32
    return %c0_i32, %c0_i32_0 : i32, i32
  }
  func.func @transform_18(%arg0: i32) -> (i32, i32) {
    %c0_i32 = arith.constant 0 : i32
    %c0_i32_0 = arith.constant 0 : i32
    %c0_i32_1 = arith.constant 0 : i32
    return %c0_i32, %c0_i32_0 : i32, i32
  }
}

</mosaic_0001>

<llo_original>
// kernel: tpu_custom_call.1
$region0: #{tpu_custom_call.1}
  #allocation0 [shape = 'u32[]', space=smem, size = 0x4, offset = 0x4, fixed_abs, tag = 'smem constant byte address 0x4 - core index']
  #allocation1 [shape = 'u32[72,128]{1,0:T(1,128)}', space=vmem, size = 0x9000, scoped, tag = 'internal scratch']
  %s0 = inlined_call_operand.vmem [shape: s32[16,1], index: 0, kind: input, shape index: {}]
  %s1 = inlined_call_operand.vmem [shape: f32[2,8], index: 1, kind: input, shape index: {}]
  %s2 = inlined_call_operand.vmem [shape: f32[64,32], index: 2, kind: input, shape index: {}]
  %s3 = inlined_call_operand.vmem [shape: f32[16,32], index: 3, kind: input, shape index: {}]
  %s4 = inlined_call_operand.vmem [shape: f32[2,1,32], index: 4, kind: input, shape index: {}]
  %s5 = inlined_call_operand.vmem [shape: f32[2,1,32], index: 5, kind: input, shape index: {}]
  %s6 = inlined_call_operand.vmem [shape: f32[2,32,96], index: 6, kind: input, shape index: {}]
  %s7 = inlined_call_operand.vmem [shape: f32[2,1,96], index: 7, kind: input, shape index: {}]
  %s8 = inlined_call_operand.vmem [shape: f32[2,32,32], index: 8, kind: input, shape index: {}]
  %s9 = inlined_call_operand.vmem [shape: f32[2,1,32], index: 9, kind: input, shape index: {}]
  %s10 = inlined_call_operand.vmem [shape: f32[2,1,32], index: 10, kind: input, shape index: {}]
  %s11 = inlined_call_operand.vmem [shape: f32[2,1,32], index: 11, kind: input, shape index: {}]
  %s12 = inlined_call_operand.vmem [shape: f32[2,32,64], index: 12, kind: input, shape index: {}]
  %s13 = inlined_call_operand.vmem [shape: f32[2,1,64], index: 13, kind: input, shape index: {}]
  %s14 = inlined_call_operand.vmem [shape: f32[2,64,32], index: 14, kind: input, shape index: {}]
  %s15 = inlined_call_operand.vmem [shape: f32[2,1,32], index: 15, kind: input, shape index: {}]
  %s16 = inlined_call_operand.vmem [shape: f32[1,32], index: 16, kind: input, shape index: {}]
  %s17 = inlined_call_operand.vmem [shape: f32[1,32], index: 17, kind: input, shape index: {}]
  %s18 = inlined_call_operand.hbm [shape: f32[16,32], index: 18, kind: output, shape index: {}]
  %s19 = sld [smem:[#allocation0]]
  $region82: #{tpu_custom_call.1} parent=0
    _
  %s21 = ssub.s32 1, %s19
  %s22 = scalar_select 0, %s21, %s19
  $region1: #{tpu_custom_call.1} parent=0
    #allocation2 [shape = 'u8[8192]{0}', space=vmem, size = 0x2000, scoped, tag = 'output window, operand 0, single buffered']
    #allocation3 [shape = 's32[1]{0}', space=sflag, size = 0x4, scoped, tag = 'scoped memory for tpu_custom_call.1']
    %23 = vsyncpa [#allocation3], 0
    // Predicated region
    $region2: #{tpu_custom_call.1} parent=1 // pred_check
      _
    $region3: #{tpu_custom_call.1} parent=1 // pred_check_branch
      %25 = sbr.rel (0) target = $region5
    $region4: #{tpu_custom_call.1} parent=1 // pred_region
      _
    $region5: #{tpu_custom_call.1} parent=1 // pred_fallthru
      _
    // Predicated region
    $region6: #{tpu_custom_call.1} parent=1 // pred_check
      _
    $region7: #{tpu_custom_call.1} parent=1 // pred_check_branch
      %27 = sbr.rel (0) target = $region9
    $region8: #{tpu_custom_call.1} parent=1 // pred_region
      _
    $region9: #{tpu_custom_call.1} parent=1 // pred_fallthru
      _
    // Predicated region
    $region10: #{tpu_custom_call.1} parent=1 // pred_check
      _
    $region11: #{tpu_custom_call.1} parent=1 // pred_check_branch
      %29 = sbr.rel (0) target = $region13
    $region12: #{tpu_custom_call.1} parent=1 // pred_region
      _
    $region13: #{tpu_custom_call.1} parent=1 // pred_fallthru
      _
    // Predicated region
    $region14: #{tpu_custom_call.1} parent=1 // pred_check
      _
    $region15: #{tpu_custom_call.1} parent=1 // pred_check_branch
      %31 = sbr.rel (0) target = $region17
    $region16: #{tpu_custom_call.1} parent=1 // pred_region
      _
    $region17: #{tpu_custom_call.1} parent=1 // pred_fallthru
      _
    // Predicated region
    $region18: #{tpu_custom_call.1} parent=1 // pred_check
      _
    $region19: #{tpu_custom_call.1} parent=1 // pred_check_branch
      %33 = sbr.rel (0) target = $region21
    $region20: #{tpu_custom_call.1} parent=1 // pred_region
      _
    $region21: #{tpu_custom_call.1} parent=1 // pred_fallthru
      _
    // Predicated region
    $region22: #{tpu_custom_call.1} parent=1 // pred_check
      _
    $region23: #{tpu_custom_call.1} parent=1 // pred_check_branch
      %35 = sbr.rel (0) target = $region25
    $region24: #{tpu_custom_call.1} parent=1 // pred_region
      _
    $region25: #{tpu_custom_call.1} parent=1 // pred_fallthru
      _
    // Predicated region
    $region26: #{tpu_custom_call.1} parent=1 // pred_check
      _
    $region27: #{tpu_custom_call.1} parent=1 // pred_check_branch
      %37 = sbr.rel (0) target = $region29
    $region28: #{tpu_custom_call.1} parent=1 // pred_region
      _
    $region29: #{tpu_custom_call.1} parent=1 // pred_fallthru
      _
    // Predicated region
    $region30: #{tpu_custom_call.1} parent=1 // pred_check
      _
    $region31: #{tpu_custom_call.1} parent=1 // pred_check_branch
      %39 = sbr.rel (0) target = $region33
    $region32: #{tpu_custom_call.1} parent=1 // pred_region
      _
    $region33: #{tpu_custom_call.1} parent=1 // pred_fallthru
      _
    // Predicated region
    $region34: #{tpu_custom_call.1} parent=1 // pred_check
      _
    $region35: #{tpu_custom_call.1} parent=1 // pred_check_branch
      %41 = sbr.rel (0) target = $region37
    $region36: #{tpu_custom_call.1} parent=1 // pred_region
      _
    $region37: #{tpu_custom_call.1} parent=1 // pred_fallthru
      _
    // Predicated region
    $region38: #{tpu_custom_call.1} parent=1 // pred_check
      _
    $region39: #{tpu_custom_call.1} parent=1 // pred_check_branch
      %43 = sbr.rel (0) target = $region41
    $region40: #{tpu_custom_call.1} parent=1 // pred_region
      _
    $region41: #{tpu_custom_call.1} parent=1 // pred_fallthru
      _
    // Predicated region
    $region42: #{tpu_custom_call.1} parent=1 // pred_check
      _
    $region43: #{tpu_custom_call.1} parent=1 // pred_check_branch
      %45 = sbr.rel (0) target = $region45
    $region44: #{tpu_custom_call.1} parent=1 // pred_region
      _
    $region45: #{tpu_custom_call.1} parent=1 // pred_fallthru
      _
    // Predicated region
    $region46: #{tpu_custom_call.1} parent=1 // pred_check
      _
    $region47: #{tpu_custom_call.1} parent=1 // pred_check_branch
      %47 = sbr.rel (0) target = $region49
    $region48: #{tpu_custom_call.1} parent=1 // pred_region
      _
    $region49: #{tpu_custom_call.1} parent=1 // pred_fallthru
      _
    // Predicated region
    $region50: #{tpu_custom_call.1} parent=1 // pred_check
      _
    $region51: #{tpu_custom_call.1} parent=1 // pred_check_branch
      %49 = sbr.rel (0) target = $region53
    $region52: #{tpu_custom_call.1} parent=1 // pred_region
      _
    $region53: #{tpu_custom_call.1} parent=1 // pred_fallthru
      _
    // Predicated region
    $region54: #{tpu_custom_call.1} parent=1 // pred_check
      _
    $region55: #{tpu_custom_call.1} parent=1 // pred_check_branch
      %51 = sbr.rel (0) target = $region57
    $region56: #{tpu_custom_call.1} parent=1 // pred_region
      _
    $region57: #{tpu_custom_call.1} parent=1 // pred_fallthru
      _
    // Predicated region
    $region58: #{tpu_custom_call.1} parent=1 // pred_check
      _
    $region59: #{tpu_custom_call.1} parent=1 // pred_check_branch
      %53 = sbr.rel (0) target = $region61
    $region60: #{tpu_custom_call.1} parent=1 // pred_region
      _
    $region61: #{tpu_custom_call.1} parent=1 // pred_fallthru
      _
    // Predicated region
    $region62: #{tpu_custom_call.1} parent=1 // pred_check
      _
    $region63: #{tpu_custom_call.1} parent=1 // pred_check_branch
      %55 = sbr.rel (0) target = $region65
    $region64: #{tpu_custom_call.1} parent=1 // pred_region
      _
    $region65: #{tpu_custom_call.1} parent=1 // pred_fallthru
      _
    // Predicated region
    $region66: #{tpu_custom_call.1} parent=1 // pred_check
      _
    $region67: #{tpu_custom_call.1} parent=1 // pred_check_branch
      %57 = sbr.rel (0) target = $region69
    $region68: #{tpu_custom_call.1} parent=1 // pred_region
      _
    $region69: #{tpu_custom_call.1} parent=1 // pred_fallthru
      _
    // Predicated region
    $region70: #{tpu_custom_call.1} parent=1 // pred_check
      _
    $region71: #{tpu_custom_call.1} parent=1 // pred_check_branch
      %59 = sbr.rel (0) target = $region73
    $region72: #{tpu_custom_call.1} parent=1 // pred_region
      _
    $region73: #{tpu_custom_call.1} parent=1 // pred_fallthru
      _
    %v60 = vld [vmem:[%s0] sm:$0xff]
    %v61 = vld [vmem:[%s0 + $0x8] sm:$0xff]
    %v62 = vlaneseq
    %v63 = vand.u32 %v62, 127
    %64 = vset.pattern.permute.xlu0 0
    %65 = vperm.xlu0 %64, %v60
    %v66 = vpop.permute.xlu0 %65
    %67 = vset.pattern.permute.xlu0 0
    %68 = vperm.xlu0 %67, %v61
    %v69 = vpop.permute.xlu0 %68
    %vm70 = vcmp.eq.s32.totalorder %v63, %v66
    %vm71 = vcmp.eq.s32.totalorder %v63, %v69
    %v72 = vsel %vm70, 1, 0
    %v73 = vsel %vm71, 1, 0
    %v74 = vcvt.s32.f32 %v72
    %v75 = vcvt.s32.f32 %v73
    %v76 = vld [vmem:[%s2] sm:$0xff]
    %v77 = vld [vmem:[%s2 + $0x8] sm:$0xff]
    %v78 = vld [vmem:[%s2 + $0x10] sm:$0xff]
    %v79 = vld [vmem:[%s2 + $0x18] sm:$0xff]
    %v80 = vld [vmem:[%s2 + $0x20] sm:$0xff]
    %v81 = vld [vmem:[%s2 + $0x28] sm:$0xff]
    %v82 = vld [vmem:[%s2 + $0x30] sm:$0xff]
    %v83 = vld [vmem:[%s2 + $0x38] sm:$0xff]
    %vm84 = vcmask 523264
    %v86 = vsel %vm84, %v74, 0
    %v89 = vsel %vm84, %v75, 0
    %91 = vmatpush.msra.mxu0 0.0
    %92 = vmatpush.msra.mxu0 0.0
    %93 = vmatpush.msra.mxu0 0.0
    %94 = vmatpush.msra.mxu0 0.0
    %95 = vmatpush.msra.mxu0 0.0
    %96 = vmatpush.msra.mxu0 0.0
    %97 = vmatpush.msra.mxu0 0.0
    %98 = vmatpush.msra.mxu0 0.0
    %99 = vmatpush.msra.mxu0 %v83
    %100 = vmatpush.msra.mxu0 %v82
    %101 = vmatpush.msra.mxu0 %v81
    %102 = vmatpush.msra.mxu0 %v80
    %103 = vmatpush.msra.mxu0 %v79
    %104 = vmatpush.msra.mxu0 %v78
    %105 = vmatpush.msra.mxu0 %v77
    %106 = vmatpush.msra.mxu0 %v76
    %107 = vmatmul.f32.gmra.mxu0 %v86
    %v108 = vpop.f32.mrf.mxu0
    %v109 = vadd.f32 0.0, %v108
    %110 = vmatmul.f32.gmra.mxu0 %v89
    %v111 = vpop.f32.mrf.mxu0
    %v112 = vadd.f32 0.0, %v111
    %113 = vdwg.mxu0
    %v114 = vmul.f32 %v109, 5.656854
    %v115 = vmul.f32 %v112, 5.656854
    %v116 = vld [vmem:[%s3] sm:$0xff]
    %v117 = vld [vmem:[%s3 + $0x8] sm:$0xff]
    %v118 = vadd.f32 %v114, %v116
    %v119 = vadd.f32 %v115, %v117
    %v120 = vld [vmem:[%s1] sm:$0x3]
    %v121 = vmul.f32 %v120, -1e+30
    %v122 = vld [vmem:[%s4] sm:$0x1]
    %v123 = vld [vmem:[%s5] sm:$0x1]
    %vm124 = vcmask 261120
    %v125 = vsel %vm124, %v118, 0.0
    %126 = vadd.xlane.f32.xlu0 %v125
    %v127 = vpop.xlane.xlu0 %126
    %v128 = vsel %vm124, %v119, 0.0
    %129 = vadd.xlane.f32.xlu0 %v128
    %v130 = vpop.xlane.xlu0 %129
    %v131 = vrcp.pop 32.0
    %v132 = vmul.f32 32.0, %v131
    %v133 = vsub.f32 1.0, %v132
    %v134 = vmul.f32 %v131, %v133
    %v135 = vadd.f32 %v131, %v134
    %vm136 = vweird.f32 %v131
    %v137 = vsel %vm136, %v131, %v135
    %v138 = vmul.f32 %v127, %v137
    %v139 = vmul.f32 %v130, %v137
    %v140 = vmul.f32 %v118, %v118
    %v141 = vmul.f32 %v119, %v119
    %v142 = vsel %vm124, %v140, 0.0
    %143 = vadd.xlane.f32.xlu0 %v142
    %v144 = vpop.xlane.xlu0 %143
    %v145 = vsel %vm124, %v141, 0.0
    %146 = vadd.xlane.f32.xlu0 %v145
    %v147 = vpop.xlane.xlu0 %146
    %v148 = vmul.f32 %v144, %v137
    %v149 = vmul.f32 %v147, %v137
    %v150 = vmul.f32 %v138, %v138
    %v151 = vmul.f32 %v139, %v139
    %v152 = vsub.f32 %v148, %v150
    %v153 = vsub.f32 %v149, %v151
    %v154 = vsub.f32 %v118, %v138
    %v155 = vsub.f32 %v119, %v139
    %v156 = vadd.f32 %v152, 1e-06
    %v157 = vadd.f32 %v153, 1e-06
    %v158 = vrsqrt.pop %v156
    %v159 = vmul.f32 %v158, %v156
    %v160 = vmul.f32 %v159, %v158
    %v161 = vmul.f32 0.5, %v160
    %v162 = vsub.f32 1.5, %v161
    %v163 = vmul.f32 %v158, %v162
    %vm164 = vweird.f32 %v156
    %vm165 = vweird.f32 %v158
    %vm166 = vmor %vm164, %vm165
    %v167 = vsel %vm166, %v158, %v163
    %v168 = vrsqrt.pop %v157
    %v169 = vmul.f32 %v168, %v157
    %v170 = vmul.f32 %v169, %v168
    %v171 = vmul.f32 0.5, %v170
    %v172 = vsub.f32 1.5, %v171
    %v173 = vmul.f32 %v168, %v172
    %vm174 = vweird.f32 %v157
    %vm175 = vweird.f32 %v168
    %vm176 = vmor %vm174, %vm175
    %v177 = vsel %vm176, %v168, %v173
    %v178 = vmul.f32 %v154, %v167
    %v179 = vmul.f32 %v155, %v177
    %v181 = vperm.slane %v122, 0
    %v183 = vmul.f32 %v178, %v181
    %v184 = vmul.f32 %v179, %v181
    %v186 = vperm.slane %v123, 0
    %v188 = vadd.f32 %v183, %v186
    %v189 = vadd.f32 %v184, %v186
    %v190 = vld [vmem:[%s6] sm:$0xff]
    %v191 = vld [vmem:[%s6 + $0x8] sm:$0xff]
    %v192 = vld [vmem:[%s6 + $0x10] sm:$0xff]
    %v193 = vld [vmem:[%s6 + $0x18] sm:$0xff]
    %v194 = vld [vmem:[%s7] sm:$0x1]
    %v196 = vperm.slane %v194, 0
    %v199 = vsel %vm124, %v188, 0
    %v202 = vsel %vm124, %v189, 0
    %204 = vmatpush.msra.mxu0 0.0
    %205 = vmatpush.msra.mxu0 0.0
    %206 = vmatpush.msra.mxu0 0.0
    %207 = vmatpush.msra.mxu0 0.0
    %208 = vmatpush.msra.mxu0 0.0
    %209 = vmatpush.msra.mxu0 0.0
    %210 = vmatpush.msra.mxu0 0.0
    %211 = vmatpush.msra.mxu0 0.0
    %212 = vmatpush.msra.mxu0 0.0
    %213 = vmatpush.msra.mxu0 0.0
    %214 = vmatpush.msra.mxu0 0.0
    %215 = vmatpush.msra.mxu0 0.0
    %216 = vmatpush.msra.mxu0 %v193
    %217 = vmatpush.msra.mxu0 %v192
    %218 = vmatpush.msra.mxu0 %v191
    %219 = vmatpush.msra.mxu0 %v190
    %220 = vmatmul.f32.gmra.mxu0 %v199
    %v221 = vpop.f32.mrf.mxu0
    %v222 = vadd.f32 %v196, %v221
    %223 = vmatmul.f32.gmra.mxu0 %v202
    %v224 = vpop.f32.mrf.mxu0
    %v225 = vadd.f32 %v196, %v224
    %226 = vdwg.mxu0
    %v227 = vmul.f32 %v222, 0.011785113
    %v228 = vmul.f32 %v225, 0.011785113
    %v229 = vld [vmem:[%s8] sm:$0xff]
    %v230 = vld [vmem:[%s8 + $0x8] sm:$0xff]
    %v231 = vld [vmem:[%s8 + $0x10] sm:$0xff]
    %v232 = vld [vmem:[%s8 + $0x18] sm:$0xff]
    %234 = vrot.lane.b32.xlu0 %v222, 96
    %v235 = vpop.permute.xlu0 %234
    %vm236 = vcmask 64512
    %v238 = vsel %vm236, %v227, 0
    %v240 = vsel %vm236, %v235, 0
    %242 = vmatpush.xpose.msra.mxu0 0.0
    %243 = vmatpush.xpose.msra.mxu0 0.0
    %244 = vmatpush.xpose.msra.mxu0 0.0
    %245 = vmatpush.xpose.msra.mxu0 0.0
    %246 = vmatpush.xpose.msra.mxu0 0.0
    %247 = vmatpush.xpose.msra.mxu0 0.0
    %248 = vmatpush.xpose.msra.mxu0 0.0
    %249 = vmatpush.xpose.msra.mxu0 0.0
    %250 = vmatpush.xpose.msra.mxu0 0.0
    %251 = vmatpush.xpose.msra.mxu0 0.0
    %252 = vmatpush.xpose.msra.mxu0 0.0
    %253 = vmatpush.xpose.msra.mxu0 0.0
    %254 = vmatpush.xpose.msra.mxu0 0.0
    %255 = vmatpush.xpose.msra.mxu0 0.0
    %256 = vmatpush.xpose.msra.mxu0 0.0
    %257 = vmatpush.xpose.msra.mxu0 %v240
    %258 = vmatmul.f32.gmra.mxu0 %v238
    %v259 = vpop.f32.mrf.mxu0
    %v260 = vadd.f32 0.0, %v259
    %261 = vdwg.mxu0
    %v262 = vtanh.pop %v260
    %v263 = vmul.f32 %v262, 30.0
    %v264 = vperm.slane %v121, 0
    %v265 = vadd.f32 %v263, %v264
    %v266 = vmul.f32 %v265, 1.442695
    %v267 = vpow.pop %v266
    %v268 = vsel %vm236, %v267, 0.0
    %269 = vadd.xlane.f32.xlu0 %v268
    %v270 = vpop.xlane.xlu0 %269
    %v271 = vrcp.pop %v270
    %v272 = vmul.f32 %v267, %v271
    %273 = vrot.lane.b32.xlu0 %v222, 64
    %v274 = vpop.permute.xlu0 %273
    %v277 = vsel %vm236, %v272, 0
    %279 = vmatpush.msra.mxu0 0.0
    %280 = vmatpush.msra.mxu0 0.0
    %281 = vmatpush.msra.mxu0 0.0
    %282 = vmatpush.msra.mxu0 0.0
    %283 = vmatpush.msra.mxu0 0.0
    %284 = vmatpush.msra.mxu0 0.0
    %285 = vmatpush.msra.mxu0 0.0
    %286 = vmatpush.msra.mxu0 0.0
    %287 = vmatpush.msra.mxu0 0.0
    %288 = vmatpush.msra.mxu0 0.0
    %289 = vmatpush.msra.mxu0 0.0
    %290 = vmatpush.msra.mxu0 0.0
    %291 = vmatpush.msra.mxu0 0.0
    %292 = vmatpush.msra.mxu0 0.0
    %293 = vmatpush.msra.mxu0 0.0
    %294 = vmatpush.msra.mxu0 %v274
    %295 = vmatmul.f32.gmra.mxu0 %v277
    %v296 = vpop.f32.mrf.mxu0
    %v297 = vadd.f32 0.0, %v296
    %298 = vdwg.mxu0
    %299 = vrot.lane.b32.xlu0 %v227, 120
    %v300 = vpop.permute.xlu0 %299
    %301 = vrot.lane.b32.xlu0 %v222, 88
    %v302 = vpop.permute.xlu0 %301
    %v303 = vsel %vm236, %v300, 0
    %v305 = vsel %vm236, %v302, 0
    %307 = vmatpush.xpose.msra.mxu0 0.0
    %308 = vmatpush.xpose.msra.mxu0 0.0
    %309 = vmatpush.xpose.msra.mxu0 0.0
    %310 = vmatpush.xpose.msra.mxu0 0.0
    %311 = vmatpush.xpose.msra.mxu0 0.0
    %312 = vmatpush.xpose.msra.mxu0 0.0
    %313 = vmatpush.xpose.msra.mxu0 0.0
    %314 = vmatpush.xpose.msra.mxu0 0.0
    %315 = vmatpush.xpose.msra.mxu0 0.0
    %316 = vmatpush.xpose.msra.mxu0 0.0
    %317 = vmatpush.xpose.msra.mxu0 0.0
    %318 = vmatpush.xpose.msra.mxu0 0.0
    %319 = vmatpush.xpose.msra.mxu0 0.0
    %320 = vmatpush.xpose.msra.mxu0 0.0
    %321 = vmatpush.xpose.msra.mxu0 0.0
    %322 = vmatpush.xpose.msra.mxu0 %v305
    %323 = vmatmul.f32.gmra.mxu0 %v303
    %v324 = vpop.f32.mrf.mxu0
    %v325 = vadd.f32 0.0, %v324
    %326 = vdwg.mxu0
    %v327 = vtanh.pop %v325
    %v328 = vmul.f32 %v327, 30.0
    %v329 = vadd.f32 %v328, %v264
    %v330 = vmul.f32 %v329, 1.442695
    %v331 = vpow.pop %v330
    %v332 = vsel %vm236, %v331, 0.0
    %333 = vadd.xlane.f32.xlu0 %v332
    %v334 = vpop.xlane.xlu0 %333
    %v335 = vrcp.pop %v334
    %v336 = vmul.f32 %v331, %v335
    %337 = vrot.lane.b32.xlu0 %v222, 56
    %v338 = vpop.permute.xlu0 %337
    %v341 = vsel %vm236, %v336, 0
    %343 = vmatpush.msra.mxu0 0.0
    %344 = vmatpush.msra.mxu0 0.0
    %345 = vmatpush.msra.mxu0 0.0
    %346 = vmatpush.msra.mxu0 0.0
    %347 = vmatpush.msra.mxu0 0.0
    %348 = vmatpush.msra.mxu0 0.0
    %349 = vmatpush.msra.mxu0 0.0
    %350 = vmatpush.msra.mxu0 0.0
    %351 = vmatpush.msra.mxu0 0.0
    %352 = vmatpush.msra.mxu0 0.0
    %353 = vmatpush.msra.mxu0 0.0
    %354 = vmatpush.msra.mxu0 0.0
    %355 = vmatpush.msra.mxu0 0.0
    %356 = vmatpush.msra.mxu0 0.0
    %357 = vmatpush.msra.mxu0 0.0
    %358 = vmatpush.msra.mxu0 %v338
    %359 = vmatmul.f32.gmra.mxu0 %v341
    %v360 = vpop.f32.mrf.mxu0
    %v361 = vadd.f32 0.0, %v360
    %362 = vdwg.mxu0
    %363 = vrot.lane.b32.xlu0 %v227, 112
    %v364 = vpop.permute.xlu0 %363
    %365 = vrot.lane.b32.xlu0 %v222, 80
    %v366 = vpop.permute.xlu0 %365
    %v367 = vsel %vm236, %v364, 0
    %v369 = vsel %vm236, %v366, 0
    %371 = vmatpush.xpose.msra.mxu0 0.0
    %372 = vmatpush.xpose.msra.mxu0 0.0
    %373 = vmatpush.xpose.msra.mxu0 0.0
    %374 = vmatpush.xpose.msra.mxu0 0.0
    %375 = vmatpush.xpose.msra.mxu0 0.0
    %376 = vmatpush.xpose.msra.mxu0 0.0
    %377 = vmatpush.xpose.msra.mxu0 0.0
    %378 = vmatpush.xpose.msra.mxu0 0.0
    %379 = vmatpush.xpose.msra.mxu0 0.0
    %380 = vmatpush.xpose.msra.mxu0 0.0
    %381 = vmatpush.xpose.msra.mxu0 0.0
    %382 = vmatpush.xpose.msra.mxu0 0.0
    %383 = vmatpush.xpose.msra.mxu0 0.0
    %384 = vmatpush.xpose.msra.mxu0 0.0
    %385 = vmatpush.xpose.msra.mxu0 0.0
    %386 = vmatpush.xpose.msra.mxu0 %v369
    %387 = vmatmul.f32.gmra.mxu0 %v367
    %v388 = vpop.f32.mrf.mxu0
    %v389 = vadd.f32 0.0, %v388
    %390 = vdwg.mxu0
    %v391 = vtanh.pop %v389
    %v392 = vmul.f32 %v391, 30.0
    %v393 = vadd.f32 %v392, %v264
    %v394 = vmul.f32 %v393, 1.442695
    %v395 = vpow.pop %v394
    %v396 = vsel %vm236, %v395, 0.0
    %397 = vadd.xlane.f32.xlu0 %v396
    %v398 = vpop.xlane.xlu0 %397
    %v399 = vrcp.pop %v398
    %v400 = vmul.f32 %v395, %v399
    %401 = vrot.lane.b32.xlu0 %v222, 48
    %v402 = vpop.permute.xlu0 %401
    %v405 = vsel %vm236, %v400, 0
    %407 = vmatpush.msra.mxu0 0.0
    %408 = vmatpush.msra.mxu0 0.0
    %409 = vmatpush.msra.mxu0 0.0
    %410 = vmatpush.msra.mxu0 0.0
    %411 = vmatpush.msra.mxu0 0.0
    %412 = vmatpush.msra.mxu0 0.0
    %413 = vmatpush.msra.mxu0 0.0
    %414 = vmatpush.msra.mxu0 0.0
    %415 = vmatpush.msra.mxu0 0.0
    %416 = vmatpush.msra.mxu0 0.0
    %417 = vmatpush.msra.mxu0 0.0
    %418 = vmatpush.msra.mxu0 0.0
    %419 = vmatpush.msra.mxu0 0.0
    %420 = vmatpush.msra.mxu0 0.0
    %421 = vmatpush.msra.mxu0 0.0
    %422 = vmatpush.msra.mxu0 %v402
    %423 = vmatmul.f32.gmra.mxu0 %v405
    %v424 = vpop.f32.mrf.mxu0
    %v425 = vadd.f32 0.0, %v424
    %426 = vdwg.mxu0
    %427 = vrot.lane.b32.xlu0 %v227, 104
    %v428 = vpop.permute.xlu0 %427
    %429 = vrot.lane.b32.xlu0 %v222, 72
    %v430 = vpop.permute.xlu0 %429
    %v431 = vsel %vm236, %v428, 0
    %v433 = vsel %vm236, %v430, 0
    %435 = vmatpush.xpose.msra.mxu0 0.0
    %436 = vmatpush.xpose.msra.mxu0 0.0
    %437 = vmatpush.xpose.msra.mxu0 0.0
    %438 = vmatpush.xpose.msra.mxu0 0.0
    %439 = vmatpush.xpose.msra.mxu0 0.0
    %440 = vmatpush.xpose.msra.mxu0 0.0
    %441 = vmatpush.xpose.msra.mxu0 0.0
    %442 = vmatpush.xpose.msra.mxu0 0.0
    %443 = vmatpush.xpose.msra.mxu0 0.0
    %444 = vmatpush.xpose.msra.mxu0 0.0
    %445 = vmatpush.xpose.msra.mxu0 0.0
    %446 = vmatpush.xpose.msra.mxu0 0.0
    %447 = vmatpush.xpose.msra.mxu0 0.0
    %448 = vmatpush.xpose.msra.mxu0 0.0
    %449 = vmatpush.xpose.msra.mxu0 0.0
    %450 = vmatpush.xpose.msra.mxu0 %v433
    %451 = vmatmul.f32.gmra.mxu0 %v431
    %v452 = vpop.f32.mrf.mxu0
    %v453 = vadd.f32 0.0, %v452
    %454 = vdwg.mxu0
    %v455 = vtanh.pop %v453
    %v456 = vmul.f32 %v455, 30.0
    %v457 = vadd.f32 %v456, %v264
    %v458 = vmul.f32 %v457, 1.442695
    %v459 = vpow.pop %v458
    %v460 = vsel %vm236, %v459, 0.0
    %461 = vadd.xlane.f32.xlu0 %v460
    %v462 = vpop.xlane.xlu0 %461
    %v463 = vrcp.pop %v462
    %v464 = vmul.f32 %v459, %v463
    %465 = vrot.lane.b32.xlu0 %v222, 40
    %v466 = vpop.permute.xlu0 %465
    %v469 = vsel %vm236, %v464, 0
    %471 = vmatpush.msra.mxu0 0.0
    %472 = vmatpush.msra.mxu0 0.0
    %473 = vmatpush.msra.mxu0 0.0
    %474 = vmatpush.msra.mxu0 0.0
    %475 = vmatpush.msra.mxu0 0.0
    %476 = vmatpush.msra.mxu0 0.0
    %477 = vmatpush.msra.mxu0 0.0
    %478 = vmatpush.msra.mxu0 0.0
    %479 = vmatpush.msra.mxu0 0.0
    %480 = vmatpush.msra.mxu0 0.0
    %481 = vmatpush.msra.mxu0 0.0
    %482 = vmatpush.msra.mxu0 0.0
    %483 = vmatpush.msra.mxu0 0.0
    %484 = vmatpush.msra.mxu0 0.0
    %485 = vmatpush.msra.mxu0 0.0
    %486 = vmatpush.msra.mxu0 %v466
    %487 = vmatmul.f32.gmra.mxu0 %v469
    %v488 = vpop.f32.mrf.mxu0
    %v489 = vadd.f32 0.0, %v488
    %490 = vdwg.mxu0
    %492 = vrot.lane.b32.xlu0 %v361, 8
    %v493 = vpop.permute.xlu0 %492
    %496 = vrot.lane.b32.xlu0 %v425, 16
    %v497 = vpop.permute.xlu0 %496
    %500 = vrot.lane.b32.xlu0 %v489, 24
    %v501 = vpop.permute.xlu0 %500
    %v503 = vsel %vm236, %v297, %v493
    %vm504 = vcmask 130048
    %v505 = vsel %vm504, %v503, %v497
    %vm506 = vcmask 195584
    %v507 = vsel %vm506, %v505, %v501
    %v509 = vsel %vm124, %v507, 0
    %511 = vmatpush.msra.mxu0 0.0
    %512 = vmatpush.msra.mxu0 0.0
    %513 = vmatpush.msra.mxu0 0.0
    %514 = vmatpush.msra.mxu0 0.0
    %515 = vmatpush.msra.mxu0 0.0
    %516 = vmatpush.msra.mxu0 0.0
    %517 = vmatpush.msra.mxu0 0.0
    %518 = vmatpush.msra.mxu0 0.0
    %519 = vmatpush.msra.mxu0 0.0
    %520 = vmatpush.msra.mxu0 0.0
    %521 = vmatpush.msra.mxu0 0.0
    %522 = vmatpush.msra.mxu0 0.0
    %523 = vmatpush.msra.mxu0 %v232
    %524 = vmatpush.msra.mxu0 %v231
    %525 = vmatpush.msra.mxu0 %v230
    %526 = vmatpush.msra.mxu0 %v229
    %527 = vmatmul.f32.gmra.mxu0 %v509
    %v528 = vpop.f32.mrf.mxu0
    %v529 = vadd.f32 0.0, %v528
    %530 = vdwg.mxu0
    %532 = vrot.lane.b32.xlu0 %v225, 96
    %v533 = vpop.permute.xlu0 %532
    %v535 = vsel %vm236, %v228, 0
    %v537 = vsel %vm236, %v533, 0
    %539 = vmatpush.xpose.msra.mxu0 0.0
    %540 = vmatpush.xpose.msra.mxu0 0.0
    %541 = vmatpush.xpose.msra.mxu0 0.0
    %542 = vmatpush.xpose.msra.mxu0 0.0
    %543 = vmatpush.xpose.msra.mxu0 0.0
    %544 = vmatpush.xpose.msra.mxu0 0.0
    %545 = vmatpush.xpose.msra.mxu0 0.0
    %546 = vmatpush.xpose.msra.mxu0 0.0
    %547 = vmatpush.xpose.msra.mxu0 0.0
    %548 = vmatpush.xpose.msra.mxu0 0.0
    %549 = vmatpush.xpose.msra.mxu0 0.0
    %550 = vmatpush.xpose.msra.mxu0 0.0
    %551 = vmatpush.xpose.msra.mxu0 0.0
    %552 = vmatpush.xpose.msra.mxu0 0.0
    %553 = vmatpush.xpose.msra.mxu0 0.0
    %554 = vmatpush.xpose.msra.mxu0 %v537
    %555 = vmatmul.f32.gmra.mxu0 %v535
    %v556 = vpop.f32.mrf.mxu0
    %v557 = vadd.f32 0.0, %v556
    %558 = vdwg.mxu0
    %v559 = vtanh.pop %v557
    %v560 = vmul.f32 %v559, 30.0
    %v561 = vperm.slane %v121, 1
    %v562 = vadd.f32 %v560, %v561
    %v563 = vmul.f32 %v562, 1.442695
    %v564 = vpow.pop %v563
    %v565 = vsel %vm236, %v564, 0.0
    %566 = vadd.xlane.f32.xlu0 %v565
    %v567 = vpop.xlane.xlu0 %566
    %v568 = vrcp.pop %v567
    %v569 = vmul.f32 %v564, %v568
    %570 = vrot.lane.b32.xlu0 %v225, 64
    %v571 = vpop.permute.xlu0 %570
    %v574 = vsel %vm236, %v569, 0
    %576 = vmatpush.msra.mxu0 0.0
    %577 = vmatpush.msra.mxu0 0.0
    %578 = vmatpush.msra.mxu0 0.0
    %579 = vmatpush.msra.mxu0 0.0
    %580 = vmatpush.msra.mxu0 0.0
    %581 = vmatpush.msra.mxu0 0.0
    %582 = vmatpush.msra.mxu0 0.0
    %583 = vmatpush.msra.mxu0 0.0
    %584 = vmatpush.msra.mxu0 0.0
    %585 = vmatpush.msra.mxu0 0.0
    %586 = vmatpush.msra.mxu0 0.0
    %587 = vmatpush.msra.mxu0 0.0
    %588 = vmatpush.msra.mxu0 0.0
    %589 = vmatpush.msra.mxu0 0.0
    %590 = vmatpush.msra.mxu0 0.0
    %591 = vmatpush.msra.mxu0 %v571
    %592 = vmatmul.f32.gmra.mxu0 %v574
    %v593 = vpop.f32.mrf.mxu0
    %v594 = vadd.f32 0.0, %v593
    %595 = vdwg.mxu0
    %596 = vrot.lane.b32.xlu0 %v228, 120
    %v597 = vpop.permute.xlu0 %596
    %598 = vrot.lane.b32.xlu0 %v225, 88
    %v599 = vpop.permute.xlu0 %598
    %v600 = vsel %vm236, %v597, 0
    %v602 = vsel %vm236, %v599, 0
    %604 = vmatpush.xpose.msra.mxu0 0.0
    %605 = vmatpush.xpose.msra.mxu0 0.0
    %606 = vmatpush.xpose.msra.mxu0 0.0
    %607 = vmatpush.xpose.msra.mxu0 0.0
    %608 = vmatpush.xpose.msra.mxu0 0.0
    %609 = vmatpush.xpose.msra.mxu0 0.0
    %610 = vmatpush.xpose.msra.mxu0 0.0
    %611 = vmatpush.xpose.msra.mxu0 0.0
    %612 = vmatpush.xpose.msra.mxu0 0.0
    %613 = vmatpush.xpose.msra.mxu0 0.0
    %614 = vmatpush.xpose.msra.mxu0 0.0
    %615 = vmatpush.xpose.msra.mxu0 0.0
    %616 = vmatpush.xpose.msra.mxu0 0.0
    %617 = vmatpush.xpose.msra.mxu0 0.0
    %618 = vmatpush.xpose.msra.mxu0 0.0
    %619 = vmatpush.xpose.msra.mxu0 %v602
    %620 = vmatmul.f32.gmra.mxu0 %v600
    %v621 = vpop.f32.mrf.mxu0
    %v622 = vadd.f32 0.0, %v621
    %623 = vdwg.mxu0
    %v624 = vtanh.pop %v622
    %v625 = vmul.f32 %v624, 30.0
    %v626 = vadd.f32 %v625, %v561
    %v627 = vmul.f32 %v626, 1.442695
    %v628 = vpow.pop %v627
    %v629 = vsel %vm236, %v628, 0.0
    %630 = vadd.xlane.f32.xlu0 %v629
    %v631 = vpop.xlane.xlu0 %630
    %v632 = vrcp.pop %v631
    %v633 = vmul.f32 %v628, %v632
    %634 = vrot.lane.b32.xlu0 %v225, 56
    %v635 = vpop.permute.xlu0 %634
    %v638 = vsel %vm236, %v633, 0
    %640 = vmatpush.msra.mxu0 0.0
    %641 = vmatpush.msra.mxu0 0.0
    %642 = vmatpush.msra.mxu0 0.0
    %643 = vmatpush.msra.mxu0 0.0
    %644 = vmatpush.msra.mxu0 0.0
    %645 = vmatpush.msra.mxu0 0.0
    %646 = vmatpush.msra.mxu0 0.0
    %647 = vmatpush.msra.mxu0 0.0
    %648 = vmatpush.msra.mxu0 0.0
    %649 = vmatpush.msra.mxu0 0.0
    %650 = vmatpush.msra.mxu0 0.0
    %651 = vmatpush.msra.mxu0 0.0
    %652 = vmatpush.msra.mxu0 0.0
    %653 = vmatpush.msra.mxu0 0.0
    %654 = vmatpush.msra.mxu0 0.0
    %655 = vmatpush.msra.mxu0 %v635
    %656 = vmatmul.f32.gmra.mxu0 %v638
    %v657 = vpop.f32.mrf.mxu0
    %v658 = vadd.f32 0.0, %v657
    %659 = vdwg.mxu0
    %660 = vrot.lane.b32.xlu0 %v228, 112
    %v661 = vpop.permute.xlu0 %660
    %662 = vrot.lane.b32.xlu0 %v225, 80
    %v663 = vpop.permute.xlu0 %662
    %v664 = vsel %vm236, %v661, 0
    %v666 = vsel %vm236, %v663, 0
    %668 = vmatpush.xpose.msra.mxu0 0.0
    %669 = vmatpush.xpose.msra.mxu0 0.0
    %670 = vmatpush.xpose.msra.mxu0 0.0
    %671 = vmatpush.xpose.msra.mxu0 0.0
    %672 = vmatpush.xpose.msra.mxu0 0.0
    %673 = vmatpush.xpose.msra.mxu0 0.0
    %674 = vmatpush.xpose.msra.mxu0 0.0
    %675 = vmatpush.xpose.msra.mxu0 0.0
    %676 = vmatpush.xpose.msra.mxu0 0.0
    %677 = vmatpush.xpose.msra.mxu0 0.0
    %678 = vmatpush.xpose.msra.mxu0 0.0
    %679 = vmatpush.xpose.msra.mxu0 0.0
    %680 = vmatpush.xpose.msra.mxu0 0.0
    %681 = vmatpush.xpose.msra.mxu0 0.0
    %682 = vmatpush.xpose.msra.mxu0 0.0
    %683 = vmatpush.xpose.msra.mxu0 %v666
    %684 = vmatmul.f32.gmra.mxu0 %v664
    %v685 = vpop.f32.mrf.mxu0
    %v686 = vadd.f32 0.0, %v685
    %687 = vdwg.mxu0
    %v688 = vtanh.pop %v686
    %v689 = vmul.f32 %v688, 30.0
    %v690 = vadd.f32 %v689, %v561
    %v691 = vmul.f32 %v690, 1.442695
    %v692 = vpow.pop %v691
    %v693 = vsel %vm236, %v692, 0.0
    %694 = vadd.xlane.f32.xlu0 %v693
    %v695 = vpop.xlane.xlu0 %694
    %v696 = vrcp.pop %v695
    %v697 = vmul.f32 %v692, %v696
    %698 = vrot.lane.b32.xlu0 %v225, 48
    %v699 = vpop.permute.xlu0 %698
    %v702 = vsel %vm236, %v697, 0
    %704 = vmatpush.msra.mxu0 0.0
    %705 = vmatpush.msra.mxu0 0.0
    %706 = vmatpush.msra.mxu0 0.0
    %707 = vmatpush.msra.mxu0 0.0
    %708 = vmatpush.msra.mxu0 0.0
    %709 = vmatpush.msra.mxu0 0.0
    %710 = vmatpush.msra.mxu0 0.0
    %711 = vmatpush.msra.mxu0 0.0
    %712 = vmatpush.msra.mxu0 0.0
    %713 = vmatpush.msra.mxu0 0.0
    %714 = vmatpush.msra.mxu0 0.0
    %715 = vmatpush.msra.mxu0 0.0
    %716 = vmatpush.msra.mxu0 0.0
    %717 = vmatpush.msra.mxu0 0.0
    %718 = vmatpush.msra.mxu0 0.0
    %719 = vmatpush.msra.mxu0 %v699
    %720 = vmatmul.f32.gmra.mxu0 %v702
    %v721 = vpop.f32.mrf.mxu0
    %v722 = vadd.f32 0.0, %v721
    %723 = vdwg.mxu0
    %724 = vrot.lane.b32.xlu0 %v228, 104
    %v725 = vpop.permute.xlu0 %724
    %726 = vrot.lane.b32.xlu0 %v225, 72
    %v727 = vpop.permute.xlu0 %726
    %v728 = vsel %vm236, %v725, 0
    %v730 = vsel %vm236, %v727, 0
    %732 = vmatpush.xpose.msra.mxu0 0.0
    %733 = vmatpush.xpose.msra.mxu0 0.0
    %734 = vmatpush.xpose.msra.mxu0 0.0
    %735 = vmatpush.xpose.msra.mxu0 0.0
    %736 = vmatpush.xpose.msra.mxu0 0.0
    %737 = vmatpush.xpose.msra.mxu0 0.0
    %738 = vmatpush.xpose.msra.mxu0 0.0
    %739 = vmatpush.xpose.msra.mxu0 0.0
    %740 = vmatpush.xpose.msra.mxu0 0.0
    %741 = vmatpush.xpose.msra.mxu0 0.0
    %742 = vmatpush.xpose.msra.mxu0 0.0
    %743 = vmatpush.xpose.msra.mxu0 0.0
    %744 = vmatpush.xpose.msra.mxu0 0.0
    %745 = vmatpush.xpose.msra.mxu0 0.0
    %746 = vmatpush.xpose.msra.mxu0 0.0
    %747 = vmatpush.xpose.msra.mxu0 %v730
    %748 = vmatmul.f32.gmra.mxu0 %v728
    %v749 = vpop.f32.mrf.mxu0
    %v750 = vadd.f32 0.0, %v749
    %751 = vdwg.mxu0
    %v752 = vtanh.pop %v750
    %v753 = vmul.f32 %v752, 30.0
    %v754 = vadd.f32 %v753, %v561
    %v755 = vmul.f32 %v754, 1.442695
    %v756 = vpow.pop %v755
    %v757 = vsel %vm236, %v756, 0.0
    %758 = vadd.xlane.f32.xlu0 %v757
    %v759 = vpop.xlane.xlu0 %758
    %v760 = vrcp.pop %v759
    %v761 = vmul.f32 %v756, %v760
    %762 = vrot.lane.b32.xlu0 %v225, 40
    %v763 = vpop.permute.xlu0 %762
    %v766 = vsel %vm236, %v761, 0
    %768 = vmatpush.msra.mxu0 0.0
    %769 = vmatpush.msra.mxu0 0.0
    %770 = vmatpush.msra.mxu0 0.0
    %771 = vmatpush.msra.mxu0 0.0
    %772 = vmatpush.msra.mxu0 0.0
    %773 = vmatpush.msra.mxu0 0.0
    %774 = vmatpush.msra.mxu0 0.0
    %775 = vmatpush.msra.mxu0 0.0
    %776 = vmatpush.msra.mxu0 0.0
    %777 = vmatpush.msra.mxu0 0.0
    %778 = vmatpush.msra.mxu0 0.0
    %779 = vmatpush.msra.mxu0 0.0
    %780 = vmatpush.msra.mxu0 0.0
    %781 = vmatpush.msra.mxu0 0.0
    %782 = vmatpush.msra.mxu0 0.0
    %783 = vmatpush.msra.mxu0 %v763
    %784 = vmatmul.f32.gmra.mxu0 %v766
    %v785 = vpop.f32.mrf.mxu0
    %v786 = vadd.f32 0.0, %v785
    %787 = vdwg.mxu0
    %789 = vrot.lane.b32.xlu0 %v658, 8
    %v790 = vpop.permute.xlu0 %789
    %793 = vrot.lane.b32.xlu0 %v722, 16
    %v794 = vpop.permute.xlu0 %793
    %797 = vrot.lane.b32.xlu0 %v786, 24
    %v798 = vpop.permute.xlu0 %797
    %v800 = vsel %vm236, %v594, %v790
    %v801 = vsel %vm504, %v800, %v794
    %v802 = vsel %vm506, %v801, %v798
    %v804 = vsel %vm124, %v802, 0
    %806 = vmatpush.msra.mxu0 0.0
    %807 = vmatpush.msra.mxu0 0.0
    %808 = vmatpush.msra.mxu0 0.0
    %809 = vmatpush.msra.mxu0 0.0
    %810 = vmatpush.msra.mxu0 0.0
    %811 = vmatpush.msra.mxu0 0.0
    %812 = vmatpush.msra.mxu0 0.0
    %813 = vmatpush.msra.mxu0 0.0
    %814 = vmatpush.msra.mxu0 0.0
    %815 = vmatpush.msra.mxu0 0.0
    %816 = vmatpush.msra.mxu0 0.0
    %817 = vmatpush.msra.mxu0 0.0
    %818 = vmatpush.msra.mxu0 %v232
    %819 = vmatpush.msra.mxu0 %v231
    %820 = vmatpush.msra.mxu0 %v230
    %821 = vmatpush.msra.mxu0 %v229
    %822 = vmatmul.f32.gmra.mxu0 %v804
    %v823 = vpop.f32.mrf.mxu0
    %v824 = vadd.f32 0.0, %v823
    %825 = vdwg.mxu0
    %v826 = vadd.f32 %v118, %v529
    %v827 = vadd.f32 %v119, %v824
    %v828 = vld [vmem:[%s9] sm:$0x1]
    %v830 = vperm.slane %v828, 0
    %v832 = vadd.f32 %v826, %v830
    %v833 = vadd.f32 %v827, %v830
    %v834 = vld [vmem:[%s10] sm:$0x1]
    %v835 = vld [vmem:[%s11] sm:$0x1]
    %v836 = vsel %vm124, %v832, 0.0
    %837 = vadd.xlane.f32.xlu0 %v836
    %v838 = vpop.xlane.xlu0 %837
    %v839 = vsel %vm124, %v833, 0.0
    %840 = vadd.xlane.f32.xlu0 %v839
    %v841 = vpop.xlane.xlu0 %840
    %v842 = vmul.f32 %v838, %v137
    %v843 = vmul.f32 %v841, %v137
    %v844 = vmul.f32 %v832, %v832
    %v845 = vmul.f32 %v833, %v833
    %v846 = vsel %vm124, %v844, 0.0
    %847 = vadd.xlane.f32.xlu0 %v846
    %v848 = vpop.xlane.xlu0 %847
    %v849 = vsel %vm124, %v845, 0.0
    %850 = vadd.xlane.f32.xlu0 %v849
    %v851 = vpop.xlane.xlu0 %850
    %v852 = vmul.f32 %v848, %v137
    %v853 = vmul.f32 %v851, %v137
    %v854 = vmul.f32 %v842, %v842
    %v855 = vmul.f32 %v843, %v843
    %v856 = vsub.f32 %v852, %v854
    %v857 = vsub.f32 %v853, %v855
    %v858 = vsub.f32 %v832, %v842
    %v859 = vsub.f32 %v833, %v843
    %v860 = vadd.f32 %v856, 1e-06
    %v861 = vadd.f32 %v857, 1e-06
    %v862 = vrsqrt.pop %v860
    %v863 = vmul.f32 %v862, %v860
    %v864 = vmul.f32 %v863, %v862
    %v865 = vmul.f32 0.5, %v864
    %v866 = vsub.f32 1.5, %v865
    %v867 = vmul.f32 %v862, %v866
    %vm868 = vweird.f32 %v860
    %vm869 = vweird.f32 %v862
    %vm870 = vmor %vm868, %vm869
    %v871 = vsel %vm870, %v862, %v867
    %v872 = vrsqrt.pop %v861
    %v873 = vmul.f32 %v872, %v861
    %v874 = vmul.f32 %v873, %v872
    %v875 = vmul.f32 0.5, %v874
    %v876 = vsub.f32 1.5, %v875
    %v877 = vmul.f32 %v872, %v876
    %vm878 = vweird.f32 %v861
    %vm879 = vweird.f32 %v872
    %vm880 = vmor %vm878, %vm879
    %v881 = vsel %vm880, %v872, %v877
    %v882 = vmul.f32 %v858, %v871
    %v883 = vmul.f32 %v859, %v881
    %v885 = vperm.slane %v834, 0
    %v887 = vmul.f32 %v882, %v885
    %v888 = vmul.f32 %v883, %v885
    %v890 = vperm.slane %v835, 0
    %v892 = vadd.f32 %v887, %v890
    %v893 = vadd.f32 %v888, %v890
    %v894 = vld [vmem:[%s12] sm:$0xff]
    %v895 = vld [vmem:[%s12 + $0x8] sm:$0xff]
    %v896 = vld [vmem:[%s12 + $0x10] sm:$0xff]
    %v897 = vld [vmem:[%s12 + $0x18] sm:$0xff]
    %v898 = vld [vmem:[%s13] sm:$0x1]
    %v900 = vperm.slane %v898, 0
    %v903 = vsel %vm124, %v892, 0
    %v906 = vsel %vm124, %v893, 0
    %908 = vmatpush.msra.mxu0 0.0
    %909 = vmatpush.msra.mxu0 0.0
    %910 = vmatpush.msra.mxu0 0.0
    %911 = vmatpush.msra.mxu0 0.0
    %912 = vmatpush.msra.mxu0 0.0
    %913 = vmatpush.msra.mxu0 0.0
    %914 = vmatpush.msra.mxu0 0.0
    %915 = vmatpush.msra.mxu0 0.0
    %916 = vmatpush.msra.mxu0 0.0
    %917 = vmatpush.msra.mxu0 0.0
    %918 = vmatpush.msra.mxu0 0.0
    %919 = vmatpush.msra.mxu0 0.0
    %920 = vmatpush.msra.mxu0 %v897
    %921 = vmatpush.msra.mxu0 %v896
    %922 = vmatpush.msra.mxu0 %v895
    %923 = vmatpush.msra.mxu0 %v894
    %924 = vmatmul.f32.gmra.mxu0 %v903
    %v925 = vpop.f32.mrf.mxu0
    %v926 = vadd.f32 %v900, %v925
    %927 = vmatmul.f32.gmra.mxu0 %v906
    %v928 = vpop.f32.mrf.mxu0
    %v929 = vadd.f32 %v900, %v928
    %930 = vdwg.mxu0
    %v931 = vmax.f32 %v926, 0.0
    %v932 = vmax.f32 %v929, 0.0
    %v933 = vld [vmem:[%s14] sm:$0xff]
    %v934 = vld [vmem:[%s14 + $0x8] sm:$0xff]
    %v935 = vld [vmem:[%s14 + $0x10] sm:$0xff]
    %v936 = vld [vmem:[%s14 + $0x18] sm:$0xff]
    %v937 = vld [vmem:[%s14 + $0x20] sm:$0xff]
    %v938 = vld [vmem:[%s14 + $0x28] sm:$0xff]
    %v939 = vld [vmem:[%s14 + $0x30] sm:$0xff]
    %v940 = vld [vmem:[%s14 + $0x38] sm:$0xff]
    %v941 = vld [vmem:[%s15] sm:$0x1]
    %v943 = vperm.slane %v941, 0
    %v946 = vsel %vm84, %v931, 0
    %v949 = vsel %vm84, %v932, 0
    %951 = vmatpush.msra.mxu0 0.0
    %952 = vmatpush.msra.mxu0 0.0
    %953 = vmatpush.msra.mxu0 0.0
    %954 = vmatpush.msra.mxu0 0.0
    %955 = vmatpush.msra.mxu0 0.0
    %956 = vmatpush.msra.mxu0 0.0
    %957 = vmatpush.msra.mxu0 0.0
    %958 = vmatpush.msra.mxu0 0.0
    %959 = vmatpush.msra.mxu0 %v940
    %960 = vmatpush.msra.mxu0 %v939
    %961 = vmatpush.msra.mxu0 %v938
    %962 = vmatpush.msra.mxu0 %v937
    %963 = vmatpush.msra.mxu0 %v936
    %964 = vmatpush.msra.mxu0 %v935
    %965 = vmatpush.msra.mxu0 %v934
    %966 = vmatpush.msra.mxu0 %v933
    %967 = vmatmul.f32.gmra.mxu0 %v946
    %v968 = vpop.f32.mrf.mxu0
    %v969 = vadd.f32 %v943, %v968
    %970 = vmatmul.f32.gmra.mxu0 %v949
    %v971 = vpop.f32.mrf.mxu0
    %v972 = vadd.f32 %v943, %v971
    %973 = vdwg.mxu0
    %v974 = vadd.f32 %v832, %v969
    %v975 = vadd.f32 %v833, %v972
    %s976 = scalar_lea.vmem %s4, 1
    %v977 = vld [vmem:[%s976] sm:$0x1]
    %s978 = scalar_lea.vmem %s5, 1
    %v979 = vld [vmem:[%s978] sm:$0x1]
    %v980 = vsel %vm124, %v974, 0.0
    %981 = vadd.xlane.f32.xlu0 %v980
    %v982 = vpop.xlane.xlu0 %981
    %v983 = vsel %vm124, %v975, 0.0
    %984 = vadd.xlane.f32.xlu0 %v983
    %v985 = vpop.xlane.xlu0 %984
    %v986 = vmul.f32 %v982, %v137
    %v987 = vmul.f32 %v985, %v137
    %v988 = vmul.f32 %v974, %v974
    %v989 = vmul.f32 %v975, %v975
    %v990 = vsel %vm124, %v988, 0.0
    %991 = vadd.xlane.f32.xlu0 %v990
    %v992 = vpop.xlane.xlu0 %991
    %v993 = vsel %vm124, %v989, 0.0
    %994 = vadd.xlane.f32.xlu0 %v993
    %v995 = vpop.xlane.xlu0 %994
    %v996 = vmul.f32 %v992, %v137
    %v997 = vmul.f32 %v995, %v137
    %v998 = vmul.f32 %v986, %v986
    %v999 = vmul.f32 %v987, %v987
    %v1000 = vsub.f32 %v996, %v998
    %v1001 = vsub.f32 %v997, %v999
    %v1002 = vsub.f32 %v974, %v986
    %v1003 = vsub.f32 %v975, %v987
    %v1004 = vadd.f32 %v1000, 1e-06
    %v1005 = vadd.f32 %v1001, 1e-06
    %v1006 = vrsqrt.pop %v1004
    %v1007 = vmul.f32 %v1006, %v1004
    %v1008 = vmul.f32 %v1007, %v1006
    %v1009 = vmul.f32 0.5, %v1008
    %v1010 = vsub.f32 1.5, %v1009
    %v1011 = vmul.f32 %v1006, %v1010
    %vm1012 = vweird.f32 %v1004
    %vm1013 = vweird.f32 %v1006
    %vm1014 = vmor %vm1012, %vm1013
    %v1015 = vsel %vm1014, %v1006, %v1011
    %v1016 = vrsqrt.pop %v1005
    %v1017 = vmul.f32 %v1016, %v1005
    %v1018 = vmul.f32 %v1017, %v1016
    %v1019 = vmul.f32 0.5, %v1018
    %v1020 = vsub.f32 1.5, %v1019
    %v1021 = vmul.f32 %v1016, %v1020
    %vm1022 = vweird.f32 %v1005
    %vm1023 = vweird.f32 %v1016
    %vm1024 = vmor %vm1022, %vm1023
    %v1025 = vsel %vm1024, %v1016, %v1021
    %v1026 = vmul.f32 %v1002, %v1015
    %v1027 = vmul.f32 %v1003, %v1025
    %v1029 = vperm.slane %v977, 0
    %v1031 = vmul.f32 %v1026, %v1029
    %v1032 = vmul.f32 %v1027, %v1029
    %v1034 = vperm.slane %v979, 0
    %v1036 = vadd.f32 %v1031, %v1034
    %v1037 = vadd.f32 %v1032, %v1034
    %s1038 = scalar_lea.vmem %s6, 32
    %v1039 = vld [vmem:[%s1038] sm:$0xff]
    %v1040 = vld [vmem:[%s1038 + $0x8] sm:$0xff]
    %v1041 = vld [vmem:[%s1038 + $0x10] sm:$0xff]
    %v1042 = vld [vmem:[%s1038 + $0x18] sm:$0xff]
    %s1043 = scalar_lea.vmem %s7, 1
    %v1044 = vld [vmem:[%s1043] sm:$0x1]
    %v1046 = vperm.slane %v1044, 0
    %v1049 = vsel %vm124, %v1036, 0
    %v1052 = vsel %vm124, %v1037, 0
    %1054 = vmatpush.msra.mxu0 0.0
    %1055 = vmatpush.msra.mxu0 0.0
    %1056 = vmatpush.msra.mxu0 0.0
    %1057 = vmatpush.msra.mxu0 0.0
    %1058 = vmatpush.msra.mxu0 0.0
    %1059 = vmatpush.msra.mxu0 0.0
    %1060 = vmatpush.msra.mxu0 0.0
    %1061 = vmatpush.msra.mxu0 0.0
    %1062 = vmatpush.msra.mxu0 0.0
    %1063 = vmatpush.msra.mxu0 0.0
    %1064 = vmatpush.msra.mxu0 0.0
    %1065 = vmatpush.msra.mxu0 0.0
    %1066 = vmatpush.msra.mxu0 %v1042
    %1067 = vmatpush.msra.mxu0 %v1041
    %1068 = vmatpush.msra.mxu0 %v1040
    %1069 = vmatpush.msra.mxu0 %v1039
    %1070 = vmatmul.f32.gmra.mxu0 %v1049
    %v1071 = vpop.f32.mrf.mxu0
    %v1072 = vadd.f32 %v1046, %v1071
    %1073 = vmatmul.f32.gmra.mxu0 %v1052
    %v1074 = vpop.f32.mrf.mxu0
    %v1075 = vadd.f32 %v1046, %v1074
    %1076 = vdwg.mxu0
    %v1077 = vmul.f32 %v1072, 0.011785113
    %v1078 = vmul.f32 %v1075, 0.011785113
    %s1079 = scalar_lea.vmem %s8, 32
    %v1080 = vld [vmem:[%s1079] sm:$0xff]
    %v1081 = vld [vmem:[%s1079 + $0x8] sm:$0xff]
    %v1082 = vld [vmem:[%s1079 + $0x10] sm:$0xff]
    %v1083 = vld [vmem:[%s1079 + $0x18] sm:$0xff]
    %1085 = vrot.lane.b32.xlu0 %v1072, 96
    %v1086 = vpop.permute.xlu0 %1085
    %v1088 = vsel %vm236, %v1077, 0
    %v1090 = vsel %vm236, %v1086, 0
    %1092 = vmatpush.xpose.msra.mxu0 0.0
    %1093 = vmatpush.xpose.msra.mxu0 0.0
    %1094 = vmatpush.xpose.msra.mxu0 0.0
    %1095 = vmatpush.xpose.msra.mxu0 0.0
    %1096 = vmatpush.xpose.msra.mxu0 0.0
    %1097 = vmatpush.xpose.msra.mxu0 0.0
    %1098 = vmatpush.xpose.msra.mxu0 0.0
    %1099 = vmatpush.xpose.msra.mxu0 0.0
    %1100 = vmatpush.xpose.msra.mxu0 0.0
    %1101 = vmatpush.xpose.msra.mxu0 0.0
    %1102 = vmatpush.xpose.msra.mxu0 0.0
    %1103 = vmatpush.xpose.msra.mxu0 0.0
    %1104 = vmatpush.xpose.msra.mxu0 0.0
    %1105 = vmatpush.xpose.msra.mxu0 0.0
    %1106 = vmatpush.xpose.msra.mxu0 0.0
    %1107 = vmatpush.xpose.msra.mxu0 %v1090
    %1108 = vmatmul.f32.gmra.mxu0 %v1088
    %v1109 = vpop.f32.mrf.mxu0
    %v1110 = vadd.f32 0.0, %v1109
    %1111 = vdwg.mxu0
    %v1112 = vtanh.pop %v1110
    %v1113 = vmul.f32 %v1112, 30.0
    %v1114 = vadd.f32 %v1113, %v264
    %v1115 = vmul.f32 %v1114, 1.442695
    %v1116 = vpow.pop %v1115
    %v1117 = vsel %vm236, %v1116, 0.0
    %1118 = vadd.xlane.f32.xlu0 %v1117
    %v1119 = vpop.xlane.xlu0 %1118
    %v1120 = vrcp.pop %v1119
    %v1121 = vmul.f32 %v1116, %v1120
    %1122 = vrot.lane.b32.xlu0 %v1072, 64
    %v1123 = vpop.permute.xlu0 %1122
    %v1126 = vsel %vm236, %v1121, 0
    %1128 = vmatpush.msra.mxu0 0.0
    %1129 = vmatpush.msra.mxu0 0.0
    %1130 = vmatpush.msra.mxu0 0.0
    %1131 = vmatpush.msra.mxu0 0.0
    %1132 = vmatpush.msra.mxu0 0.0
    %1133 = vmatpush.msra.mxu0 0.0
    %1134 = vmatpush.msra.mxu0 0.0
    %1135 = vmatpush.msra.mxu0 0.0
    %1136 = vmatpush.msra.mxu0 0.0
    %1137 = vmatpush.msra.mxu0 0.0
    %1138 = vmatpush.msra.mxu0 0.0
    %1139 = vmatpush.msra.mxu0 0.0
    %1140 = vmatpush.msra.mxu0 0.0
    %1141 = vmatpush.msra.mxu0 0.0
    %1142 = vmatpush.msra.mxu0 0.0
    %1143 = vmatpush.msra.mxu0 %v1123
    %1144 = vmatmul.f32.gmra.mxu0 %v1126
    %v1145 = vpop.f32.mrf.mxu0
    %v1146 = vadd.f32 0.0, %v1145
    %1147 = vdwg.mxu0
    %1148 = vrot.lane.b32.xlu0 %v1077, 120
    %v1149 = vpop.permute.xlu0 %1148
    %1150 = vrot.lane.b32.xlu0 %v1072, 88
    %v1151 = vpop.permute.xlu0 %1150
    %v1152 = vsel %vm236, %v1149, 0
    %v1154 = vsel %vm236, %v1151, 0
    %1156 = vmatpush.xpose.msra.mxu0 0.0
    %1157 = vmatpush.xpose.msra.mxu0 0.0
    %1158 = vmatpush.xpose.msra.mxu0 0.0
    %1159 = vmatpush.xpose.msra.mxu0 0.0
    %1160 = vmatpush.xpose.msra.mxu0 0.0
    %1161 = vmatpush.xpose.msra.mxu0 0.0
    %1162 = vmatpush.xpose.msra.mxu0 0.0
    %1163 = vmatpush.xpose.msra.mxu0 0.0
    %1164 = vmatpush.xpose.msra.mxu0 0.0
    %1165 = vmatpush.xpose.msra.mxu0 0.0
    %1166 = vmatpush.xpose.msra.mxu0 0.0
    %1167 = vmatpush.xpose.msra.mxu0 0.0
    %1168 = vmatpush.xpose.msra.mxu0 0.0
    %1169 = vmatpush.xpose.msra.mxu0 0.0
    %1170 = vmatpush.xpose.msra.mxu0 0.0
    %1171 = vmatpush.xpose.msra.mxu0 %v1154
    %1172 = vmatmul.f32.gmra.mxu0 %v1152
    %v1173 = vpop.f32.mrf.mxu0
    %v1174 = vadd.f32 0.0, %v1173
    %1175 = vdwg.mxu0
    %v1176 = vtanh.pop %v1174
    %v1177 = vmul.f32 %v1176, 30.0
    %v1178 = vadd.f32 %v1177, %v264
    %v1179 = vmul.f32 %v1178, 1.442695
    %v1180 = vpow.pop %v1179
    %v1181 = vsel %vm236, %v1180, 0.0
    %1182 = vadd.xlane.f32.xlu0 %v1181
    %v1183 = vpop.xlane.xlu0 %1182
    %v1184 = vrcp.pop %v1183
    %v1185 = vmul.f32 %v1180, %v1184
    %1186 = vrot.lane.b32.xlu0 %v1072, 56
    %v1187 = vpop.permute.xlu0 %1186
    %v1190 = vsel %vm236, %v1185, 0
    %1192 = vmatpush.msra.mxu0 0.0
    %1193 = vmatpush.msra.mxu0 0.0
    %1194 = vmatpush.msra.mxu0 0.0
    %1195 = vmatpush.msra.mxu0 0.0
    %1196 = vmatpush.msra.mxu0 0.0
    %1197 = vmatpush.msra.mxu0 0.0
    %1198 = vmatpush.msra.mxu0 0.0
    %1199 = vmatpush.msra.mxu0 0.0
    %1200 = vmatpush.msra.mxu0 0.0
    %1201 = vmatpush.msra.mxu0 0.0
    %1202 = vmatpush.msra.mxu0 0.0
    %1203 = vmatpush.msra.mxu0 0.0
    %1204 = vmatpush.msra.mxu0 0.0
    %1205 = vmatpush.msra.mxu0 0.0
    %1206 = vmatpush.msra.mxu0 0.0
    %1207 = vmatpush.msra.mxu0 %v1187
    %1208 = vmatmul.f32.gmra.mxu0 %v1190
    %v1209 = vpop.f32.mrf.mxu0
    %v1210 = vadd.f32 0.0, %v1209
    %1211 = vdwg.mxu0
    %1212 = vrot.lane.b32.xlu0 %v1077, 112
    %v1213 = vpop.permute.xlu0 %1212
    %1214 = vrot.lane.b32.xlu0 %v1072, 80
    %v1215 = vpop.permute.xlu0 %1214
    %v1216 = vsel %vm236, %v1213, 0
    %v1218 = vsel %vm236, %v1215, 0
    %1220 = vmatpush.xpose.msra.mxu0 0.0
    %1221 = vmatpush.xpose.msra.mxu0 0.0
    %1222 = vmatpush.xpose.msra.mxu0 0.0
    %1223 = vmatpush.xpose.msra.mxu0 0.0
    %1224 = vmatpush.xpose.msra.mxu0 0.0
    %1225 = vmatpush.xpose.msra.mxu0 0.0
    %1226 = vmatpush.xpose.msra.mxu0 0.0
    %1227 = vmatpush.xpose.msra.mxu0 0.0
    %1228 = vmatpush.xpose.msra.mxu0 0.0
    %1229 = vmatpush.xpose.msra.mxu0 0.0
    %1230 = vmatpush.xpose.msra.mxu0 0.0
    %1231 = vmatpush.xpose.msra.mxu0 0.0
    %1232 = vmatpush.xpose.msra.mxu0 0.0
    %1233 = vmatpush.xpose.msra.mxu0 0.0
    %1234 = vmatpush.xpose.msra.mxu0 0.0
    %1235 = vmatpush.xpose.msra.mxu0 %v1218
    %1236 = vmatmul.f32.gmra.mxu0 %v1216
    %v1237 = vpop.f32.mrf.mxu0
    %v1238 = vadd.f32 0.0, %v1237
    %1239 = vdwg.mxu0
    %v1240 = vtanh.pop %v1238
    %v1241 = vmul.f32 %v1240, 30.0
    %v1242 = vadd.f32 %v1241, %v264
    %v1243 = vmul.f32 %v1242, 1.442695
    %v1244 = vpow.pop %v1243
    %v1245 = vsel %vm236, %v1244, 0.0
    %1246 = vadd.xlane.f32.xlu0 %v1245
    %v1247 = vpop.xlane.xlu0 %1246
    %v1248 = vrcp.pop %v1247
    %v1249 = vmul.f32 %v1244, %v1248
    %1250 = vrot.lane.b32.xlu0 %v1072, 48
    %v1251 = vpop.permute.xlu0 %1250
    %v1254 = vsel %vm236, %v1249, 0
    %1256 = vmatpush.msra.mxu0 0.0
    %1257 = vmatpush.msra.mxu0 0.0
    %1258 = vmatpush.msra.mxu0 0.0
    %1259 = vmatpush.msra.mxu0 0.0
    %1260 = vmatpush.msra.mxu0 0.0
    %1261 = vmatpush.msra.mxu0 0.0
    %1262 = vmatpush.msra.mxu0 0.0
    %1263 = vmatpush.msra.mxu0 0.0
    %1264 = vmatpush.msra.mxu0 0.0
    %1265 = vmatpush.msra.mxu0 0.0
    %1266 = vmatpush.msra.mxu0 0.0
    %1267 = vmatpush.msra.mxu0 0.0
    %1268 = vmatpush.msra.mxu0 0.0
    %1269 = vmatpush.msra.mxu0 0.0
    %1270 = vmatpush.msra.mxu0 0.0
    %1271 = vmatpush.msra.mxu0 %v1251
    %1272 = vmatmul.f32.gmra.mxu0 %v1254
    %v1273 = vpop.f32.mrf.mxu0
    %v1274 = vadd.f32 0.0, %v1273
    %1275 = vdwg.mxu0
    %1276 = vrot.lane.b32.xlu0 %v1077, 104
    %v1277 = vpop.permute.xlu0 %1276
    %1278 = vrot.lane.b32.xlu0 %v1072, 72
    %v1279 = vpop.permute.xlu0 %1278
    %v1280 = vsel %vm236, %v1277, 0
    %v1282 = vsel %vm236, %v1279, 0
    %1284 = vmatpush.xpose.msra.mxu0 0.0
    %1285 = vmatpush.xpose.msra.mxu0 0.0
    %1286 = vmatpush.xpose.msra.mxu0 0.0
    %1287 = vmatpush.xpose.msra.mxu0 0.0
    %1288 = vmatpush.xpose.msra.mxu0 0.0
    %1289 = vmatpush.xpose.msra.mxu0 0.0
    %1290 = vmatpush.xpose.msra.mxu0 0.0
    %1291 = vmatpush.xpose.msra.mxu0 0.0
    %1292 = vmatpush.xpose.msra.mxu0 0.0
    %1293 = vmatpush.xpose.msra.mxu0 0.0
    %1294 = vmatpush.xpose.msra.mxu0 0.0
    %1295 = vmatpush.xpose.msra.mxu0 0.0
    %1296 = vmatpush.xpose.msra.mxu0 0.0
    %1297 = vmatpush.xpose.msra.mxu0 0.0
    %1298 = vmatpush.xpose.msra.mxu0 0.0
    %1299 = vmatpush.xpose.msra.mxu0 %v1282
    %1300 = vmatmul.f32.gmra.mxu0 %v1280
    %v1301 = vpop.f32.mrf.mxu0
    %v1302 = vadd.f32 0.0, %v1301
    %1303 = vdwg.mxu0
    %v1304 = vtanh.pop %v1302
    %v1305 = vmul.f32 %v1304, 30.0
    %v1306 = vadd.f32 %v1305, %v264
    %v1307 = vmul.f32 %v1306, 1.442695
    %v1308 = vpow.pop %v1307
    %v1309 = vsel %vm236, %v1308, 0.0
    %1310 = vadd.xlane.f32.xlu0 %v1309
    %v1311 = vpop.xlane.xlu0 %1310
    %v1312 = vrcp.pop %v1311
    %v1313 = vmul.f32 %v1308, %v1312
    %1314 = vrot.lane.b32.xlu0 %v1072, 40
    %v1315 = vpop.permute.xlu0 %1314
    %v1318 = vsel %vm236, %v1313, 0
    %1320 = vmatpush.msra.mxu0 0.0
    %1321 = vmatpush.msra.mxu0 0.0
    %1322 = vmatpush.msra.mxu0 0.0
    %1323 = vmatpush.msra.mxu0 0.0
    %1324 = vmatpush.msra.mxu0 0.0
    %1325 = vmatpush.msra.mxu0 0.0
    %1326 = vmatpush.msra.mxu0 0.0
    %1327 = vmatpush.msra.mxu0 0.0
    %1328 = vmatpush.msra.mxu0 0.0
    %1329 = vmatpush.msra.mxu0 0.0
    %1330 = vmatpush.msra.mxu0 0.0
    %1331 = vmatpush.msra.mxu0 0.0
    %1332 = vmatpush.msra.mxu0 0.0
    %1333 = vmatpush.msra.mxu0 0.0
    %1334 = vmatpush.msra.mxu0 0.0
    %1335 = vmatpush.msra.mxu0 %v1315
    %1336 = vmatmul.f32.gmra.mxu0 %v1318
    %v1337 = vpop.f32.mrf.mxu0
    %v1338 = vadd.f32 0.0, %v1337
    %1339 = vdwg.mxu0
    %1341 = vrot.lane.b32.xlu0 %v1210, 8
    %v1342 = vpop.permute.xlu0 %1341
    %1345 = vrot.lane.b32.xlu0 %v1274, 16
    %v1346 = vpop.permute.xlu0 %1345
    %1349 = vrot.lane.b32.xlu0 %v1338, 24
    %v1350 = vpop.permute.xlu0 %1349
    %v1352 = vsel %vm236, %v1146, %v1342
    %v1353 = vsel %vm504, %v1352, %v1346
    %v1354 = vsel %vm506, %v1353, %v1350
    %v1356 = vsel %vm124, %v1354, 0
    %1358 = vmatpush.msra.mxu0 0.0
    %1359 = vmatpush.msra.mxu0 0.0
    %1360 = vmatpush.msra.mxu0 0.0
    %1361 = vmatpush.msra.mxu0 0.0
    %1362 = vmatpush.msra.mxu0 0.0
    %1363 = vmatpush.msra.mxu0 0.0
    %1364 = vmatpush.msra.mxu0 0.0
    %1365 = vmatpush.msra.mxu0 0.0
    %1366 = vmatpush.msra.mxu0 0.0
    %1367 = vmatpush.msra.mxu0 0.0
    %1368 = vmatpush.msra.mxu0 0.0
    %1369 = vmatpush.msra.mxu0 0.0
    %1370 = vmatpush.msra.mxu0 %v1083
    %1371 = vmatpush.msra.mxu0 %v1082
    %1372 = vmatpush.msra.mxu0 %v1081
    %1373 = vmatpush.msra.mxu0 %v1080
    %1374 = vmatmul.f32.gmra.mxu0 %v1356
    %v1375 = vpop.f32.mrf.mxu0
    %v1376 = vadd.f32 0.0, %v1375
    %1377 = vdwg.mxu0
    %1379 = vrot.lane.b32.xlu0 %v1075, 96
    %v1380 = vpop.permute.xlu0 %1379
    %v1382 = vsel %vm236, %v1078, 0
    %v1384 = vsel %vm236, %v1380, 0
    %1386 = vmatpush.xpose.msra.mxu0 0.0
    %1387 = vmatpush.xpose.msra.mxu0 0.0
    %1388 = vmatpush.xpose.msra.mxu0 0.0
    %1389 = vmatpush.xpose.msra.mxu0 0.0
    %1390 = vmatpush.xpose.msra.mxu0 0.0
    %1391 = vmatpush.xpose.msra.mxu0 0.0
    %1392 = vmatpush.xpose.msra.mxu0 0.0
    %1393 = vmatpush.xpose.msra.mxu0 0.0
    %1394 = vmatpush.xpose.msra.mxu0 0.0
    %1395 = vmatpush.xpose.msra.mxu0 0.0
    %1396 = vmatpush.xpose.msra.mxu0 0.0
    %1397 = vmatpush.xpose.msra.mxu0 0.0
    %1398 = vmatpush.xpose.msra.mxu0 0.0
    %1399 = vmatpush.xpose.msra.mxu0 0.0
    %1400 = vmatpush.xpose.msra.mxu0 0.0
    %1401 = vmatpush.xpose.msra.mxu0 %v1384
    %1402 = vmatmul.f32.gmra.mxu0 %v1382
    %v1403 = vpop.f32.mrf.mxu0
    %v1404 = vadd.f32 0.0, %v1403
    %1405 = vdwg.mxu0
    %v1406 = vtanh.pop %v1404
    %v1407 = vmul.f32 %v1406, 30.0
    %v1408 = vadd.f32 %v1407, %v561
    %v1409 = vmul.f32 %v1408, 1.442695
    %v1410 = vpow.pop %v1409
    %v1411 = vsel %vm236, %v1410, 0.0
    %1412 = vadd.xlane.f32.xlu0 %v1411
    %v1413 = vpop.xlane.xlu0 %1412
    %v1414 = vrcp.pop %v1413
    %v1415 = vmul.f32 %v1410, %v1414
    %1416 = vrot.lane.b32.xlu0 %v1075, 64
    %v1417 = vpop.permute.xlu0 %1416
    %v1420 = vsel %vm236, %v1415, 0
    %1422 = vmatpush.msra.mxu0 0.0
    %1423 = vmatpush.msra.mxu0 0.0
    %1424 = vmatpush.msra.mxu0 0.0
    %1425 = vmatpush.msra.mxu0 0.0
    %1426 = vmatpush.msra.mxu0 0.0
    %1427 = vmatpush.msra.mxu0 0.0
    %1428 = vmatpush.msra.mxu0 0.0
    %1429 = vmatpush.msra.mxu0 0.0
    %1430 = vmatpush.msra.mxu0 0.0
    %1431 = vmatpush.msra.mxu0 0.0
    %1432 = vmatpush.msra.mxu0 0.0
    %1433 = vmatpush.msra.mxu0 0.0
    %1434 = vmatpush.msra.mxu0 0.0
    %1435 = vmatpush.msra.mxu0 0.0
    %1436 = vmatpush.msra.mxu0 0.0
    %1437 = vmatpush.msra.mxu0 %v1417
    %1438 = vmatmul.f32.gmra.mxu0 %v1420
    %v1439 = vpop.f32.mrf.mxu0
    %v1440 = vadd.f32 0.0, %v1439
    %1441 = vdwg.mxu0
    %1442 = vrot.lane.b32.xlu0 %v1078, 120
    %v1443 = vpop.permute.xlu0 %1442
    %1444 = vrot.lane.b32.xlu0 %v1075, 88
    %v1445 = vpop.permute.xlu0 %1444
    %v1446 = vsel %vm236, %v1443, 0
    %v1448 = vsel %vm236, %v1445, 0
    %1450 = vmatpush.xpose.msra.mxu0 0.0
    %1451 = vmatpush.xpose.msra.mxu0 0.0
    %1452 = vmatpush.xpose.msra.mxu0 0.0
    %1453 = vmatpush.xpose.msra.mxu0 0.0
    %1454 = vmatpush.xpose.msra.mxu0 0.0
    %1455 = vmatpush.xpose.msra.mxu0 0.0
    %1456 = vmatpush.xpose.msra.mxu0 0.0
    %1457 = vmatpush.xpose.msra.mxu0 0.0
    %1458 = vmatpush.xpose.msra.mxu0 0.0
    %1459 = vmatpush.xpose.msra.mxu0 0.0
    %1460 = vmatpush.xpose.msra.mxu0 0.0
    %1461 = vmatpush.xpose.msra.mxu0 0.0
    %1462 = vmatpush.xpose.msra.mxu0 0.0
    %1463 = vmatpush.xpose.msra.mxu0 0.0
    %1464 = vmatpush.xpose.msra.mxu0 0.0
    %1465 = vmatpush.xpose.msra.mxu0 %v1448
    %1466 = vmatmul.f32.gmra.mxu0 %v1446
    %v1467 = vpop.f32.mrf.mxu0
    %v1468 = vadd.f32 0.0, %v1467
    %1469 = vdwg.mxu0
    %v1470 = vtanh.pop %v1468
    %v1471 = vmul.f32 %v1470, 30.0
    %v1472 = vadd.f32 %v1471, %v561
    %v1473 = vmul.f32 %v1472, 1.442695
    %v1474 = vpow.pop %v1473
    %v1475 = vsel %vm236, %v1474, 0.0
    %1476 = vadd.xlane.f32.xlu0 %v1475
    %v1477 = vpop.xlane.xlu0 %1476
    %v1478 = vrcp.pop %v1477
    %v1479 = vmul.f32 %v1474, %v1478
    %1480 = vrot.lane.b32.xlu0 %v1075, 56
    %v1481 = vpop.permute.xlu0 %1480
    %v1484 = vsel %vm236, %v1479, 0
    %1486 = vmatpush.msra.mxu0 0.0
    %1487 = vmatpush.msra.mxu0 0.0
    %1488 = vmatpush.msra.mxu0 0.0
    %1489 = vmatpush.msra.mxu0 0.0
    %1490 = vmatpush.msra.mxu0 0.0
    %1491 = vmatpush.msra.mxu0 0.0
    %1492 = vmatpush.msra.mxu0 0.0
    %1493 = vmatpush.msra.mxu0 0.0
    %1494 = vmatpush.msra.mxu0 0.0
    %1495 = vmatpush.msra.mxu0 0.0
    %1496 = vmatpush.msra.mxu0 0.0
    %1497 = vmatpush.msra.mxu0 0.0
    %1498 = vmatpush.msra.mxu0 0.0
    %1499 = vmatpush.msra.mxu0 0.0
    %1500 = vmatpush.msra.mxu0 0.0
    %1501 = vmatpush.msra.mxu0 %v1481
    %1502 = vmatmul.f32.gmra.mxu0 %v1484
    %v1503 = vpop.f32.mrf.mxu0
    %v1504 = vadd.f32 0.0, %v1503
    %1505 = vdwg.mxu0
    %1506 = vrot.lane.b32.xlu0 %v1078, 112
    %v1507 = vpop.permute.xlu0 %1506
    %1508 = vrot.lane.b32.xlu0 %v1075, 80
    %v1509 = vpop.permute.xlu0 %1508
    %v1510 = vsel %vm236, %v1507, 0
    %v1512 = vsel %vm236, %v1509, 0
    %1514 = vmatpush.xpose.msra.mxu0 0.0
    %1515 = vmatpush.xpose.msra.mxu0 0.0
    %1516 = vmatpush.xpose.msra.mxu0 0.0
    %1517 = vmatpush.xpose.msra.mxu0 0.0
    %1518 = vmatpush.xpose.msra.mxu0 0.0
    %1519 = vmatpush.xpose.msra.mxu0 0.0
    %1520 = vmatpush.xpose.msra.mxu0 0.0
    %1521 = vmatpush.xpose.msra.mxu0 0.0
    %1522 = vmatpush.xpose.msra.mxu0 0.0
    %1523 = vmatpush.xpose.msra.mxu0 0.0
    %1524 = vmatpush.xpose.msra.mxu0 0.0
    %1525 = vmatpush.xpose.msra.mxu0 0.0
    %1526 = vmatpush.xpose.msra.mxu0 0.0
    %1527 = vmatpush.xpose.msra.mxu0 0.0
    %1528 = vmatpush.xpose.msra.mxu0 0.0
    %1529 = vmatpush.xpose.msra.mxu0 %v1512
    %1530 = vmatmul.f32.gmra.mxu0 %v1510
    %v1531 = vpop.f32.mrf.mxu0
    %v1532 = vadd.f32 0.0, %v1531
    %1533 = vdwg.mxu0
    %v1534 = vtanh.pop %v1532
    %v1535 = vmul.f32 %v1534, 30.0
    %v1536 = vadd.f32 %v1535, %v561
    %v1537 = vmul.f32 %v1536, 1.442695
    %v1538 = vpow.pop %v1537
    %v1539 = vsel %vm236, %v1538, 0.0
    %1540 = vadd.xlane.f32.xlu0 %v1539
    %v1541 = vpop.xlane.xlu0 %1540
    %v1542 = vrcp.pop %v1541
    %v1543 = vmul.f32 %v1538, %v1542
    %1544 = vrot.lane.b32.xlu0 %v1075, 48
    %v1545 = vpop.permute.xlu0 %1544
    %v1548 = vsel %vm236, %v1543, 0
    %1550 = vmatpush.msra.mxu0 0.0
    %1551 = vmatpush.msra.mxu0 0.0
    %1552 = vmatpush.msra.mxu0 0.0
    %1553 = vmatpush.msra.mxu0 0.0
    %1554 = vmatpush.msra.mxu0 0.0
    %1555 = vmatpush.msra.mxu0 0.0
    %1556 = vmatpush.msra.mxu0 0.0
    %1557 = vmatpush.msra.mxu0 0.0
    %1558 = vmatpush.msra.mxu0 0.0
    %1559 = vmatpush.msra.mxu0 0.0
    %1560 = vmatpush.msra.mxu0 0.0
    %1561 = vmatpush.msra.mxu0 0.0
    %1562 = vmatpush.msra.mxu0 0.0
    %1563 = vmatpush.msra.mxu0 0.0
    %1564 = vmatpush.msra.mxu0 0.0
    %1565 = vmatpush.msra.mxu0 %v1545
    %1566 = vmatmul.f32.gmra.mxu0 %v1548
    %v1567 = vpop.f32.mrf.mxu0
    %v1568 = vadd.f32 0.0, %v1567
    %1569 = vdwg.mxu0
    %1570 = vrot.lane.b32.xlu0 %v1078, 104
    %v1571 = vpop.permute.xlu0 %1570
    %1572 = vrot.lane.b32.xlu0 %v1075, 72
    %v1573 = vpop.permute.xlu0 %1572
    %v1574 = vsel %vm236, %v1571, 0
    %v1576 = vsel %vm236, %v1573, 0
    %1578 = vmatpush.xpose.msra.mxu0 0.0
    %1579 = vmatpush.xpose.msra.mxu0 0.0
    %1580 = vmatpush.xpose.msra.mxu0 0.0
    %1581 = vmatpush.xpose.msra.mxu0 0.0
    %1582 = vmatpush.xpose.msra.mxu0 0.0
    %1583 = vmatpush.xpose.msra.mxu0 0.0
    %1584 = vmatpush.xpose.msra.mxu0 0.0
    %1585 = vmatpush.xpose.msra.mxu0 0.0
    %1586 = vmatpush.xpose.msra.mxu0 0.0
    %1587 = vmatpush.xpose.msra.mxu0 0.0
    %1588 = vmatpush.xpose.msra.mxu0 0.0
    %1589 = vmatpush.xpose.msra.mxu0 0.0
    %1590 = vmatpush.xpose.msra.mxu0 0.0
    %1591 = vmatpush.xpose.msra.mxu0 0.0
    %1592 = vmatpush.xpose.msra.mxu0 0.0
    %1593 = vmatpush.xpose.msra.mxu0 %v1576
    %1594 = vmatmul.f32.gmra.mxu0 %v1574
    %v1595 = vpop.f32.mrf.mxu0
    %v1596 = vadd.f32 0.0, %v1595
    %1597 = vdwg.mxu0
    %v1598 = vtanh.pop %v1596
    %v1599 = vmul.f32 %v1598, 30.0
    %v1600 = vadd.f32 %v1599, %v561
    %v1601 = vmul.f32 %v1600, 1.442695
    %v1602 = vpow.pop %v1601
    %v1603 = vsel %vm236, %v1602, 0.0
    %1604 = vadd.xlane.f32.xlu0 %v1603
    %v1605 = vpop.xlane.xlu0 %1604
    %v1606 = vrcp.pop %v1605
    %v1607 = vmul.f32 %v1602, %v1606
    %1608 = vrot.lane.b32.xlu0 %v1075, 40
    %v1609 = vpop.permute.xlu0 %1608
    %v1612 = vsel %vm236, %v1607, 0
    %1614 = vmatpush.msra.mxu0 0.0
    %1615 = vmatpush.msra.mxu0 0.0
    %1616 = vmatpush.msra.mxu0 0.0
    %1617 = vmatpush.msra.mxu0 0.0
    %1618 = vmatpush.msra.mxu0 0.0
    %1619 = vmatpush.msra.mxu0 0.0
    %1620 = vmatpush.msra.mxu0 0.0
    %1621 = vmatpush.msra.mxu0 0.0
    %1622 = vmatpush.msra.mxu0 0.0
    %1623 = vmatpush.msra.mxu0 0.0
    %1624 = vmatpush.msra.mxu0 0.0
    %1625 = vmatpush.msra.mxu0 0.0
    %1626 = vmatpush.msra.mxu0 0.0
    %1627 = vmatpush.msra.mxu0 0.0
    %1628 = vmatpush.msra.mxu0 0.0
    %1629 = vmatpush.msra.mxu0 %v1609
    %1630 = vmatmul.f32.gmra.mxu0 %v1612
    %v1631 = vpop.f32.mrf.mxu0
    %v1632 = vadd.f32 0.0, %v1631
    %1633 = vdwg.mxu0
    %1635 = vrot.lane.b32.xlu0 %v1504, 8
    %v1636 = vpop.permute.xlu0 %1635
    %1639 = vrot.lane.b32.xlu0 %v1568, 16
    %v1640 = vpop.permute.xlu0 %1639
    %1643 = vrot.lane.b32.xlu0 %v1632, 24
    %v1644 = vpop.permute.xlu0 %1643
    %v1646 = vsel %vm236, %v1440, %v1636
    %v1647 = vsel %vm504, %v1646, %v1640
    %v1648 = vsel %vm506, %v1647, %v1644
    %v1650 = vsel %vm124, %v1648, 0
    %1652 = vmatpush.msra.mxu0 0.0
    %1653 = vmatpush.msra.mxu0 0.0
    %1654 = vmatpush.msra.mxu0 0.0
    %1655 = vmatpush.msra.mxu0 0.0
    %1656 = vmatpush.msra.mxu0 0.0
    %1657 = vmatpush.msra.mxu0 0.0
    %1658 = vmatpush.msra.mxu0 0.0
    %1659 = vmatpush.msra.mxu0 0.0
    %1660 = vmatpush.msra.mxu0 0.0
    %1661 = vmatpush.msra.mxu0 0.0
    %1662 = vmatpush.msra.mxu0 0.0
    %1663 = vmatpush.msra.mxu0 0.0
    %1664 = vmatpush.msra.mxu0 %v1083
    %1665 = vmatpush.msra.mxu0 %v1082
    %1666 = vmatpush.msra.mxu0 %v1081
    %1667 = vmatpush.msra.mxu0 %v1080
    %1668 = vmatmul.f32.gmra.mxu0 %v1650
    %v1669 = vpop.f32.mrf.mxu0
    %v1670 = vadd.f32 0.0, %v1669
    %1671 = vdwg.mxu0
    %v1672 = vadd.f32 %v974, %v1376
    %v1673 = vadd.f32 %v975, %v1670
    %s1674 = scalar_lea.vmem %s9, 1
    %v1675 = vld [vmem:[%s1674] sm:$0x1]
    %v1677 = vperm.slane %v1675, 0
    %v1679 = vadd.f32 %v1672, %v1677
    %v1680 = vadd.f32 %v1673, %v1677
    %s1681 = scalar_lea.vmem %s10, 1
    %v1682 = vld [vmem:[%s1681] sm:$0x1]
    %s1683 = scalar_lea.vmem %s11, 1
    %v1684 = vld [vmem:[%s1683] sm:$0x1]
    %v1685 = vsel %vm124, %v1679, 0.0
    %1686 = vadd.xlane.f32.xlu0 %v1685
    %v1687 = vpop.xlane.xlu0 %1686
    %v1688 = vsel %vm124, %v1680, 0.0
    %1689 = vadd.xlane.f32.xlu0 %v1688
    %v1690 = vpop.xlane.xlu0 %1689
    %v1691 = vmul.f32 %v1687, %v137
    %v1692 = vmul.f32 %v1690, %v137
    %v1693 = vmul.f32 %v1679, %v1679
    %v1694 = vmul.f32 %v1680, %v1680
    %v1695 = vsel %vm124, %v1693, 0.0
    %1696 = vadd.xlane.f32.xlu0 %v1695
    %v1697 = vpop.xlane.xlu0 %1696
    %v1698 = vsel %vm124, %v1694, 0.0
    %1699 = vadd.xlane.f32.xlu0 %v1698
    %v1700 = vpop.xlane.xlu0 %1699
    %v1701 = vmul.f32 %v1697, %v137
    %v1702 = vmul.f32 %v1700, %v137
    %v1703 = vmul.f32 %v1691, %v1691
    %v1704 = vmul.f32 %v1692, %v1692
    %v1705 = vsub.f32 %v1701, %v1703
    %v1706 = vsub.f32 %v1702, %v1704
    %v1707 = vsub.f32 %v1679, %v1691
    %v1708 = vsub.f32 %v1680, %v1692
    %v1709 = vadd.f32 %v1705, 1e-06
    %v1710 = vadd.f32 %v1706, 1e-06
    %v1711 = vrsqrt.pop %v1709
    %v1712 = vmul.f32 %v1711, %v1709
    %v1713 = vmul.f32 %v1712, %v1711
    %v1714 = vmul.f32 0.5, %v1713
    %v1715 = vsub.f32 1.5, %v1714
    %v1716 = vmul.f32 %v1711, %v1715
    %vm1717 = vweird.f32 %v1709
    %vm1718 = vweird.f32 %v1711
    %vm1719 = vmor %vm1717, %vm1718
    %v1720 = vsel %vm1719, %v1711, %v1716
    %v1721 = vrsqrt.pop %v1710
    %v1722 = vmul.f32 %v1721, %v1710
    %v1723 = vmul.f32 %v1722, %v1721
    %v1724 = vmul.f32 0.5, %v1723
    %v1725 = vsub.f32 1.5, %v1724
    %v1726 = vmul.f32 %v1721, %v1725
    %vm1727 = vweird.f32 %v1710
    %vm1728 = vweird.f32 %v1721
    %vm1729 = vmor %vm1727, %vm1728
    %v1730 = vsel %vm1729, %v1721, %v1726
    %v1731 = vmul.f32 %v1707, %v1720
    %v1732 = vmul.f32 %v1708, %v1730
    %v1734 = vperm.slane %v1682, 0
    %v1736 = vmul.f32 %v1731, %v1734
    %v1737 = vmul.f32 %v1732, %v1734
    %v1739 = vperm.slane %v1684, 0
    %v1741 = vadd.f32 %v1736, %v1739
    %v1742 = vadd.f32 %v1737, %v1739
    %s1743 = scalar_lea.vmem %s12, 32
    %v1744 = vld [vmem:[%s1743] sm:$0xff]
    %v1745 = vld [vmem:[%s1743 + $0x8] sm:$0xff]
    %v1746 = vld [vmem:[%s1743 + $0x10] sm:$0xff]
    %v1747 = vld [vmem:[%s1743 + $0x18] sm:$0xff]
    %s1748 = scalar_lea.vmem %s13, 1
    %v1749 = vld [vmem:[%s1748] sm:$0x1]
    %v1751 = vperm.slane %v1749, 0
    %v1754 = vsel %vm124, %v1741, 0
    %v1757 = vsel %vm124, %v1742, 0
    %1759 = vmatpush.msra.mxu0 0.0
    %1760 = vmatpush.msra.mxu0 0.0
    %1761 = vmatpush.msra.mxu0 0.0
    %1762 = vmatpush.msra.mxu0 0.0
    %1763 = vmatpush.msra.mxu0 0.0
    %1764 = vmatpush.msra.mxu0 0.0
    %1765 = vmatpush.msra.mxu0 0.0
    %1766 = vmatpush.msra.mxu0 0.0
    %1767 = vmatpush.msra.mxu0 0.0
    %1768 = vmatpush.msra.mxu0 0.0
    %1769 = vmatpush.msra.mxu0 0.0
    %1770 = vmatpush.msra.mxu0 0.0
    %1771 = vmatpush.msra.mxu0 %v1747
    %1772 = vmatpush.msra.mxu0 %v1746
    %1773 = vmatpush.msra.mxu0 %v1745
    %1774 = vmatpush.msra.mxu0 %v1744
    %1775 = vmatmul.f32.gmra.mxu0 %v1754
    %v1776 = vpop.f32.mrf.mxu0
    %v1777 = vadd.f32 %v1751, %v1776
    %1778 = vmatmul.f32.gmra.mxu0 %v1757
    %v1779 = vpop.f32.mrf.mxu0
    %v1780 = vadd.f32 %v1751, %v1779
    %1781 = vdwg.mxu0
    %v1782 = vmax.f32 %v1777, 0.0
    %v1783 = vmax.f32 %v1780, 0.0
    %s1784 = scalar_lea.vmem %s14, 64
    %v1785 = vld [vmem:[%s1784] sm:$0xff]
    %v1786 = vld [vmem:[%s1784 + $0x8] sm:$0xff]
    %v1787 = vld [vmem:[%s1784 + $0x10] sm:$0xff]
    %v1788 = vld [vmem:[%s1784 + $0x18] sm:$0xff]
    %v1789 = vld [vmem:[%s1784 + $0x20] sm:$0xff]
    %v1790 = vld [vmem:[%s1784 + $0x28] sm:$0xff]
    %v1791 = vld [vmem:[%s1784 + $0x30] sm:$0xff]
    %v1792 = vld [vmem:[%s1784 + $0x38] sm:$0xff]
    %s1793 = scalar_lea.vmem %s15, 1
    %v1794 = vld [vmem:[%s1793] sm:$0x1]
    %v1796 = vperm.slane %v1794, 0
    %v1799 = vsel %vm84, %v1782, 0
    %v1802 = vsel %vm84, %v1783, 0
    %1804 = vmatpush.msra.mxu0 0.0
    %1805 = vmatpush.msra.mxu0 0.0
    %1806 = vmatpush.msra.mxu0 0.0
    %1807 = vmatpush.msra.mxu0 0.0
    %1808 = vmatpush.msra.mxu0 0.0
    %1809 = vmatpush.msra.mxu0 0.0
    %1810 = vmatpush.msra.mxu0 0.0
    %1811 = vmatpush.msra.mxu0 0.0
    %1812 = vmatpush.msra.mxu0 %v1792
    %1813 = vmatpush.msra.mxu0 %v1791
    %1814 = vmatpush.msra.mxu0 %v1790
    %1815 = vmatpush.msra.mxu0 %v1789
    %1816 = vmatpush.msra.mxu0 %v1788
    %1817 = vmatpush.msra.mxu0 %v1787
    %1818 = vmatpush.msra.mxu0 %v1786
    %1819 = vmatpush.msra.mxu0 %v1785
    %1820 = vmatmul.f32.gmra.mxu0 %v1799
    %v1821 = vpop.f32.mrf.mxu0
    %v1822 = vadd.f32 %v1796, %v1821
    %1823 = vmatmul.f32.gmra.mxu0 %v1802
    %v1824 = vpop.f32.mrf.mxu0
    %v1825 = vadd.f32 %v1796, %v1824
    %1826 = vdwg.mxu0
    %v1827 = vadd.f32 %v1679, %v1822
    %v1828 = vadd.f32 %v1680, %v1825
    %v1829 = vld [vmem:[%s16] sm:$0x1]
    %v1830 = vld [vmem:[%s17] sm:$0x1]
    %v1831 = vsel %vm124, %v1827, 0.0
    %1832 = vadd.xlane.f32.xlu0 %v1831
    %v1833 = vpop.xlane.xlu0 %1832
    %v1834 = vsel %vm124, %v1828, 0.0
    %1835 = vadd.xlane.f32.xlu0 %v1834
    %v1836 = vpop.xlane.xlu0 %1835
    %v1837 = vmul.f32 %v1833, %v137
    %v1838 = vmul.f32 %v1836, %v137
    %v1839 = vmul.f32 %v1827, %v1827
    %v1840 = vmul.f32 %v1828, %v1828
    %v1841 = vsel %vm124, %v1839, 0.0
    %1842 = vadd.xlane.f32.xlu0 %v1841
    %v1843 = vpop.xlane.xlu0 %1842
    %v1844 = vsel %vm124, %v1840, 0.0
    %1845 = vadd.xlane.f32.xlu0 %v1844
    %v1846 = vpop.xlane.xlu0 %1845
    %v1847 = vmul.f32 %v1843, %v137
    %v1848 = vmul.f32 %v1846, %v137
    %v1849 = vmul.f32 %v1837, %v1837
    %v1850 = vmul.f32 %v1838, %v1838
    %v1851 = vsub.f32 %v1847, %v1849
    %v1852 = vsub.f32 %v1848, %v1850
    %v1853 = vsub.f32 %v1827, %v1837
    %v1854 = vsub.f32 %v1828, %v1838
    %v1855 = vadd.f32 %v1851, 1e-06
    %v1856 = vadd.f32 %v1852, 1e-06
    %v1857 = vrsqrt.pop %v1855
    %v1858 = vmul.f32 %v1857, %v1855
    %v1859 = vmul.f32 %v1858, %v1857
    %v1860 = vmul.f32 0.5, %v1859
    %v1861 = vsub.f32 1.5, %v1860
    %v1862 = vmul.f32 %v1857, %v1861
    %vm1863 = vweird.f32 %v1855
    %vm1864 = vweird.f32 %v1857
    %vm1865 = vmor %vm1863, %vm1864
    %v1866 = vsel %vm1865, %v1857, %v1862
    %v1867 = vrsqrt.pop %v1856
    %v1868 = vmul.f32 %v1867, %v1856
    %v1869 = vmul.f32 %v1868, %v1867
    %v1870 = vmul.f32 0.5, %v1869
    %v1871 = vsub.f32 1.5, %v1870
    %v1872 = vmul.f32 %v1867, %v1871
    %vm1873 = vweird.f32 %v1856
    %vm1874 = vweird.f32 %v1867
    %vm1875 = vmor %vm1873, %vm1874
    %v1876 = vsel %vm1875, %v1867, %v1872
    %v1877 = vmul.f32 %v1853, %v1866
    %v1878 = vmul.f32 %v1854, %v1876
    %v1880 = vperm.slane %v1829, 0
    %v1882 = vmul.f32 %v1877, %v1880
    %v1883 = vmul.f32 %v1878, %v1880
    %v1885 = vperm.slane %v1830, 0
    %v1887 = vadd.f32 %v1882, %v1885
    %v1888 = vadd.f32 %v1883, %v1885
    %1889 = vst.msk [vmem:[#allocation2] sm:$0xff] %vm124, %v1887
    %1890 = vst.msk [vmem:[#allocation2 + $0x8] sm:$0xff] %vm124, %v1888
    // Predicated region
    $region74: #{tpu_custom_call.1} parent=1 // pred_check
      _
    $region75: #{tpu_custom_call.1} parent=1 // pred_check_branch
      %1892 = sbr.rel (0) target = $region77
    $region76: #{tpu_custom_call.1} parent=1 // pred_region
      %1894 = vsyncadd [#allocation3], 0
      %s1895 = sshll.u32 [#allocation2], 4
      %s1896 = int_to_ptr.vmem [resolvable:$true] %s1895
      %s1897 = sshll.u32 %s18, 4
      %s1898 = int_to_ptr.hbm [resolvable:$true] %s1897
      %1903 = dma.vmem_to_hbm [thread:$0]  %s1896, 256, %s1898, [#allocation3], 128, 128, 8
    $region77: #{tpu_custom_call.1} parent=1 // pred_fallthru
      _
    // Predicated region
    $region78: #{tpu_custom_call.1} parent=1 // pred_check
      _
    $region79: #{tpu_custom_call.1} parent=1 // pred_check_branch
      %1905 = sbr.rel (0) target = $region81
    $region80: #{tpu_custom_call.1} parent=1 // pred_region
      %1907 = dma.done [#allocation3], 256
    $region81: #{tpu_custom_call.1} parent=1 // pred_fallthru
      _
    %1908 = vsyncpa [#allocation3], 1

</llo_original>
